<compile_context>
chip_gen: v5e
topology: v5e:2x2
jax: 0.10.0
libtpu: 0.0.40
codegen_flags: <defaults>
</compile_context>

<pallas_src>
import functools

import jax
import jax.numpy as jnp
from jax import lax
from jax.experimental import pallas as pl
from jax.experimental.pallas import tpu as pltpu

_F32 = jnp.float32


# ---------------------------- Pallas kernels ----------------------------

def _conv_fused_kernel(*refs, num_win, add_residual):
    """Fused conv: GEMM + bias + ReLU + BN affine [+ 2x2 max-pool] [+ residual].

    refs = (patches, w, b, scale, shift, [residual], out)
      patches: (num_win, K, M)   w: (Co, K)   b/scale/shift: (Co, 1)
      residual, out: (Co, M)   with M = N*Ho*Wo (pooled spatial if num_win==4).
    """
    p_ref, w_ref, b_ref, sc_ref, sh_ref = refs[:5]
    o_ref = refs[-1]

    def window(q):
        # One GEMM per 2x2-window position (num_win == 1 means "no pool").
        y = jnp.dot(w_ref[...], p_ref[q], preferred_element_type=_F32) + b_ref[...]
        y = jnp.maximum(y, 0.0)                       # ReLU
        return y * sc_ref[...] + sh_ref[...]          # eval-mode BatchNorm affine

    y = window(0)
    for q in range(1, num_win):                       # fused 2x2 max-pool
        y = jnp.maximum(y, window(q))
    if add_residual:
        y = y + refs[5][...]                          # fused residual add
    o_ref[...] = y


def _head_kernel(x_ref, w1_ref, b1_ref, w2_ref, b2_ref, o_ref):
    # fc1 -> ReLU -> (dropout: identity) -> fc2 -> log_softmax, all in VMEM.
    h = jnp.dot(x_ref[...], w1_ref[...], preferred_element_type=_F32) + b1_ref[...]
    h = jnp.maximum(h, 0.0)
    y = jnp.dot(h, w2_ref[...], preferred_element_type=_F32) + b2_ref[...]
    m = jnp.max(y, axis=-1, keepdims=True)
    lse = m + jnp.log(jnp.sum(jnp.exp(y - m), axis=-1, keepdims=True))
    o_ref[...] = y - lse


# ---------------------------- wrappers (glue + pallas_call) ----------------------------

def conv_bn_fused(x, w, b, bn, *, padding=0, pool=False, residual=None, eps=1e-5):
    """conv2d -> ReLU -> eval BatchNorm [-> 2x2 max-pool] [-> + residual].

    Lowered to one lane-dense Pallas GEMM over the whole batch:
      (Co, K) @ (K, N*Ho*Wo), pool fused by pre-splitting the rhs into the 4
      window positions (4, K, N*H2*W2) in plain-JAX glue.
    """
    n, ci, h, wd = x.shape
    co, _, kh, kw = w.shape
    if padding:
        x = jnp.pad(x, ((0, 0), (0, 0), (padding, padding), (padding, padding)))
        h += 2 * padding
        wd += 2 * padding
    ho, wo = h - kh + 1, wd - kw + 1
    k = ci * kh * kw

    # im2col glue (plain JAX): P[n, ci, kk, ho, wo], kk flattened in (ky, kx)
    # order so the K axis order (ci, ky, kx) matches w.reshape(Co, Ci*KH*KW).
    cols = [x[:, :, ky:ky + ho, kx:kx + wo] for ky in range(kh) for kx in range(kw)]
    pt = jnp.stack(cols, axis=2)                              # (N, Ci, KH*KW, Ho, Wo)

    if pool:
        h2, w2 = ho // 2, wo // 2
        m_cols = n * h2 * w2
        # (N,Ci,KK,H2,2,W2,2) -> (2,2,Ci,KK,N,H2,W2) -> (4, K, N*H2*W2)
        pt = pt.reshape(n, ci, kh * kw, h2, 2, w2, 2)
        pt = pt.transpose(4, 6, 1, 2, 0, 3, 5).reshape(4, k, m_cols)
        out_h, out_w, num_win = h2, w2, 4
    else:
        m_cols = n * ho * wo
        pt = pt.transpose(1, 2, 0, 3, 4).reshape(1, k, m_cols)   # (1, K, N*Ho*Wo)
        out_h, out_w, num_win = ho, wo, 1

    inv = 1.0 / jnp.sqrt(bn["var"] + eps)
    scale = (bn["gamma"] * inv).reshape(co, 1).astype(_F32)
    shift = (bn["beta"] - bn["mean"] * bn["gamma"] * inv).reshape(co, 1).astype(_F32)

    inputs = [pt, w.reshape(co, k), b.reshape(co, 1), scale, shift]
    in_specs = [
        pl.BlockSpec((num_win, k, m_cols), lambda i: (0, 0, 0)),
        pl.BlockSpec((co, k), lambda i: (0, 0)),
        pl.BlockSpec((co, 1), lambda i: (0, 0)),
        pl.BlockSpec((co, 1), lambda i: (0, 0)),
        pl.BlockSpec((co, 1), lambda i: (0, 0)),
    ]
    if residual is not None:
        # residual in the same (Co, N*Ho*Wo) column order as the GEMM output
        inputs.append(residual.transpose(1, 0, 2, 3).reshape(co, m_cols))
        in_specs.append(pl.BlockSpec((co, m_cols), lambda i: (0, 0)))

    out = pl.pallas_call(
        functools.partial(_conv_fused_kernel, num_win=num_win,
                          add_residual=residual is not None),
        out_shape=jax.ShapeDtypeStruct((co, m_cols), _F32),
        grid=(1,),
        in_specs=in_specs,
        out_specs=pl.BlockSpec((co, m_cols), lambda i: (0, 0)),
        compiler_params=pltpu.CompilerParams(dimension_semantics=("arbitrary",)),
    )(*inputs)
    # back to NCHW
    return out.reshape(co, n, out_h, out_w).transpose(1, 0, 2, 3)


def mlp_head(x, w1t, b1, w2t, b2):
    n, fin = x.shape
    hdim, fout = w1t.shape[1], w2t.shape[1]
    return pl.pallas_call(
        _head_kernel,
        out_shape=jax.ShapeDtypeStruct((n, fout), _F32),
        grid=(1,),
        in_specs=[
            pl.BlockSpec((n, fin), lambda i: (0, 0)),
            pl.BlockSpec((fin, hdim), lambda i: (0, 0)),
            pl.BlockSpec((1, hdim), lambda i: (0, 0)),
            pl.BlockSpec((hdim, fout), lambda i: (0, 0)),
            pl.BlockSpec((1, fout), lambda i: (0, 0)),
        ],
        out_specs=pl.BlockSpec((n, fout), lambda i: (0, 0)),
        compiler_params=pltpu.CompilerParams(dimension_semantics=("arbitrary",)),
    )(x, w1t, b1.reshape(1, hdim), w2t, b2.reshape(1, fout))


# ---------------------------- parameters (deterministic init) ----------------------------

def _conv_params(key, co, ci, k):
    k1, k2 = jax.random.split(key)
    bound = 1.0 / float(ci * k * k) ** 0.5
    w = jax.random.uniform(k1, (co, ci, k, k), _F32, -bound, bound)
    b = jax.random.uniform(k2, (co,), _F32, -bound, bound)
    return w, b


def _linear_params(key, fout, fin):
    k1, k2 = jax.random.split(key)
    bound = 1.0 / float(fin) ** 0.5
    w = jax.random.uniform(k1, (fout, fin), _F32, -bound, bound)
    b = jax.random.uniform(k2, (fout,), _F32, -bound, bound)
    return w, b


def _bn_params(c):
    return dict(gamma=jnp.ones((c,), _F32), beta=jnp.zeros((c,), _F32),
                mean=jnp.zeros((c,), _F32), var=jnp.ones((c,), _F32))


def init_params(key):
    ks = jax.random.split(key, 8)
    p = {}
    p["conv1_w"], p["conv1_b"] = _conv_params(ks[0], 10, 1, 5)
    p["conv2_w"], p["conv2_b"] = _conv_params(ks[1], 20, 10, 5)
    p["bn1"] = _bn_params(10)
    p["bn2"] = _bn_params(20)
    p["res1"] = {"conv_in": _conv_params(ks[2], 10, 10, 3),
                 "conv_out": _conv_params(ks[3], 10, 10, 3),
                 "bn1": _bn_params(10), "bn2": _bn_params(10)}
    p["res2"] = {"conv_in": _conv_params(ks[4], 20, 20, 3),
                 "conv_out": _conv_params(ks[5], 20, 20, 3),
                 "bn1": _bn_params(20), "bn2": _bn_params(20)}
    fc1_w, p["fc1_b"] = _linear_params(ks[6], 50, 320)
    fc2_w, p["fc2_b"] = _linear_params(ks[7], 10, 50)
    # store fc weights pre-transposed (Fin, Fout): no per-call XLA transpose
    p["fc1_wT"] = fc1_w.T
    p["fc2_wT"] = fc2_w.T
    return p


# ---------------------------- forward pass ----------------------------

def res_block(x, p):
    # h = relu(conv_in(x)); h = drop(bn1(h)); out = bn2(relu(conv_out(h))) + x
    w_in, b_in = p["conv_in"]
    w_out, b_out = p["conv_out"]
    h = conv_bn_fused(x, w_in, b_in, p["bn1"], padding=1)
    # Dropout(p=0.2): identity (inference semantics).
    return conv_bn_fused(h, w_out, b_out, p["bn2"], padding=1, residual=x)


def resnet_forward(params, x):
    # x: (N, 1, 28, 28) NCHW
    # stage 1: maxpool(bn1(relu(conv1(x))))  -- one fused kernel -> (N,10,12,12)
    x = conv_bn_fused(x, params["conv1_w"], params["conv1_b"], params["bn1"], pool=True)
    x = res_block(x, params["res1"])
    # stage 2: maxpool(bn2(relu(drop2d(conv2(x)))))  -- drop2d identity -> (N,20,4,4)
    x = conv_bn_fused(x, params["conv2_w"], params["conv2_b"], params["bn2"], pool=True)
    x = res_block(x, params["res2"])
    x = x.reshape(x.shape[0], 320)                                  # view(-1, 320)
    # fc1 -> relu -> dropout(identity) -> fc2 -> log_softmax -- one fused kernel
    return mlp_head(x, params["fc1_wT"], params["fc1_b"],
                    params["fc2_wT"], params["fc2_b"])


# ---------------------------- pure-JAX reference (numerics check) ----------------------------

def _ref_conv(x, w, b, padding=0):
    return lax.conv_general_dilated(
        x, w, window_strides=(1, 1),
        padding=((padding, padding), (padding, padding)),
        dimension_numbers=("NCHW", "OIHW", "NCHW"),
        precision=lax.Precision.HIGHEST) + b.reshape(1, -1, 1, 1)


def _ref_bn(x, bn, eps=1e-5):
    sc = bn["gamma"] / jnp.sqrt(bn["var"] + eps)
    sh = bn["beta"] - bn["mean"] * sc
    return x * sc.reshape(1, -1, 1, 1) + sh.reshape(1, -1, 1, 1)


def _ref_pool(x):
    n, c, h, w = x.shape
    return jnp.max(x.reshape(n, c, h // 2, 2, w // 2, 2), axis=(3, 5))


def _ref_resblock(x, p):
    h = _ref_bn(jax.nn.relu(_ref_conv(x, *p["conv_in"], padding=1)), p["bn1"])
    return _ref_bn(jax.nn.relu(_ref_conv(h, *p["conv_out"], padding=1)), p["bn2"]) + x


def ref_forward(params, x):
    x = _ref_pool(_ref_bn(jax.nn.relu(
        _ref_conv(x, params["conv1_w"], params["conv1_b"])), params["bn1"]))
    x = _ref_resblock(x, params["res1"])
    x = _ref_pool(_ref_bn(jax.nn.relu(
        _ref_conv(x, params["conv2_w"], params["conv2_b"])), params["bn2"]))
    x = _ref_resblock(x, params["res2"])
    x = x.reshape(x.shape[0], 320)
    x = jax.nn.relu(jnp.dot(x, params["fc1_wT"],
                            precision=lax.Precision.HIGHEST) + params["fc1_b"])
    x = jnp.dot(x, params["fc2_wT"],
                precision=lax.Precision.HIGHEST) + params["fc2_b"]
    return jax.nn.log_softmax(x, axis=-1)


if __name__ == "__main__":
    key = jax.random.PRNGKey(0)
    pkey, xkey = jax.random.split(key)
    params = init_params(pkey)
    x = jax.random.normal(xkey, (2, 1, 28, 28), _F32)

    out = jax.jit(resnet_forward)(params, x)
    out = jax.block_until_ready(out)

    assert out.shape == (2, 10), out.shape
    # log-softmax rows are proper log-probabilities
    row_prob_sums = jnp.sum(jnp.exp(out), axis=1)
    assert bool(jnp.all(jnp.abs(row_prob_sums - 1.0) < 1e-4)), row_prob_sums
    # compare against a plain-JAX/XLA reference of the same module
    ref = ref_forward(params, x)
    max_err = float(jnp.max(jnp.abs(out - ref)))
    assert max_err < 5e-2, max_err
    print("KERNEL_OK")
</pallas_src>

<mosaic_0001>
module attributes {stable_mosaic.version = 11 : i64} {
  func.func @_conv_fused_kernel(%arg0: i32, %arg1: memref<4x25x288xf32, #tpu.memory_space<vmem>>, %arg2: memref<10x25xf32, #tpu.memory_space<vmem>>, %arg3: memref<10x1xf32, #tpu.memory_space<vmem>>, %arg4: memref<10x1xf32, #tpu.memory_space<vmem>>, %arg5: memref<10x1xf32, #tpu.memory_space<vmem>>, %arg6: memref<10x288xf32, #tpu.memory_space<vmem>>) attributes {dimension_semantics = [#tpu.dimension_semantics<arbitrary>], iteration_bounds = array<i64: 1>, scalar_prefetch = 0 : i64, scratch_operands = 0 : i64, tpu.core_type = #tpu.core_type<tc>, window_params = [{pipeline_mode = #tpu.pipeline_mode<synchronous>, transform_indices = @transform_0, window_bounds = array<i64: 4, 25, 288>}, {pipeline_mode = #tpu.pipeline_mode<synchronous>, transform_indices = @transform_1, window_bounds = array<i64: 10, 25>}, {pipeline_mode = #tpu.pipeline_mode<synchronous>, transform_indices = @transform_2, window_bounds = array<i64: 10, 1>}, {pipeline_mode = #tpu.pipeline_mode<synchronous>, transform_indices = @transform_3, window_bounds = array<i64: 10, 1>}, {pipeline_mode = #tpu.pipeline_mode<synchronous>, transform_indices = @transform_4, window_bounds = array<i64: 10, 1>}, {pipeline_mode = #tpu.pipeline_mode<synchronous>, transform_indices = @transform_5, window_bounds = array<i64: 10, 288>}]} {
    %c0 = arith.constant 0 : index
    %c0_0 = arith.constant 0 : index
    %0 = vector.load %arg2[%c0, %c0_0] : memref<10x25xf32, #tpu.memory_space<vmem>>, vector<10x25xf32>
    %c0_1 = arith.constant 0 : index
    %c0_2 = arith.constant 0 : index
    %c0_3 = arith.constant 0 : index
    %1 = vector.load %arg1[%c0_1, %c0_2, %c0_3] : memref<4x25x288xf32, #tpu.memory_space<vmem>>, vector<1x25x288xf32>
    %2 = vector.shape_cast %1 : vector<1x25x288xf32> to vector<25x288xf32>
    %cst = arith.constant dense<0.000000e+00> : vector<10x288xf32>
    %3 = tpu.matmul %0, %2, %cst {dimension_numbers = #tpu.dot_dimension_numbers<[1], [0], [0], [1], [0, 0, 1, 1], [], []>} : vector<10x25xf32>, vector<25x288xf32>, vector<10x288xf32> -> vector<10x288xf32>
    %c0_4 = arith.constant 0 : index
    %c0_5 = arith.constant 0 : index
    %4 = vector.load %arg3[%c0_4, %c0_5] : memref<10x1xf32, #tpu.memory_space<vmem>>, vector<10x1xf32>
    %5 = vector.broadcast %4 : vector<10x1xf32> to vector<10x288xf32>
    %6 = arith.addf %3, %5 : vector<10x288xf32>
    %cst_6 = arith.constant 0.000000e+00 : f32
    %7 = vector.broadcast %cst_6 : f32 to vector<10x288xf32>
    %8 = arith.maximumf %6, %7 : vector<10x288xf32>
    %c0_7 = arith.constant 0 : index
    %c0_8 = arith.constant 0 : index
    %9 = vector.load %arg4[%c0_7, %c0_8] : memref<10x1xf32, #tpu.memory_space<vmem>>, vector<10x1xf32>
    %10 = vector.broadcast %9 : vector<10x1xf32> to vector<10x288xf32>
    %11 = arith.mulf %8, %10 : vector<10x288xf32>
    %c0_9 = arith.constant 0 : index
    %c0_10 = arith.constant 0 : index
    %12 = vector.load %arg5[%c0_9, %c0_10] : memref<10x1xf32, #tpu.memory_space<vmem>>, vector<10x1xf32>
    %13 = vector.broadcast %12 : vector<10x1xf32> to vector<10x288xf32>
    %14 = arith.addf %11, %13 : vector<10x288xf32>
    %c0_11 = arith.constant 0 : index
    %c0_12 = arith.constant 0 : index
    %15 = vector.load %arg2[%c0_11, %c0_12] : memref<10x25xf32, #tpu.memory_space<vmem>>, vector<10x25xf32>
    %c1 = arith.constant 1 : index
    %c0_13 = arith.constant 0 : index
    %c0_14 = arith.constant 0 : index
    %16 = vector.load %arg1[%c1, %c0_13, %c0_14] : memref<4x25x288xf32, #tpu.memory_space<vmem>>, vector<1x25x288xf32>
    %17 = vector.shape_cast %16 : vector<1x25x288xf32> to vector<25x288xf32>
    %cst_15 = arith.constant dense<0.000000e+00> : vector<10x288xf32>
    %18 = tpu.matmul %15, %17, %cst_15 {dimension_numbers = #tpu.dot_dimension_numbers<[1], [0], [0], [1], [0, 0, 1, 1], [], []>} : vector<10x25xf32>, vector<25x288xf32>, vector<10x288xf32> -> vector<10x288xf32>
    %c0_16 = arith.constant 0 : index
    %c0_17 = arith.constant 0 : index
    %19 = vector.load %arg3[%c0_16, %c0_17] : memref<10x1xf32, #tpu.memory_space<vmem>>, vector<10x1xf32>
    %20 = vector.broadcast %19 : vector<10x1xf32> to vector<10x288xf32>
    %21 = arith.addf %18, %20 : vector<10x288xf32>
    %cst_18 = arith.constant 0.000000e+00 : f32
    %22 = vector.broadcast %cst_18 : f32 to vector<10x288xf32>
    %23 = arith.maximumf %21, %22 : vector<10x288xf32>
    %c0_19 = arith.constant 0 : index
    %c0_20 = arith.constant 0 : index
    %24 = vector.load %arg4[%c0_19, %c0_20] : memref<10x1xf32, #tpu.memory_space<vmem>>, vector<10x1xf32>
    %25 = vector.broadcast %24 : vector<10x1xf32> to vector<10x288xf32>
    %26 = arith.mulf %23, %25 : vector<10x288xf32>
    %c0_21 = arith.constant 0 : index
    %c0_22 = arith.constant 0 : index
    %27 = vector.load %arg5[%c0_21, %c0_22] : memref<10x1xf32, #tpu.memory_space<vmem>>, vector<10x1xf32>
    %28 = vector.broadcast %27 : vector<10x1xf32> to vector<10x288xf32>
    %29 = arith.addf %26, %28 : vector<10x288xf32>
    %30 = arith.maximumf %14, %29 : vector<10x288xf32>
    %c0_23 = arith.constant 0 : index
    %c0_24 = arith.constant 0 : index
    %31 = vector.load %arg2[%c0_23, %c0_24] : memref<10x25xf32, #tpu.memory_space<vmem>>, vector<10x25xf32>
    %c2 = arith.constant 2 : index
    %c0_25 = arith.constant 0 : index
    %c0_26 = arith.constant 0 : index
    %32 = vector.load %arg1[%c2, %c0_25, %c0_26] : memref<4x25x288xf32, #tpu.memory_space<vmem>>, vector<1x25x288xf32>
    %33 = vector.shape_cast %32 : vector<1x25x288xf32> to vector<25x288xf32>
    %cst_27 = arith.constant dense<0.000000e+00> : vector<10x288xf32>
    %34 = tpu.matmul %31, %33, %cst_27 {dimension_numbers = #tpu.dot_dimension_numbers<[1], [0], [0], [1], [0, 0, 1, 1], [], []>} : vector<10x25xf32>, vector<25x288xf32>, vector<10x288xf32> -> vector<10x288xf32>
    %c0_28 = arith.constant 0 : index
    %c0_29 = arith.constant 0 : index
    %35 = vector.load %arg3[%c0_28, %c0_29] : memref<10x1xf32, #tpu.memory_space<vmem>>, vector<10x1xf32>
    %36 = vector.broadcast %35 : vector<10x1xf32> to vector<10x288xf32>
    %37 = arith.addf %34, %36 : vector<10x288xf32>
    %cst_30 = arith.constant 0.000000e+00 : f32
    %38 = vector.broadcast %cst_30 : f32 to vector<10x288xf32>
    %39 = arith.maximumf %37, %38 : vector<10x288xf32>
    %c0_31 = arith.constant 0 : index
    %c0_32 = arith.constant 0 : index
    %40 = vector.load %arg4[%c0_31, %c0_32] : memref<10x1xf32, #tpu.memory_space<vmem>>, vector<10x1xf32>
    %41 = vector.broadcast %40 : vector<10x1xf32> to vector<10x288xf32>
    %42 = arith.mulf %39, %41 : vector<10x288xf32>
    %c0_33 = arith.constant 0 : index
    %c0_34 = arith.constant 0 : index
    %43 = vector.load %arg5[%c0_33, %c0_34] : memref<10x1xf32, #tpu.memory_space<vmem>>, vector<10x1xf32>
    %44 = vector.broadcast %43 : vector<10x1xf32> to vector<10x288xf32>
    %45 = arith.addf %42, %44 : vector<10x288xf32>
    %46 = arith.maximumf %30, %45 : vector<10x288xf32>
    %c0_35 = arith.constant 0 : index
    %c0_36 = arith.constant 0 : index
    %47 = vector.load %arg2[%c0_35, %c0_36] : memref<10x25xf32, #tpu.memory_space<vmem>>, vector<10x25xf32>
    %c3 = arith.constant 3 : index
    %c0_37 = arith.constant 0 : index
    %c0_38 = arith.constant 0 : index
    %48 = vector.load %arg1[%c3, %c0_37, %c0_38] : memref<4x25x288xf32, #tpu.memory_space<vmem>>, vector<1x25x288xf32>
    %49 = vector.shape_cast %48 : vector<1x25x288xf32> to vector<25x288xf32>
    %cst_39 = arith.constant dense<0.000000e+00> : vector<10x288xf32>
    %50 = tpu.matmul %47, %49, %cst_39 {dimension_numbers = #tpu.dot_dimension_numbers<[1], [0], [0], [1], [0, 0, 1, 1], [], []>} : vector<10x25xf32>, vector<25x288xf32>, vector<10x288xf32> -> vector<10x288xf32>
    %c0_40 = arith.constant 0 : index
    %c0_41 = arith.constant 0 : index
    %51 = vector.load %arg3[%c0_40, %c0_41] : memref<10x1xf32, #tpu.memory_space<vmem>>, vector<10x1xf32>
    %52 = vector.broadcast %51 : vector<10x1xf32> to vector<10x288xf32>
    %53 = arith.addf %50, %52 : vector<10x288xf32>
    %cst_42 = arith.constant 0.000000e+00 : f32
    %54 = vector.broadcast %cst_42 : f32 to vector<10x288xf32>
    %55 = arith.maximumf %53, %54 : vector<10x288xf32>
    %c0_43 = arith.constant 0 : index
    %c0_44 = arith.constant 0 : index
    %56 = vector.load %arg4[%c0_43, %c0_44] : memref<10x1xf32, #tpu.memory_space<vmem>>, vector<10x1xf32>
    %57 = vector.broadcast %56 : vector<10x1xf32> to vector<10x288xf32>
    %58 = arith.mulf %55, %57 : vector<10x288xf32>
    %c0_45 = arith.constant 0 : index
    %c0_46 = arith.constant 0 : index
    %59 = vector.load %arg5[%c0_45, %c0_46] : memref<10x1xf32, #tpu.memory_space<vmem>>, vector<10x1xf32>
    %60 = vector.broadcast %59 : vector<10x1xf32> to vector<10x288xf32>
    %61 = arith.addf %58, %60 : vector<10x288xf32>
    %62 = arith.maximumf %46, %61 : vector<10x288xf32>
    %c0_47 = arith.constant 0 : index
    %c0_48 = arith.constant 0 : index
    %63 = vector.load %arg6[%c0_47, %c0_48] : memref<10x288xf32, #tpu.memory_space<vmem>>, vector<10x288xf32>
    tpu.vector_store %arg6[%c0_47, %c0_48], %62 {strides = array<i32>} : memref<10x288xf32, #tpu.memory_space<vmem>>, vector<10x288xf32>,
    return
  }
  func.func @transform_0(%arg0: i32) -> (i32, i32, i32) {
    %c0_i32 = arith.constant 0 : i32
    %c0_i32_0 = arith.constant 0 : i32
    %c0_i32_1 = arith.constant 0 : i32
    %c0_i32_2 = arith.constant 0 : i32
    return %c0_i32, %c0_i32_0, %c0_i32_1 : i32, i32, i32
  }
  func.func @transform_1(%arg0: i32) -> (i32, i32) {
    %c0_i32 = arith.constant 0 : i32
    %c0_i32_0 = arith.constant 0 : i32
    %c0_i32_1 = arith.constant 0 : i32
    return %c0_i32, %c0_i32_0 : i32, i32
  }
  func.func @transform_2(%arg0: i32) -> (i32, i32) {
    %c0_i32 = arith.constant 0 : i32
    %c0_i32_0 = arith.constant 0 : i32
    %c0_i32_1 = arith.constant 0 : i32
    return %c0_i32, %c0_i32_0 : i32, i32
  }
  func.func @transform_3(%arg0: i32) -> (i32, i32) {
    %c0_i32 = arith.constant 0 : i32
    %c0_i32_0 = arith.constant 0 : i32
    %c0_i32_1 = arith.constant 0 : i32
    return %c0_i32, %c0_i32_0 : i32, i32
  }
  func.func @transform_4(%arg0: i32) -> (i32, i32) {
    %c0_i32 = arith.constant 0 : i32
    %c0_i32_0 = arith.constant 0 : i32
    %c0_i32_1 = arith.constant 0 : i32
    return %c0_i32, %c0_i32_0 : i32, i32
  }
  func.func @transform_5(%arg0: i32) -> (i32, i32) {
    %c0_i32 = arith.constant 0 : i32
    %c0_i32_0 = arith.constant 0 : i32
    %c0_i32_1 = arith.constant 0 : i32
    return %c0_i32, %c0_i32_0 : i32, i32
  }
}

module attributes {stable_mosaic.version = 11 : i64} {
  func.func @_conv_fused_kernel(%arg0: i32, %arg1: memref<1x90x288xf32, #tpu.memory_space<vmem>>, %arg2: memref<10x90xf32, #tpu.memory_space<vmem>>, %arg3: memref<10x1xf32, #tpu.memory_space<vmem>>, %arg4: memref<10x1xf32, #tpu.memory_space<vmem>>, %arg5: memref<10x1xf32, #tpu.memory_space<vmem>>, %arg6: memref<10x288xf32, #tpu.memory_space<vmem>>) attributes {dimension_semantics = [#tpu.dimension_semantics<arbitrary>], iteration_bounds = array<i64: 1>, scalar_prefetch = 0 : i64, scratch_operands = 0 : i64, tpu.core_type = #tpu.core_type<tc>, window_params = [{pipeline_mode = #tpu.pipeline_mode<synchronous>, transform_indices = @transform_0, window_bounds = array<i64: 1, 90, 288>}, {pipeline_mode = #tpu.pipeline_mode<synchronous>, transform_indices = @transform_1, window_bounds = array<i64: 10, 90>}, {pipeline_mode = #tpu.pipeline_mode<synchronous>, transform_indices = @transform_2, window_bounds = array<i64: 10, 1>}, {pipeline_mode = #tpu.pipeline_mode<synchronous>, transform_indices = @transform_3, window_bounds = array<i64: 10, 1>}, {pipeline_mode = #tpu.pipeline_mode<synchronous>, transform_indices = @transform_4, window_bounds = array<i64: 10, 1>}, {pipeline_mode = #tpu.pipeline_mode<synchronous>, transform_indices = @transform_5, window_bounds = array<i64: 10, 288>}]} {
    %c0 = arith.constant 0 : index
    %c0_0 = arith.constant 0 : index
    %0 = vector.load %arg2[%c0, %c0_0] : memref<10x90xf32, #tpu.memory_space<vmem>>, vector<10x90xf32>
    %c0_1 = arith.constant 0 : index
    %c0_2 = arith.constant 0 : index
    %c0_3 = arith.constant 0 : index
    %1 = vector.load %arg1[%c0_1, %c0_2, %c0_3] : memref<1x90x288xf32, #tpu.memory_space<vmem>>, vector<1x90x288xf32>
    %2 = vector.shape_cast %1 : vector<1x90x288xf32> to vector<90x288xf32>
    %cst = arith.constant dense<0.000000e+00> : vector<10x288xf32>
    %3 = tpu.matmul %0, %2, %cst {dimension_numbers = #tpu.dot_dimension_numbers<[1], [0], [0], [1], [0, 0, 1, 1], [], []>} : vector<10x90xf32>, vector<90x288xf32>, vector<10x288xf32> -> vector<10x288xf32>
    %c0_4 = arith.constant 0 : index
    %c0_5 = arith.constant 0 : index
    %4 = vector.load %arg3[%c0_4, %c0_5] : memref<10x1xf32, #tpu.memory_space<vmem>>, vector<10x1xf32>
    %5 = vector.broadcast %4 : vector<10x1xf32> to vector<10x288xf32>
    %6 = arith.addf %3, %5 : vector<10x288xf32>
    %cst_6 = arith.constant 0.000000e+00 : f32
    %7 = vector.broadcast %cst_6 : f32 to vector<10x288xf32>
    %8 = arith.maximumf %6, %7 : vector<10x288xf32>
    %c0_7 = arith.constant 0 : index
    %c0_8 = arith.constant 0 : index
    %9 = vector.load %arg4[%c0_7, %c0_8] : memref<10x1xf32, #tpu.memory_space<vmem>>, vector<10x1xf32>
    %10 = vector.broadcast %9 : vector<10x1xf32> to vector<10x288xf32>
    %11 = arith.mulf %8, %10 : vector<10x288xf32>
    %c0_9 = arith.constant 0 : index
    %c0_10 = arith.constant 0 : index
    %12 = vector.load %arg5[%c0_9, %c0_10] : memref<10x1xf32, #tpu.memory_space<vmem>>, vector<10x1xf32>
    %13 = vector.broadcast %12 : vector<10x1xf32> to vector<10x288xf32>
    %14 = arith.addf %11, %13 : vector<10x288xf32>
    %c0_11 = arith.constant 0 : index
    %c0_12 = arith.constant 0 : index
    %15 = vector.load %arg6[%c0_11, %c0_12] : memref<10x288xf32, #tpu.memory_space<vmem>>, vector<10x288xf32>
    tpu.vector_store %arg6[%c0_11, %c0_12], %14 {strides = array<i32>} : memref<10x288xf32, #tpu.memory_space<vmem>>, vector<10x288xf32>,
    return
  }
  func.func @transform_0(%arg0: i32) -> (i32, i32, i32) {
    %c0_i32 = arith.constant 0 : i32
    %c0_i32_0 = arith.constant 0 : i32
    %c0_i32_1 = arith.constant 0 : i32
    %c0_i32_2 = arith.constant 0 : i32
    return %c0_i32, %c0_i32_0, %c0_i32_1 : i32, i32, i32
  }
  func.func @transform_1(%arg0: i32) -> (i32, i32) {
    %c0_i32 = arith.constant 0 : i32
    %c0_i32_0 = arith.constant 0 : i32
    %c0_i32_1 = arith.constant 0 : i32
    return %c0_i32, %c0_i32_0 : i32, i32
  }
  func.func @transform_2(%arg0: i32) -> (i32, i32) {
    %c0_i32 = arith.constant 0 : i32
    %c0_i32_0 = arith.constant 0 : i32
    %c0_i32_1 = arith.constant 0 : i32
    return %c0_i32, %c0_i32_0 : i32, i32
  }
  func.func @transform_3(%arg0: i32) -> (i32, i32) {
    %c0_i32 = arith.constant 0 : i32
    %c0_i32_0 = arith.constant 0 : i32
    %c0_i32_1 = arith.constant 0 : i32
    return %c0_i32, %c0_i32_0 : i32, i32
  }
  func.func @transform_4(%arg0: i32) -> (i32, i32) {
    %c0_i32 = arith.constant 0 : i32
    %c0_i32_0 = arith.constant 0 : i32
    %c0_i32_1 = arith.constant 0 : i32
    return %c0_i32, %c0_i32_0 : i32, i32
  }
  func.func @transform_5(%arg0: i32) -> (i32, i32) {
    %c0_i32 = arith.constant 0 : i32
    %c0_i32_0 = arith.constant 0 : i32
    %c0_i32_1 = arith.constant 0 : i32
    return %c0_i32, %c0_i32_0 : i32, i32
  }
}

module attributes {stable_mosaic.version = 11 : i64} {
  func.func @_conv_fused_kernel(%arg0: i32, %arg1: memref<1x90x288xf32, #tpu.memory_space<vmem>>, %arg2: memref<10x90xf32, #tpu.memory_space<vmem>>, %arg3: memref<10x1xf32, #tpu.memory_space<vmem>>, %arg4: memref<10x1xf32, #tpu.memory_space<vmem>>, %arg5: memref<10x1xf32, #tpu.memory_space<vmem>>, %arg6: memref<10x288xf32, #tpu.memory_space<vmem>>, %arg7: memref<10x288xf32, #tpu.memory_space<vmem>>) attributes {dimension_semantics = [#tpu.dimension_semantics<arbitrary>], iteration_bounds = array<i64: 1>, scalar_prefetch = 0 : i64, scratch_operands = 0 : i64, tpu.core_type = #tpu.core_type<tc>, window_params = [{pipeline_mode = #tpu.pipeline_mode<synchronous>, transform_indices = @transform_0, window_bounds = array<i64: 1, 90, 288>}, {pipeline_mode = #tpu.pipeline_mode<synchronous>, transform_indices = @transform_1, window_bounds = array<i64: 10, 90>}, {pipeline_mode = #tpu.pipeline_mode<synchronous>, transform_indices = @transform_2, window_bounds = array<i64: 10, 1>}, {pipeline_mode = #tpu.pipeline_mode<synchronous>, transform_indices = @transform_3, window_bounds = array<i64: 10, 1>}, {pipeline_mode = #tpu.pipeline_mode<synchronous>, transform_indices = @transform_4, window_bounds = array<i64: 10, 1>}, {pipeline_mode = #tpu.pipeline_mode<synchronous>, transform_indices = @transform_5, window_bounds = array<i64: 10, 288>}, {pipeline_mode = #tpu.pipeline_mode<synchronous>, transform_indices = @transform_6, window_bounds = array<i64: 10, 288>}]} {
    %c0 = arith.constant 0 : index
    %c0_0 = arith.constant 0 : index
    %0 = vector.load %arg2[%c0, %c0_0] : memref<10x90xf32, #tpu.memory_space<vmem>>, vector<10x90xf32>
    %c0_1 = arith.constant 0 : index
    %c0_2 = arith.constant 0 : index
    %c0_3 = arith.constant 0 : index
    %1 = vector.load %arg1[%c0_1, %c0_2, %c0_3] : memref<1x90x288xf32, #tpu.memory_space<vmem>>, vector<1x90x288xf32>
    %2 = vector.shape_cast %1 : vector<1x90x288xf32> to vector<90x288xf32>
    %cst = arith.constant dense<0.000000e+00> : vector<10x288xf32>
    %3 = tpu.matmul %0, %2, %cst {dimension_numbers = #tpu.dot_dimension_numbers<[1], [0], [0], [1], [0, 0, 1, 1], [], []>} : vector<10x90xf32>, vector<90x288xf32>, vector<10x288xf32> -> vector<10x288xf32>
    %c0_4 = arith.constant 0 : index
    %c0_5 = arith.constant 0 : index
    %4 = vector.load %arg3[%c0_4, %c0_5] : memref<10x1xf32, #tpu.memory_space<vmem>>, vector<10x1xf32>
    %5 = vector.broadcast %4 : vector<10x1xf32> to vector<10x288xf32>
    %6 = arith.addf %3, %5 : vector<10x288xf32>
    %cst_6 = arith.constant 0.000000e+00 : f32
    %7 = vector.broadcast %cst_6 : f32 to vector<10x288xf32>
    %8 = arith.maximumf %6, %7 : vector<10x288xf32>
    %c0_7 = arith.constant 0 : index
    %c0_8 = arith.constant 0 : index
    %9 = vector.load %arg4[%c0_7, %c0_8] : memref<10x1xf32, #tpu.memory_space<vmem>>, vector<10x1xf32>
    %10 = vector.broadcast %9 : vector<10x1xf32> to vector<10x288xf32>
    %11 = arith.mulf %8, %10 : vector<10x288xf32>
    %c0_9 = arith.constant 0 : index
    %c0_10 = arith.constant 0 : index
    %12 = vector.load %arg5[%c0_9, %c0_10] : memref<10x1xf32, #tpu.memory_space<vmem>>, vector<10x1xf32>
    %13 = vector.broadcast %12 : vector<10x1xf32> to vector<10x288xf32>
    %14 = arith.addf %11, %13 : vector<10x288xf32>
    %c0_11 = arith.constant 0 : index
    %c0_12 = arith.constant 0 : index
    %15 = vector.load %arg6[%c0_11, %c0_12] : memref<10x288xf32, #tpu.memory_space<vmem>>, vector<10x288xf32>
    %16 = arith.addf %14, %15 : vector<10x288xf32>
    %c0_13 = arith.constant 0 : index
    %c0_14 = arith.constant 0 : index
    %17 = vector.load %arg7[%c0_13, %c0_14] : memref<10x288xf32, #tpu.memory_space<vmem>>, vector<10x288xf32>
    tpu.vector_store %arg7[%c0_13, %c0_14], %16 {strides = array<i32>} : memref<10x288xf32, #tpu.memory_space<vmem>>, vector<10x288xf32>,
    return
  }
  func.func @transform_0(%arg0: i32) -> (i32, i32, i32) {
    %c0_i32 = arith.constant 0 : i32
    %c0_i32_0 = arith.constant 0 : i32
    %c0_i32_1 = arith.constant 0 : i32
    %c0_i32_2 = arith.constant 0 : i32
    return %c0_i32, %c0_i32_0, %c0_i32_1 : i32, i32, i32
  }
  func.func @transform_1(%arg0: i32) -> (i32, i32) {
    %c0_i32 = arith.constant 0 : i32
    %c0_i32_0 = arith.constant 0 : i32
    %c0_i32_1 = arith.constant 0 : i32
    return %c0_i32, %c0_i32_0 : i32, i32
  }
  func.func @transform_2(%arg0: i32) -> (i32, i32) {
    %c0_i32 = arith.constant 0 : i32
    %c0_i32_0 = arith.constant 0 : i32
    %c0_i32_1 = arith.constant 0 : i32
    return %c0_i32, %c0_i32_0 : i32, i32
  }
  func.func @transform_3(%arg0: i32) -> (i32, i32) {
    %c0_i32 = arith.constant 0 : i32
    %c0_i32_0 = arith.constant 0 : i32
    %c0_i32_1 = arith.constant 0 : i32
    return %c0_i32, %c0_i32_0 : i32, i32
  }
  func.func @transform_4(%arg0: i32) -> (i32, i32) {
    %c0_i32 = arith.constant 0 : i32
    %c0_i32_0 = arith.constant 0 : i32
    %c0_i32_1 = arith.constant 0 : i32
    return %c0_i32, %c0_i32_0 : i32, i32
  }
  func.func @transform_5(%arg0: i32) -> (i32, i32) {
    %c0_i32 = arith.constant 0 : i32
    %c0_i32_0 = arith.constant 0 : i32
    %c0_i32_1 = arith.constant 0 : i32
    return %c0_i32, %c0_i32_0 : i32, i32
  }
  func.func @transform_6(%arg0: i32) -> (i32, i32) {
    %c0_i32 = arith.constant 0 : i32
    %c0_i32_0 = arith.constant 0 : i32
    %c0_i32_1 = arith.constant 0 : i32
    return %c0_i32, %c0_i32_0 : i32, i32
  }
}

module attributes {stable_mosaic.version = 11 : i64} {
  func.func @_conv_fused_kernel(%arg0: i32, %arg1: memref<4x250x32xf32, #tpu.memory_space<vmem>>, %arg2: memref<20x250xf32, #tpu.memory_space<vmem>>, %arg3: memref<20x1xf32, #tpu.memory_space<vmem>>, %arg4: memref<20x1xf32, #tpu.memory_space<vmem>>, %arg5: memref<20x1xf32, #tpu.memory_space<vmem>>, %arg6: memref<20x32xf32, #tpu.memory_space<vmem>>) attributes {dimension_semantics = [#tpu.dimension_semantics<arbitrary>], iteration_bounds = array<i64: 1>, scalar_prefetch = 0 : i64, scratch_operands = 0 : i64, tpu.core_type = #tpu.core_type<tc>, window_params = [{pipeline_mode = #tpu.pipeline_mode<synchronous>, transform_indices = @transform_0, window_bounds = array<i64: 4, 250, 32>}, {pipeline_mode = #tpu.pipeline_mode<synchronous>, transform_indices = @transform_1, window_bounds = array<i64: 20, 250>}, {pipeline_mode = #tpu.pipeline_mode<synchronous>, transform_indices = @transform_2, window_bounds = array<i64: 20, 1>}, {pipeline_mode = #tpu.pipeline_mode<synchronous>, transform_indices = @transform_3, window_bounds = array<i64: 20, 1>}, {pipeline_mode = #tpu.pipeline_mode<synchronous>, transform_indices = @transform_4, window_bounds = array<i64: 20, 1>}, {pipeline_mode = #tpu.pipeline_mode<synchronous>, transform_indices = @transform_5, window_bounds = array<i64: 20, 32>}]} {
    %c0 = arith.constant 0 : index
    %c0_0 = arith.constant 0 : index
    %0 = vector.load %arg2[%c0, %c0_0] : memref<20x250xf32, #tpu.memory_space<vmem>>, vector<20x250xf32>
    %c0_1 = arith.constant 0 : index
    %c0_2 = arith.constant 0 : index
    %c0_3 = arith.constant 0 : index
    %1 = vector.load %arg1[%c0_1, %c0_2, %c0_3] : memref<4x250x32xf32, #tpu.memory_space<vmem>>, vector<1x250x32xf32>
    %2 = vector.shape_cast %1 : vector<1x250x32xf32> to vector<250x32xf32>
    %cst = arith.constant dense<0.000000e+00> : vector<20x32xf32>
    %3 = tpu.matmul %0, %2, %cst {dimension_numbers = #tpu.dot_dimension_numbers<[1], [0], [0], [1], [0, 0, 1, 1], [], []>} : vector<20x250xf32>, vector<250x32xf32>, vector<20x32xf32> -> vector<20x32xf32>
    %c0_4 = arith.constant 0 : index
    %c0_5 = arith.constant 0 : index
    %4 = vector.load %arg3[%c0_4, %c0_5] : memref<20x1xf32, #tpu.memory_space<vmem>>, vector<20x1xf32>
    %5 = vector.broadcast %4 : vector<20x1xf32> to vector<20x32xf32>
    %6 = arith.addf %3, %5 : vector<20x32xf32>
    %cst_6 = arith.constant 0.000000e+00 : f32
    %7 = vector.broadcast %cst_6 : f32 to vector<20x32xf32>
    %8 = arith.maximumf %6, %7 : vector<20x32xf32>
    %c0_7 = arith.constant 0 : index
    %c0_8 = arith.constant 0 : index
    %9 = vector.load %arg4[%c0_7, %c0_8] : memref<20x1xf32, #tpu.memory_space<vmem>>, vector<20x1xf32>
    %10 = vector.broadcast %9 : vector<20x1xf32> to vector<20x32xf32>
    %11 = arith.mulf %8, %10 : vector<20x32xf32>
    %c0_9 = arith.constant 0 : index
    %c0_10 = arith.constant 0 : index
    %12 = vector.load %arg5[%c0_9, %c0_10] : memref<20x1xf32, #tpu.memory_space<vmem>>, vector<20x1xf32>
    %13 = vector.broadcast %12 : vector<20x1xf32> to vector<20x32xf32>
    %14 = arith.addf %11, %13 : vector<20x32xf32>
    %c0_11 = arith.constant 0 : index
    %c0_12 = arith.constant 0 : index
    %15 = vector.load %arg2[%c0_11, %c0_12] : memref<20x250xf32, #tpu.memory_space<vmem>>, vector<20x250xf32>
    %c1 = arith.constant 1 : index
    %c0_13 = arith.constant 0 : index
    %c0_14 = arith.constant 0 : index
    %16 = vector.load %arg1[%c1, %c0_13, %c0_14] : memref<4x250x32xf32, #tpu.memory_space<vmem>>, vector<1x250x32xf32>
    %17 = vector.shape_cast %16 : vector<1x250x32xf32> to vector<250x32xf32>
    %cst_15 = arith.constant dense<0.000000e+00> : vector<20x32xf32>
    %18 = tpu.matmul %15, %17, %cst_15 {dimension_numbers = #tpu.dot_dimension_numbers<[1], [0], [0], [1], [0, 0, 1, 1], [], []>} : vector<20x250xf32>, vector<250x32xf32>, vector<20x32xf32> -> vector<20x32xf32>
    %c0_16 = arith.constant 0 : index
    %c0_17 = arith.constant 0 : index
    %19 = vector.load %arg3[%c0_16, %c0_17] : memref<20x1xf32, #tpu.memory_space<vmem>>, vector<20x1xf32>
    %20 = vector.broadcast %19 : vector<20x1xf32> to vector<20x32xf32>
    %21 = arith.addf %18, %20 : vector<20x32xf32>
    %cst_18 = arith.constant 0.000000e+00 : f32
    %22 = vector.broadcast %cst_18 : f32 to vector<20x32xf32>
    %23 = arith.maximumf %21, %22 : vector<20x32xf32>
    %c0_19 = arith.constant 0 : index
    %c0_20 = arith.constant 0 : index
    %24 = vector.load %arg4[%c0_19, %c0_20] : memref<20x1xf32, #tpu.memory_space<vmem>>, vector<20x1xf32>
    %25 = vector.broadcast %24 : vector<20x1xf32> to vector<20x32xf32>
    %26 = arith.mulf %23, %25 : vector<20x32xf32>
    %c0_21 = arith.constant 0 : index
    %c0_22 = arith.constant 0 : index
    %27 = vector.load %arg5[%c0_21, %c0_22] : memref<20x1xf32, #tpu.memory_space<vmem>>, vector<20x1xf32>
    %28 = vector.broadcast %27 : vector<20x1xf32> to vector<20x32xf32>
    %29 = arith.addf %26, %28 : vector<20x32xf32>
    %30 = arith.maximumf %14, %29 : vector<20x32xf32>
    %c0_23 = arith.constant 0 : index
    %c0_24 = arith.constant 0 : index
    %31 = vector.load %arg2[%c0_23, %c0_24] : memref<20x250xf32, #tpu.memory_space<vmem>>, vector<20x250xf32>
    %c2 = arith.constant 2 : index
    %c0_25 = arith.constant 0 : index
    %c0_26 = arith.constant 0 : index
    %32 = vector.load %arg1[%c2, %c0_25, %c0_26] : memref<4x250x32xf32, #tpu.memory_space<vmem>>, vector<1x250x32xf32>
    %33 = vector.shape_cast %32 : vector<1x250x32xf32> to vector<250x32xf32>
    %cst_27 = arith.constant dense<0.000000e+00> : vector<20x32xf32>
    %34 = tpu.matmul %31, %33, %cst_27 {dimension_numbers = #tpu.dot_dimension_numbers<[1], [0], [0], [1], [0, 0, 1, 1], [], []>} : vector<20x250xf32>, vector<250x32xf32>, vector<20x32xf32> -> vector<20x32xf32>
    %c0_28 = arith.constant 0 : index
    %c0_29 = arith.constant 0 : index
    %35 = vector.load %arg3[%c0_28, %c0_29] : memref<20x1xf32, #tpu.memory_space<vmem>>, vector<20x1xf32>
    %36 = vector.broadcast %35 : vector<20x1xf32> to vector<20x32xf32>
    %37 = arith.addf %34, %36 : vector<20x32xf32>
    %cst_30 = arith.constant 0.000000e+00 : f32
    %38 = vector.broadcast %cst_30 : f32 to vector<20x32xf32>
    %39 = arith.maximumf %37, %38 : vector<20x32xf32>
    %c0_31 = arith.constant 0 : index
    %c0_32 = arith.constant 0 : index
    %40 = vector.load %arg4[%c0_31, %c0_32] : memref<20x1xf32, #tpu.memory_space<vmem>>, vector<20x1xf32>
    %41 = vector.broadcast %40 : vector<20x1xf32> to vector<20x32xf32>
    %42 = arith.mulf %39, %41 : vector<20x32xf32>
    %c0_33 = arith.constant 0 : index
    %c0_34 = arith.constant 0 : index
    %43 = vector.load %arg5[%c0_33, %c0_34] : memref<20x1xf32, #tpu.memory_space<vmem>>, vector<20x1xf32>
    %44 = vector.broadcast %43 : vector<20x1xf32> to vector<20x32xf32>
    %45 = arith.addf %42, %44 : vector<20x32xf32>
    %46 = arith.maximumf %30, %45 : vector<20x32xf32>
    %c0_35 = arith.constant 0 : index
    %c0_36 = arith.constant 0 : index
    %47 = vector.load %arg2[%c0_35, %c0_36] : memref<20x250xf32, #tpu.memory_space<vmem>>, vector<20x250xf32>
    %c3 = arith.constant 3 : index
    %c0_37 = arith.constant 0 : index
    %c0_38 = arith.constant 0 : index
    %48 = vector.load %arg1[%c3, %c0_37, %c0_38] : memref<4x250x32xf32, #tpu.memory_space<vmem>>, vector<1x250x32xf32>
    %49 = vector.shape_cast %48 : vector<1x250x32xf32> to vector<250x32xf32>
    %cst_39 = arith.constant dense<0.000000e+00> : vector<20x32xf32>
    %50 = tpu.matmul %47, %49, %cst_39 {dimension_numbers = #tpu.dot_dimension_numbers<[1], [0], [0], [1], [0, 0, 1, 1], [], []>} : vector<20x250xf32>, vector<250x32xf32>, vector<20x32xf32> -> vector<20x32xf32>
    %c0_40 = arith.constant 0 : index
    %c0_41 = arith.constant 0 : index
    %51 = vector.load %arg3[%c0_40, %c0_41] : memref<20x1xf32, #tpu.memory_space<vmem>>, vector<20x1xf32>
    %52 = vector.broadcast %51 : vector<20x1xf32> to vector<20x32xf32>
    %53 = arith.addf %50, %52 : vector<20x32xf32>
    %cst_42 = arith.constant 0.000000e+00 : f32
    %54 = vector.broadcast %cst_42 : f32 to vector<20x32xf32>
    %55 = arith.maximumf %53, %54 : vector<20x32xf32>
    %c0_43 = arith.constant 0 : index
    %c0_44 = arith.constant 0 : index
    %56 = vector.load %arg4[%c0_43, %c0_44] : memref<20x1xf32, #tpu.memory_space<vmem>>, vector<20x1xf32>
    %57 = vector.broadcast %56 : vector<20x1xf32> to vector<20x32xf32>
    %58 = arith.mulf %55, %57 : vector<20x32xf32>
    %c0_45 = arith.constant 0 : index
    %c0_46 = arith.constant 0 : index
    %59 = vector.load %arg5[%c0_45, %c0_46] : memref<20x1xf32, #tpu.memory_space<vmem>>, vector<20x1xf32>
    %60 = vector.broadcast %59 : vector<20x1xf32> to vector<20x32xf32>
    %61 = arith.addf %58, %60 : vector<20x32xf32>
    %62 = arith.maximumf %46, %61 : vector<20x32xf32>
    %c0_47 = arith.constant 0 : index
    %c0_48 = arith.constant 0 : index
    %63 = vector.load %arg6[%c0_47, %c0_48] : memref<20x32xf32, #tpu.memory_space<vmem>>, vector<20x32xf32>
    tpu.vector_store %arg6[%c0_47, %c0_48], %62 {strides = array<i32>} : memref<20x32xf32, #tpu.memory_space<vmem>>, vector<20x32xf32>,
    return
  }
  func.func @transform_0(%arg0: i32) -> (i32, i32, i32) {
    %c0_i32 = arith.constant 0 : i32
    %c0_i32_0 = arith.constant 0 : i32
    %c0_i32_1 = arith.constant 0 : i32
    %c0_i32_2 = arith.constant 0 : i32
    return %c0_i32, %c0_i32_0, %c0_i32_1 : i32, i32, i32
  }
  func.func @transform_1(%arg0: i32) -> (i32, i32) {
    %c0_i32 = arith.constant 0 : i32
    %c0_i32_0 = arith.constant 0 : i32
    %c0_i32_1 = arith.constant 0 : i32
    return %c0_i32, %c0_i32_0 : i32, i32
  }
  func.func @transform_2(%arg0: i32) -> (i32, i32) {
    %c0_i32 = arith.constant 0 : i32
    %c0_i32_0 = arith.constant 0 : i32
    %c0_i32_1 = arith.constant 0 : i32
    return %c0_i32, %c0_i32_0 : i32, i32
  }
  func.func @transform_3(%arg0: i32) -> (i32, i32) {
    %c0_i32 = arith.constant 0 : i32
    %c0_i32_0 = arith.constant 0 : i32
    %c0_i32_1 = arith.constant 0 : i32
    return %c0_i32, %c0_i32_0 : i32, i32
  }
  func.func @transform_4(%arg0: i32) -> (i32, i32) {
    %c0_i32 = arith.constant 0 : i32
    %c0_i32_0 = arith.constant 0 : i32
    %c0_i32_1 = arith.constant 0 : i32
    return %c0_i32, %c0_i32_0 : i32, i32
  }
  func.func @transform_5(%arg0: i32) -> (i32, i32) {
    %c0_i32 = arith.constant 0 : i32
    %c0_i32_0 = arith.constant 0 : i32
    %c0_i32_1 = arith.constant 0 : i32
    return %c0_i32, %c0_i32_0 : i32, i32
  }
}

module attributes {stable_mosaic.version = 11 : i64} {
  func.func @_conv_fused_kernel(%arg0: i32, %arg1: memref<1x180x32xf32, #tpu.memory_space<vmem>>, %arg2: memref<20x180xf32, #tpu.memory_space<vmem>>, %arg3: memref<20x1xf32, #tpu.memory_space<vmem>>, %arg4: memref<20x1xf32, #tpu.memory_space<vmem>>, %arg5: memref<20x1xf32, #tpu.memory_space<vmem>>, %arg6: memref<20x32xf32, #tpu.memory_space<vmem>>, %arg7: memref<20x32xf32, #tpu.memory_space<vmem>>) attributes {dimension_semantics = [#tpu.dimension_semantics<arbitrary>], iteration_bounds = array<i64: 1>, scalar_prefetch = 0 : i64, scratch_operands = 0 : i64, tpu.core_type = #tpu.core_type<tc>, window_params = [{pipeline_mode = #tpu.pipeline_mode<synchronous>, transform_indices = @transform_0, window_bounds = array<i64: 1, 180, 32>}, {pipeline_mode = #tpu.pipeline_mode<synchronous>, transform_indices = @transform_1, window_bounds = array<i64: 20, 180>}, {pipeline_mode = #tpu.pipeline_mode<synchronous>, transform_indices = @transform_2, window_bounds = array<i64: 20, 1>}, {pipeline_mode = #tpu.pipeline_mode<synchronous>, transform_indices = @transform_3, window_bounds = array<i64: 20, 1>}, {pipeline_mode = #tpu.pipeline_mode<synchronous>, transform_indices = @transform_4, window_bounds = array<i64: 20, 1>}, {pipeline_mode = #tpu.pipeline_mode<synchronous>, transform_indices = @transform_5, window_bounds = array<i64: 20, 32>}, {pipeline_mode = #tpu.pipeline_mode<synchronous>, transform_indices = @transform_6, window_bounds = array<i64: 20, 32>}]} {
    %c0 = arith.constant 0 : index
    %c0_0 = arith.constant 0 : index
    %0 = vector.load %arg2[%c0, %c0_0] : memref<20x180xf32, #tpu.memory_space<vmem>>, vector<20x180xf32>
    %c0_1 = arith.constant 0 : index
    %c0_2 = arith.constant 0 : index
    %c0_3 = arith.constant 0 : index
    %1 = vector.load %arg1[%c0_1, %c0_2, %c0_3] : memref<1x180x32xf32, #tpu.memory_space<vmem>>, vector<1x180x32xf32>
    %2 = vector.shape_cast %1 : vector<1x180x32xf32> to vector<180x32xf32>
    %cst = arith.constant dense<0.000000e+00> : vector<20x32xf32>
    %3 = tpu.matmul %0, %2, %cst {dimension_numbers = #tpu.dot_dimension_numbers<[1], [0], [0], [1], [0, 0, 1, 1], [], []>} : vector<20x180xf32>, vector<180x32xf32>, vector<20x32xf32> -> vector<20x32xf32>
    %c0_4 = arith.constant 0 : index
    %c0_5 = arith.constant 0 : index
    %4 = vector.load %arg3[%c0_4, %c0_5] : memref<20x1xf32, #tpu.memory_space<vmem>>, vector<20x1xf32>
    %5 = vector.broadcast %4 : vector<20x1xf32> to vector<20x32xf32>
    %6 = arith.addf %3, %5 : vector<20x32xf32>
    %cst_6 = arith.constant 0.000000e+00 : f32
    %7 = vector.broadcast %cst_6 : f32 to vector<20x32xf32>
    %8 = arith.maximumf %6, %7 : vector<20x32xf32>
    %c0_7 = arith.constant 0 : index
    %c0_8 = arith.constant 0 : index
    %9 = vector.load %arg4[%c0_7, %c0_8] : memref<20x1xf32, #tpu.memory_space<vmem>>, vector<20x1xf32>
    %10 = vector.broadcast %9 : vector<20x1xf32> to vector<20x32xf32>
    %11 = arith.mulf %8, %10 : vector<20x32xf32>
    %c0_9 = arith.constant 0 : index
    %c0_10 = arith.constant 0 : index
    %12 = vector.load %arg5[%c0_9, %c0_10] : memref<20x1xf32, #tpu.memory_space<vmem>>, vector<20x1xf32>
    %13 = vector.broadcast %12 : vector<20x1xf32> to vector<20x32xf32>
    %14 = arith.addf %11, %13 : vector<20x32xf32>
    %c0_11 = arith.constant 0 : index
    %c0_12 = arith.constant 0 : index
    %15 = vector.load %arg6[%c0_11, %c0_12] : memref<20x32xf32, #tpu.memory_space<vmem>>, vector<20x32xf32>
    %16 = arith.addf %14, %15 : vector<20x32xf32>
    %c0_13 = arith.constant 0 : index
    %c0_14 = arith.constant 0 : index
    %17 = vector.load %arg7[%c0_13, %c0_14] : memref<20x32xf32, #tpu.memory_space<vmem>>, vector<20x32xf32>
    tpu.vector_store %arg7[%c0_13, %c0_14], %16 {strides = array<i32>} : memref<20x32xf32, #tpu.memory_space<vmem>>, vector<20x32xf32>,
    return
  }
  func.func @transform_0(%arg0: i32) -> (i32, i32, i32) {
    %c0_i32 = arith.constant 0 : i32
    %c0_i32_0 = arith.constant 0 : i32
    %c0_i32_1 = arith.constant 0 : i32
    %c0_i32_2 = arith.constant 0 : i32
    return %c0_i32, %c0_i32_0, %c0_i32_1 : i32, i32, i32
  }
  func.func @transform_1(%arg0: i32) -> (i32, i32) {
    %c0_i32 = arith.constant 0 : i32
    %c0_i32_0 = arith.constant 0 : i32
    %c0_i32_1 = arith.constant 0 : i32
    return %c0_i32, %c0_i32_0 : i32, i32
  }
  func.func @transform_2(%arg0: i32) -> (i32, i32) {
    %c0_i32 = arith.constant 0 : i32
    %c0_i32_0 = arith.constant 0 : i32
    %c0_i32_1 = arith.constant 0 : i32
    return %c0_i32, %c0_i32_0 : i32, i32
  }
  func.func @transform_3(%arg0: i32) -> (i32, i32) {
    %c0_i32 = arith.constant 0 : i32
    %c0_i32_0 = arith.constant 0 : i32
    %c0_i32_1 = arith.constant 0 : i32
    return %c0_i32, %c0_i32_0 : i32, i32
  }
  func.func @transform_4(%arg0: i32) -> (i32, i32) {
    %c0_i32 = arith.constant 0 : i32
    %c0_i32_0 = arith.constant 0 : i32
    %c0_i32_1 = arith.constant 0 : i32
    return %c0_i32, %c0_i32_0 : i32, i32
  }
  func.func @transform_5(%arg0: i32) -> (i32, i32) {
    %c0_i32 = arith.constant 0 : i32
    %c0_i32_0 = arith.constant 0 : i32
    %c0_i32_1 = arith.constant 0 : i32
    return %c0_i32, %c0_i32_0 : i32, i32
  }
  func.func @transform_6(%arg0: i32) -> (i32, i32) {
    %c0_i32 = arith.constant 0 : i32
    %c0_i32_0 = arith.constant 0 : i32
    %c0_i32_1 = arith.constant 0 : i32
    return %c0_i32, %c0_i32_0 : i32, i32
  }
}

module attributes {stable_mosaic.version = 11 : i64} {
  func.func @_conv_fused_kernel(%arg0: i32, %arg1: memref<1x180x32xf32, #tpu.memory_space<vmem>>, %arg2: memref<20x180xf32, #tpu.memory_space<vmem>>, %arg3: memref<20x1xf32, #tpu.memory_space<vmem>>, %arg4: memref<20x1xf32, #tpu.memory_space<vmem>>, %arg5: memref<20x1xf32, #tpu.memory_space<vmem>>, %arg6: memref<20x32xf32, #tpu.memory_space<vmem>>) attributes {dimension_semantics = [#tpu.dimension_semantics<arbitrary>], iteration_bounds = array<i64: 1>, scalar_prefetch = 0 : i64, scratch_operands = 0 : i64, tpu.core_type = #tpu.core_type<tc>, window_params = [{pipeline_mode = #tpu.pipeline_mode<synchronous>, transform_indices = @transform_0, window_bounds = array<i64: 1, 180, 32>}, {pipeline_mode = #tpu.pipeline_mode<synchronous>, transform_indices = @transform_1, window_bounds = array<i64: 20, 180>}, {pipeline_mode = #tpu.pipeline_mode<synchronous>, transform_indices = @transform_2, window_bounds = array<i64: 20, 1>}, {pipeline_mode = #tpu.pipeline_mode<synchronous>, transform_indices = @transform_3, window_bounds = array<i64: 20, 1>}, {pipeline_mode = #tpu.pipeline_mode<synchronous>, transform_indices = @transform_4, window_bounds = array<i64: 20, 1>}, {pipeline_mode = #tpu.pipeline_mode<synchronous>, transform_indices = @transform_5, window_bounds = array<i64: 20, 32>}]} {
    %c0 = arith.constant 0 : index
    %c0_0 = arith.constant 0 : index
    %0 = vector.load %arg2[%c0, %c0_0] : memref<20x180xf32, #tpu.memory_space<vmem>>, vector<20x180xf32>
    %c0_1 = arith.constant 0 : index
    %c0_2 = arith.constant 0 : index
    %c0_3 = arith.constant 0 : index
    %1 = vector.load %arg1[%c0_1, %c0_2, %c0_3] : memref<1x180x32xf32, #tpu.memory_space<vmem>>, vector<1x180x32xf32>
    %2 = vector.shape_cast %1 : vector<1x180x32xf32> to vector<180x32xf32>
    %cst = arith.constant dense<0.000000e+00> : vector<20x32xf32>
    %3 = tpu.matmul %0, %2, %cst {dimension_numbers = #tpu.dot_dimension_numbers<[1], [0], [0], [1], [0, 0, 1, 1], [], []>} : vector<20x180xf32>, vector<180x32xf32>, vector<20x32xf32> -> vector<20x32xf32>
    %c0_4 = arith.constant 0 : index
    %c0_5 = arith.constant 0 : index
    %4 = vector.load %arg3[%c0_4, %c0_5] : memref<20x1xf32, #tpu.memory_space<vmem>>, vector<20x1xf32>
    %5 = vector.broadcast %4 : vector<20x1xf32> to vector<20x32xf32>
    %6 = arith.addf %3, %5 : vector<20x32xf32>
    %cst_6 = arith.constant 0.000000e+00 : f32
    %7 = vector.broadcast %cst_6 : f32 to vector<20x32xf32>
    %8 = arith.maximumf %6, %7 : vector<20x32xf32>
    %c0_7 = arith.constant 0 : index
    %c0_8 = arith.constant 0 : index
    %9 = vector.load %arg4[%c0_7, %c0_8] : memref<20x1xf32, #tpu.memory_space<vmem>>, vector<20x1xf32>
    %10 = vector.broadcast %9 : vector<20x1xf32> to vector<20x32xf32>
    %11 = arith.mulf %8, %10 : vector<20x32xf32>
    %c0_9 = arith.constant 0 : index
    %c0_10 = arith.constant 0 : index
    %12 = vector.load %arg5[%c0_9, %c0_10] : memref<20x1xf32, #tpu.memory_space<vmem>>, vector<20x1xf32>
    %13 = vector.broadcast %12 : vector<20x1xf32> to vector<20x32xf32>
    %14 = arith.addf %11, %13 : vector<20x32xf32>
    %c0_11 = arith.constant 0 : index
    %c0_12 = arith.constant 0 : index
    %15 = vector.load %arg6[%c0_11, %c0_12] : memref<20x32xf32, #tpu.memory_space<vmem>>, vector<20x32xf32>
    tpu.vector_store %arg6[%c0_11, %c0_12], %14 {strides = array<i32>} : memref<20x32xf32, #tpu.memory_space<vmem>>, vector<20x32xf32>,
    return
  }
  func.func @transform_0(%arg0: i32) -> (i32, i32, i32) {
    %c0_i32 = arith.constant 0 : i32
    %c0_i32_0 = arith.constant 0 : i32
    %c0_i32_1 = arith.constant 0 : i32
    %c0_i32_2 = arith.constant 0 : i32
    return %c0_i32, %c0_i32_0, %c0_i32_1 : i32, i32, i32
  }
  func.func @transform_1(%arg0: i32) -> (i32, i32) {
    %c0_i32 = arith.constant 0 : i32
    %c0_i32_0 = arith.constant 0 : i32
    %c0_i32_1 = arith.constant 0 : i32
    return %c0_i32, %c0_i32_0 : i32, i32
  }
  func.func @transform_2(%arg0: i32) -> (i32, i32) {
    %c0_i32 = arith.constant 0 : i32
    %c0_i32_0 = arith.constant 0 : i32
    %c0_i32_1 = arith.constant 0 : i32
    return %c0_i32, %c0_i32_0 : i32, i32
  }
  func.func @transform_3(%arg0: i32) -> (i32, i32) {
    %c0_i32 = arith.constant 0 : i32
    %c0_i32_0 = arith.constant 0 : i32
    %c0_i32_1 = arith.constant 0 : i32
    return %c0_i32, %c0_i32_0 : i32, i32
  }
  func.func @transform_4(%arg0: i32) -> (i32, i32) {
    %c0_i32 = arith.constant 0 : i32
    %c0_i32_0 = arith.constant 0 : i32
    %c0_i32_1 = arith.constant 0 : i32
    return %c0_i32, %c0_i32_0 : i32, i32
  }
  func.func @transform_5(%arg0: i32) -> (i32, i32) {
    %c0_i32 = arith.constant 0 : i32
    %c0_i32_0 = arith.constant 0 : i32
    %c0_i32_1 = arith.constant 0 : i32
    return %c0_i32, %c0_i32_0 : i32, i32
  }
}

module attributes {stable_mosaic.version = 11 : i64} {
  func.func @_head_kernel(%arg0: i32, %arg1: memref<2x320xf32, #tpu.memory_space<vmem>>, %arg2: memref<320x50xf32, #tpu.memory_space<vmem>>, %arg3: memref<1x50xf32, #tpu.memory_space<vmem>>, %arg4: memref<50x10xf32, #tpu.memory_space<vmem>>, %arg5: memref<1x10xf32, #tpu.memory_space<vmem>>, %arg6: memref<2x10xf32, #tpu.memory_space<vmem>>) attributes {dimension_semantics = [#tpu.dimension_semantics<arbitrary>], iteration_bounds = array<i64: 1>, scalar_prefetch = 0 : i64, scratch_operands = 0 : i64, tpu.core_type = #tpu.core_type<tc>, window_params = [{pipeline_mode = #tpu.pipeline_mode<synchronous>, transform_indices = @transform_0, window_bounds = array<i64: 2, 320>}, {pipeline_mode = #tpu.pipeline_mode<synchronous>, transform_indices = @transform_1, window_bounds = array<i64: 320, 50>}, {pipeline_mode = #tpu.pipeline_mode<synchronous>, transform_indices = @transform_2, window_bounds = array<i64: 1, 50>}, {pipeline_mode = #tpu.pipeline_mode<synchronous>, transform_indices = @transform_3, window_bounds = array<i64: 50, 10>}, {pipeline_mode = #tpu.pipeline_mode<synchronous>, transform_indices = @transform_4, window_bounds = array<i64: 1, 10>}, {pipeline_mode = #tpu.pipeline_mode<synchronous>, transform_indices = @transform_5, window_bounds = array<i64: 2, 10>}]} {
    %c0 = arith.constant 0 : index
    %c0_0 = arith.constant 0 : index
    %0 = vector.load %arg1[%c0, %c0_0] : memref<2x320xf32, #tpu.memory_space<vmem>>, vector<2x320xf32>
    %c0_1 = arith.constant 0 : index
    %c0_2 = arith.constant 0 : index
    %1 = vector.load %arg2[%c0_1, %c0_2] : memref<320x50xf32, #tpu.memory_space<vmem>>, vector<320x50xf32>
    %cst = arith.constant dense<0.000000e+00> : vector<2x50xf32>
    %2 = tpu.matmul %0, %1, %cst {dimension_numbers = #tpu.dot_dimension_numbers<[1], [0], [0], [1], [0, 0, 1, 1], [], []>} : vector<2x320xf32>, vector<320x50xf32>, vector<2x50xf32> -> vector<2x50xf32>
    %c0_3 = arith.constant 0 : index
    %c0_4 = arith.constant 0 : index
    %3 = vector.load %arg3[%c0_3, %c0_4] : memref<1x50xf32, #tpu.memory_space<vmem>>, vector<1x50xf32>
    %4 = vector.broadcast %3 : vector<1x50xf32> to vector<2x50xf32>
    %5 = arith.addf %2, %4 : vector<2x50xf32>
    %cst_5 = arith.constant 0.000000e+00 : f32
    %6 = vector.broadcast %cst_5 : f32 to vector<2x50xf32>
    %7 = arith.maximumf %5, %6 : vector<2x50xf32>
    %c0_6 = arith.constant 0 : index
    %c0_7 = arith.constant 0 : index
    %8 = vector.load %arg4[%c0_6, %c0_7] : memref<50x10xf32, #tpu.memory_space<vmem>>, vector<50x10xf32>
    %cst_8 = arith.constant dense<0.000000e+00> : vector<2x10xf32>
    %9 = tpu.matmul %7, %8, %cst_8 {dimension_numbers = #tpu.dot_dimension_numbers<[1], [0], [0], [1], [0, 0, 1, 1], [], []>} : vector<2x50xf32>, vector<50x10xf32>, vector<2x10xf32> -> vector<2x10xf32>
    %c0_9 = arith.constant 0 : index
    %c0_10 = arith.constant 0 : index
    %10 = vector.load %arg5[%c0_9, %c0_10] : memref<1x10xf32, #tpu.memory_space<vmem>>, vector<1x10xf32>
    %11 = vector.broadcast %10 : vector<1x10xf32> to vector<2x10xf32>
    %12 = arith.addf %9, %11 : vector<2x10xf32>
    %cst_11 = arith.constant dense<0xFF800000> : vector<2xf32>
    %13 = vector.multi_reduction <maximumf>, %12, %cst_11 [1] : vector<2x10xf32> to vector<2xf32>
    %14 = vector.shape_cast %13 : vector<2xf32> to vector<2x1xf32>
    %15 = vector.broadcast %14 : vector<2x1xf32> to vector<2x10xf32>
    %16 = arith.subf %12, %15 : vector<2x10xf32>
    %17 = math.exp %16 : vector<2x10xf32>
    %cst_12 = arith.constant dense<0.000000e+00> : vector<2xf32>
    %18 = vector.multi_reduction <add>, %17, %cst_12 [1] : vector<2x10xf32> to vector<2xf32>
    %19 = vector.shape_cast %18 : vector<2xf32> to vector<2x1xf32>
    %20 = math.log %19 : vector<2x1xf32>
    %21 = arith.addf %14, %20 : vector<2x1xf32>
    %22 = vector.broadcast %21 : vector<2x1xf32> to vector<2x10xf32>
    %23 = arith.subf %12, %22 : vector<2x10xf32>
    %c0_13 = arith.constant 0 : index
    %c0_14 = arith.constant 0 : index
    %24 = vector.load %arg6[%c0_13, %c0_14] : memref<2x10xf32, #tpu.memory_space<vmem>>, vector<2x10xf32>
    tpu.vector_store %arg6[%c0_13, %c0_14], %23 {strides = array<i32>} : memref<2x10xf32, #tpu.memory_space<vmem>>, vector<2x10xf32>,
    return
  }
  func.func @transform_0(%arg0: i32) -> (i32, i32) {
    %c0_i32 = arith.constant 0 : i32
    %c0_i32_0 = arith.constant 0 : i32
    %c0_i32_1 = arith.constant 0 : i32
    return %c0_i32, %c0_i32_0 : i32, i32
  }
  func.func @transform_1(%arg0: i32) -> (i32, i32) {
    %c0_i32 = arith.constant 0 : i32
    %c0_i32_0 = arith.constant 0 : i32
    %c0_i32_1 = arith.constant 0 : i32
    return %c0_i32, %c0_i32_0 : i32, i32
  }
  func.func @transform_2(%arg0: i32) -> (i32, i32) {
    %c0_i32 = arith.constant 0 : i32
    %c0_i32_0 = arith.constant 0 : i32
    %c0_i32_1 = arith.constant 0 : i32
    return %c0_i32, %c0_i32_0 : i32, i32
  }
  func.func @transform_3(%arg0: i32) -> (i32, i32) {
    %c0_i32 = arith.constant 0 : i32
    %c0_i32_0 = arith.constant 0 : i32
    %c0_i32_1 = arith.constant 0 : i32
    return %c0_i32, %c0_i32_0 : i32, i32
  }
  func.func @transform_4(%arg0: i32) -> (i32, i32) {
    %c0_i32 = arith.constant 0 : i32
    %c0_i32_0 = arith.constant 0 : i32
    %c0_i32_1 = arith.constant 0 : i32
    return %c0_i32, %c0_i32_0 : i32, i32
  }
  func.func @transform_5(%arg0: i32) -> (i32, i32) {
    %c0_i32 = arith.constant 0 : i32
    %c0_i32_0 = arith.constant 0 : i32
    %c0_i32_1 = arith.constant 0 : i32
    return %c0_i32, %c0_i32_0 : i32, i32
  }
}

</mosaic_0001>

<llo_original>
// kernel: resnet_forward.7
$region0: #{resnet_forward.7}
  #allocation0 [shape = 'u32[]', space=smem, size = 0x4, offset = 0x4, fixed_abs, tag = 'smem constant byte address 0x4 - core index']
  #allocation1 [shape = 'u32[72,128]{1,0:T(1,128)}', space=vmem, size = 0x9000, scoped, tag = 'internal scratch']
  %s0 = inlined_call_operand.vmem [shape: f32[4,25,288], index: 0, kind: input, shape index: {}]
  %s1 = inlined_call_operand.vmem [shape: f32[10,25], index: 1, kind: input, shape index: {}]
  %s2 = inlined_call_operand.vmem [shape: f32[10,1], index: 2, kind: input, shape index: {}]
  %s3 = inlined_call_operand.vmem [shape: f32[10,1], index: 3, kind: input, shape index: {}]
  %s4 = inlined_call_operand.vmem [shape: f32[10,1], index: 4, kind: input, shape index: {}]
  %s5 = inlined_call_operand.vmem [shape: f32[10,288], index: 5, kind: output, shape index: {}]
  %s6 = sld [smem:[#allocation0]]
  $region30: #{resnet_forward.7} parent=0
    _
  %s8 = ssub.s32 1, %s6
  %s9 = scalar_select 0, %s8, %s6
  // Predicated region
  $region2: #{resnet_forward.7} parent=0 // pred_check
    _
  $region3: #{resnet_forward.7} parent=0 // pred_check_branch
    %11 = sbr.rel (0) target = $region5
  $region4: #{resnet_forward.7} parent=0 // pred_region
    _
  $region5: #{resnet_forward.7} parent=0 // pred_fallthru
    _
  // Predicated region
  $region6: #{resnet_forward.7} parent=0 // pred_check
    _
  $region7: #{resnet_forward.7} parent=0 // pred_check_branch
    %13 = sbr.rel (0) target = $region9
  $region8: #{resnet_forward.7} parent=0 // pred_region
    _
  $region9: #{resnet_forward.7} parent=0 // pred_fallthru
    _
  // Predicated region
  $region10: #{resnet_forward.7} parent=0 // pred_check
    _
  $region11: #{resnet_forward.7} parent=0 // pred_check_branch
    %15 = sbr.rel (0) target = $region13
  $region12: #{resnet_forward.7} parent=0 // pred_region
    _
  $region13: #{resnet_forward.7} parent=0 // pred_fallthru
    _
  // Predicated region
  $region14: #{resnet_forward.7} parent=0 // pred_check
    _
  $region15: #{resnet_forward.7} parent=0 // pred_check_branch
    %17 = sbr.rel (0) target = $region17
  $region16: #{resnet_forward.7} parent=0 // pred_region
    _
  $region17: #{resnet_forward.7} parent=0 // pred_fallthru
    _
  // Predicated region
  $region18: #{resnet_forward.7} parent=0 // pred_check
    _
  $region19: #{resnet_forward.7} parent=0 // pred_check_branch
    %19 = sbr.rel (0) target = $region21
  $region20: #{resnet_forward.7} parent=0 // pred_region
    _
  $region21: #{resnet_forward.7} parent=0 // pred_fallthru
    _
  %v20 = vld [vmem:[%s1] sm:$0xff]
  %v21 = vld [vmem:[%s1 + $0x8] sm:$0x3]
  %v22 = vld [vmem:[%s0] sm:$0xff]
  %v23 = vld [vmem:[%s0 + $0x8] sm:$0xff]
  %v24 = vld [vmem:[%s0 + $0x10] sm:$0xff]
  %v25 = vld [vmem:[%s0 + $0x18] sm:$0xff]
  %v26 = vld [vmem:[%s0 + $0x20] sm:$0xff]
  %v27 = vld [vmem:[%s0 + $0x28] sm:$0xff]
  %v28 = vld [vmem:[%s0 + $0x30] sm:$0xff]
  %v29 = vld [vmem:[%s0 + $0x38] sm:$0xff]
  %v30 = vld [vmem:[%s0 + $0x40] sm:$0xff]
  %v31 = vld [vmem:[%s0 + $0x48] sm:$0x1]
  %v32 = vld [vmem:[%s0 + $0x50] sm:$0x1]
  %v33 = vld [vmem:[%s0 + $0x58] sm:$0x1]
  %v34 = vld [vmem:[%s2] sm:$0xff]
  %v35 = vld [vmem:[%s2 + $0x8] sm:$0x3]
  %37 = vset.pattern.permute.xlu0 0
  %38 = vperm.xlu0 %37, %v34
  %v39 = vpop.permute.xlu0 %38
  %42 = vset.pattern.permute.xlu0 0
  %43 = vperm.xlu0 %42, %v35
  %v44 = vpop.permute.xlu0 %43
  %vm46 = vcmask 203776
  %v48 = vsel %vm46, %v20, 0
  %v51 = vsel %vm46, %v21, 0
  %vm53 = vcmask 1040384
  %v55 = vsel %vm53, %v31, 0
  %v58 = vsel %vm53, %v32, 0
  %v61 = vsel %vm53, %v33, 0
  %63 = vmatpush.msra.mxu0 0.0
  %64 = vmatpush.msra.mxu0 0.0
  %65 = vmatpush.msra.mxu0 0.0
  %66 = vmatpush.msra.mxu0 0.0
  %67 = vmatpush.msra.mxu0 0.0
  %68 = vmatpush.msra.mxu0 0.0
  %69 = vmatpush.msra.mxu0 0.0
  %70 = vmatpush.msra.mxu0 0.0
  %71 = vmatpush.msra.mxu0 0.0
  %72 = vmatpush.msra.mxu0 0.0
  %73 = vmatpush.msra.mxu0 0.0
  %74 = vmatpush.msra.mxu0 0.0
  %75 = vmatpush.msra.mxu0 %v55
  %76 = vmatpush.msra.mxu0 %v28
  %77 = vmatpush.msra.mxu0 %v25
  %78 = vmatpush.msra.mxu0 %v22
  %79 = vmatmul.f32.gmra.mxu0 %v48
  %v80 = vpop.f32.mrf.mxu0
  %v81 = vadd.f32 %v39, %v80
  %82 = vmatmul.f32.gmra.mxu0 %v51
  %v83 = vpop.f32.mrf.mxu0
  %v84 = vadd.f32 %v44, %v83
  %85 = vdwg.mxu0
  %86 = vmatpush.msra.mxu0 0.0
  %87 = vmatpush.msra.mxu0 0.0
  %88 = vmatpush.msra.mxu0 0.0
  %89 = vmatpush.msra.mxu0 0.0
  %90 = vmatpush.msra.mxu0 0.0
  %91 = vmatpush.msra.mxu0 0.0
  %92 = vmatpush.msra.mxu0 0.0
  %93 = vmatpush.msra.mxu0 0.0
  %94 = vmatpush.msra.mxu0 0.0
  %95 = vmatpush.msra.mxu0 0.0
  %96 = vmatpush.msra.mxu0 0.0
  %97 = vmatpush.msra.mxu0 0.0
  %98 = vmatpush.msra.mxu0 %v58
  %99 = vmatpush.msra.mxu0 %v29
  %100 = vmatpush.msra.mxu0 %v26
  %101 = vmatpush.msra.mxu0 %v23
  %102 = vmatmul.f32.gmra.mxu0 %v48
  %v103 = vpop.f32.mrf.mxu0
  %v104 = vadd.f32 %v39, %v103
  %105 = vmatmul.f32.gmra.mxu0 %v51
  %v106 = vpop.f32.mrf.mxu0
  %v107 = vadd.f32 %v44, %v106
  %108 = vdwg.mxu0
  %109 = vmatpush.msra.mxu0 0.0
  %110 = vmatpush.msra.mxu0 0.0
  %111 = vmatpush.msra.mxu0 0.0
  %112 = vmatpush.msra.mxu0 0.0
  %113 = vmatpush.msra.mxu0 0.0
  %114 = vmatpush.msra.mxu0 0.0
  %115 = vmatpush.msra.mxu0 0.0
  %116 = vmatpush.msra.mxu0 0.0
  %117 = vmatpush.msra.mxu0 0.0
  %118 = vmatpush.msra.mxu0 0.0
  %119 = vmatpush.msra.mxu0 0.0
  %120 = vmatpush.msra.mxu0 0.0
  %121 = vmatpush.msra.mxu0 %v61
  %122 = vmatpush.msra.mxu0 %v30
  %123 = vmatpush.msra.mxu0 %v27
  %124 = vmatpush.msra.mxu0 %v24
  %125 = vmatmul.f32.gmra.mxu0 %v48
  %v126 = vpop.f32.mrf.mxu0
  %v127 = vadd.f32 %v39, %v126
  %128 = vmatmul.f32.gmra.mxu0 %v51
  %v129 = vpop.f32.mrf.mxu0
  %v130 = vadd.f32 %v44, %v129
  %131 = vdwg.mxu0
  %v132 = vmax.f32 %v81, 0.0
  %v133 = vmax.f32 %v104, 0.0
  %v134 = vmax.f32 %v127, 0.0
  %v135 = vmax.f32 %v84, 0.0
  %v136 = vmax.f32 %v107, 0.0
  %v137 = vmax.f32 %v130, 0.0
  %v138 = vld [vmem:[%s3] sm:$0xff]
  %v139 = vld [vmem:[%s3 + $0x8] sm:$0x3]
  %141 = vset.pattern.permute.xlu0 0
  %142 = vperm.xlu0 %141, %v138
  %v143 = vpop.permute.xlu0 %142
  %146 = vset.pattern.permute.xlu0 0
  %147 = vperm.xlu0 %146, %v139
  %v148 = vpop.permute.xlu0 %147
  %v150 = vmul.f32 %v132, %v143
  %v151 = vmul.f32 %v133, %v143
  %v152 = vmul.f32 %v134, %v143
  %v153 = vmul.f32 %v135, %v148
  %v154 = vmul.f32 %v136, %v148
  %v155 = vmul.f32 %v137, %v148
  %v156 = vld [vmem:[%s4] sm:$0xff]
  %v157 = vld [vmem:[%s4 + $0x8] sm:$0x3]
  %159 = vset.pattern.permute.xlu0 0
  %160 = vperm.xlu0 %159, %v156
  %v161 = vpop.permute.xlu0 %160
  %164 = vset.pattern.permute.xlu0 0
  %165 = vperm.xlu0 %164, %v157
  %v166 = vpop.permute.xlu0 %165
  %v168 = vadd.f32 %v150, %v161
  %v169 = vadd.f32 %v151, %v161
  %v170 = vadd.f32 %v152, %v161
  %v171 = vadd.f32 %v153, %v166
  %v172 = vadd.f32 %v154, %v166
  %v173 = vadd.f32 %v155, %v166
  %s174 = scalar_lea.vmem %s0, 96
  %v175 = vld [vmem:[%s174] sm:$0xff]
  %v176 = vld [vmem:[%s174 + $0x8] sm:$0xff]
  %v177 = vld [vmem:[%s174 + $0x10] sm:$0xff]
  %v178 = vld [vmem:[%s174 + $0x18] sm:$0xff]
  %v179 = vld [vmem:[%s174 + $0x20] sm:$0xff]
  %v180 = vld [vmem:[%s174 + $0x28] sm:$0xff]
  %v181 = vld [vmem:[%s174 + $0x30] sm:$0xff]
  %v182 = vld [vmem:[%s174 + $0x38] sm:$0xff]
  %v183 = vld [vmem:[%s174 + $0x40] sm:$0xff]
  %v184 = vld [vmem:[%s174 + $0x48] sm:$0x1]
  %v185 = vld [vmem:[%s174 + $0x50] sm:$0x1]
  %v186 = vld [vmem:[%s174 + $0x58] sm:$0x1]
  %v188 = vsel %vm53, %v184, 0
  %v191 = vsel %vm53, %v185, 0
  %v194 = vsel %vm53, %v186, 0
  %196 = vmatpush.msra.mxu0 0.0
  %197 = vmatpush.msra.mxu0 0.0
  %198 = vmatpush.msra.mxu0 0.0
  %199 = vmatpush.msra.mxu0 0.0
  %200 = vmatpush.msra.mxu0 0.0
  %201 = vmatpush.msra.mxu0 0.0
  %202 = vmatpush.msra.mxu0 0.0
  %203 = vmatpush.msra.mxu0 0.0
  %204 = vmatpush.msra.mxu0 0.0
  %205 = vmatpush.msra.mxu0 0.0
  %206 = vmatpush.msra.mxu0 0.0
  %207 = vmatpush.msra.mxu0 0.0
  %208 = vmatpush.msra.mxu0 %v188
  %209 = vmatpush.msra.mxu0 %v181
  %210 = vmatpush.msra.mxu0 %v178
  %211 = vmatpush.msra.mxu0 %v175
  %212 = vmatmul.f32.gmra.mxu0 %v48
  %v213 = vpop.f32.mrf.mxu0
  %v214 = vadd.f32 %v39, %v213
  %215 = vmatmul.f32.gmra.mxu0 %v51
  %v216 = vpop.f32.mrf.mxu0
  %v217 = vadd.f32 %v44, %v216
  %218 = vdwg.mxu0
  %219 = vmatpush.msra.mxu0 0.0
  %220 = vmatpush.msra.mxu0 0.0
  %221 = vmatpush.msra.mxu0 0.0
  %222 = vmatpush.msra.mxu0 0.0
  %223 = vmatpush.msra.mxu0 0.0
  %224 = vmatpush.msra.mxu0 0.0
  %225 = vmatpush.msra.mxu0 0.0
  %226 = vmatpush.msra.mxu0 0.0
  %227 = vmatpush.msra.mxu0 0.0
  %228 = vmatpush.msra.mxu0 0.0
  %229 = vmatpush.msra.mxu0 0.0
  %230 = vmatpush.msra.mxu0 0.0
  %231 = vmatpush.msra.mxu0 %v191
  %232 = vmatpush.msra.mxu0 %v182
  %233 = vmatpush.msra.mxu0 %v179
  %234 = vmatpush.msra.mxu0 %v176
  %235 = vmatmul.f32.gmra.mxu0 %v48
  %v236 = vpop.f32.mrf.mxu0
  %v237 = vadd.f32 %v39, %v236
  %238 = vmatmul.f32.gmra.mxu0 %v51
  %v239 = vpop.f32.mrf.mxu0
  %v240 = vadd.f32 %v44, %v239
  %241 = vdwg.mxu0
  %242 = vmatpush.msra.mxu0 0.0
  %243 = vmatpush.msra.mxu0 0.0
  %244 = vmatpush.msra.mxu0 0.0
  %245 = vmatpush.msra.mxu0 0.0
  %246 = vmatpush.msra.mxu0 0.0
  %247 = vmatpush.msra.mxu0 0.0
  %248 = vmatpush.msra.mxu0 0.0
  %249 = vmatpush.msra.mxu0 0.0
  %250 = vmatpush.msra.mxu0 0.0
  %251 = vmatpush.msra.mxu0 0.0
  %252 = vmatpush.msra.mxu0 0.0
  %253 = vmatpush.msra.mxu0 0.0
  %254 = vmatpush.msra.mxu0 %v194
  %255 = vmatpush.msra.mxu0 %v183
  %256 = vmatpush.msra.mxu0 %v180
  %257 = vmatpush.msra.mxu0 %v177
  %258 = vmatmul.f32.gmra.mxu0 %v48
  %v259 = vpop.f32.mrf.mxu0
  %v260 = vadd.f32 %v39, %v259
  %261 = vmatmul.f32.gmra.mxu0 %v51
  %v262 = vpop.f32.mrf.mxu0
  %v263 = vadd.f32 %v44, %v262
  %264 = vdwg.mxu0
  %v265 = vmax.f32 %v214, 0.0
  %v266 = vmax.f32 %v237, 0.0
  %v267 = vmax.f32 %v260, 0.0
  %v268 = vmax.f32 %v217, 0.0
  %v269 = vmax.f32 %v240, 0.0
  %v270 = vmax.f32 %v263, 0.0
  %v271 = vmul.f32 %v265, %v143
  %v272 = vmul.f32 %v266, %v143
  %v273 = vmul.f32 %v267, %v143
  %v274 = vmul.f32 %v268, %v148
  %v275 = vmul.f32 %v269, %v148
  %v276 = vmul.f32 %v270, %v148
  %v277 = vadd.f32 %v271, %v161
  %v278 = vadd.f32 %v272, %v161
  %v279 = vadd.f32 %v273, %v161
  %v280 = vadd.f32 %v274, %v166
  %v281 = vadd.f32 %v275, %v166
  %v282 = vadd.f32 %v276, %v166
  %v283 = vmax.f32 %v168, %v277
  %v284 = vmax.f32 %v169, %v278
  %v285 = vmax.f32 %v170, %v279
  %v286 = vmax.f32 %v171, %v280
  %v287 = vmax.f32 %v172, %v281
  %v288 = vmax.f32 %v173, %v282
  %s289 = scalar_lea.vmem %s0, 192
  %v290 = vld [vmem:[%s289] sm:$0xff]
  %v291 = vld [vmem:[%s289 + $0x8] sm:$0xff]
  %v292 = vld [vmem:[%s289 + $0x10] sm:$0xff]
  %v293 = vld [vmem:[%s289 + $0x18] sm:$0xff]
  %v294 = vld [vmem:[%s289 + $0x20] sm:$0xff]
  %v295 = vld [vmem:[%s289 + $0x28] sm:$0xff]
  %v296 = vld [vmem:[%s289 + $0x30] sm:$0xff]
  %v297 = vld [vmem:[%s289 + $0x38] sm:$0xff]
  %v298 = vld [vmem:[%s289 + $0x40] sm:$0xff]
  %v299 = vld [vmem:[%s289 + $0x48] sm:$0x1]
  %v300 = vld [vmem:[%s289 + $0x50] sm:$0x1]
  %v301 = vld [vmem:[%s289 + $0x58] sm:$0x1]
  %v303 = vsel %vm53, %v299, 0
  %v306 = vsel %vm53, %v300, 0
  %v309 = vsel %vm53, %v301, 0
  %311 = vmatpush.msra.mxu0 0.0
  %312 = vmatpush.msra.mxu0 0.0
  %313 = vmatpush.msra.mxu0 0.0
  %314 = vmatpush.msra.mxu0 0.0
  %315 = vmatpush.msra.mxu0 0.0
  %316 = vmatpush.msra.mxu0 0.0
  %317 = vmatpush.msra.mxu0 0.0
  %318 = vmatpush.msra.mxu0 0.0
  %319 = vmatpush.msra.mxu0 0.0
  %320 = vmatpush.msra.mxu0 0.0
  %321 = vmatpush.msra.mxu0 0.0
  %322 = vmatpush.msra.mxu0 0.0
  %323 = vmatpush.msra.mxu0 %v303
  %324 = vmatpush.msra.mxu0 %v296
  %325 = vmatpush.msra.mxu0 %v293
  %326 = vmatpush.msra.mxu0 %v290
  %327 = vmatmul.f32.gmra.mxu0 %v48
  %v328 = vpop.f32.mrf.mxu0
  %v329 = vadd.f32 %v39, %v328
  %330 = vmatmul.f32.gmra.mxu0 %v51
  %v331 = vpop.f32.mrf.mxu0
  %v332 = vadd.f32 %v44, %v331
  %333 = vdwg.mxu0
  %334 = vmatpush.msra.mxu0 0.0
  %335 = vmatpush.msra.mxu0 0.0
  %336 = vmatpush.msra.mxu0 0.0
  %337 = vmatpush.msra.mxu0 0.0
  %338 = vmatpush.msra.mxu0 0.0
  %339 = vmatpush.msra.mxu0 0.0
  %340 = vmatpush.msra.mxu0 0.0
  %341 = vmatpush.msra.mxu0 0.0
  %342 = vmatpush.msra.mxu0 0.0
  %343 = vmatpush.msra.mxu0 0.0
  %344 = vmatpush.msra.mxu0 0.0
  %345 = vmatpush.msra.mxu0 0.0
  %346 = vmatpush.msra.mxu0 %v306
  %347 = vmatpush.msra.mxu0 %v297
  %348 = vmatpush.msra.mxu0 %v294
  %349 = vmatpush.msra.mxu0 %v291
  %350 = vmatmul.f32.gmra.mxu0 %v48
  %v351 = vpop.f32.mrf.mxu0
  %v352 = vadd.f32 %v39, %v351
  %353 = vmatmul.f32.gmra.mxu0 %v51
  %v354 = vpop.f32.mrf.mxu0
  %v355 = vadd.f32 %v44, %v354
  %356 = vdwg.mxu0
  %357 = vmatpush.msra.mxu0 0.0
  %358 = vmatpush.msra.mxu0 0.0
  %359 = vmatpush.msra.mxu0 0.0
  %360 = vmatpush.msra.mxu0 0.0
  %361 = vmatpush.msra.mxu0 0.0
  %362 = vmatpush.msra.mxu0 0.0
  %363 = vmatpush.msra.mxu0 0.0
  %364 = vmatpush.msra.mxu0 0.0
  %365 = vmatpush.msra.mxu0 0.0
  %366 = vmatpush.msra.mxu0 0.0
  %367 = vmatpush.msra.mxu0 0.0
  %368 = vmatpush.msra.mxu0 0.0
  %369 = vmatpush.msra.mxu0 %v309
  %370 = vmatpush.msra.mxu0 %v298
  %371 = vmatpush.msra.mxu0 %v295
  %372 = vmatpush.msra.mxu0 %v292
  %373 = vmatmul.f32.gmra.mxu0 %v48
  %v374 = vpop.f32.mrf.mxu0
  %v375 = vadd.f32 %v39, %v374
  %376 = vmatmul.f32.gmra.mxu0 %v51
  %v377 = vpop.f32.mrf.mxu0
  %v378 = vadd.f32 %v44, %v377
  %379 = vdwg.mxu0
  %v380 = vmax.f32 %v329, 0.0
  %v381 = vmax.f32 %v352, 0.0
  %v382 = vmax.f32 %v375, 0.0
  %v383 = vmax.f32 %v332, 0.0
  %v384 = vmax.f32 %v355, 0.0
  %v385 = vmax.f32 %v378, 0.0
  %v386 = vmul.f32 %v380, %v143
  %v387 = vmul.f32 %v381, %v143
  %v388 = vmul.f32 %v382, %v143
  %v389 = vmul.f32 %v383, %v148
  %v390 = vmul.f32 %v384, %v148
  %v391 = vmul.f32 %v385, %v148
  %v392 = vadd.f32 %v386, %v161
  %v393 = vadd.f32 %v387, %v161
  %v394 = vadd.f32 %v388, %v161
  %v395 = vadd.f32 %v389, %v166
  %v396 = vadd.f32 %v390, %v166
  %v397 = vadd.f32 %v391, %v166
  %v398 = vmax.f32 %v283, %v392
  %v399 = vmax.f32 %v284, %v393
  %v400 = vmax.f32 %v285, %v394
  %v401 = vmax.f32 %v286, %v395
  %v402 = vmax.f32 %v287, %v396
  %v403 = vmax.f32 %v288, %v397
  %s404 = scalar_lea.vmem %s0, 288
  %v405 = vld [vmem:[%s404] sm:$0xff]
  %v406 = vld [vmem:[%s404 + $0x8] sm:$0xff]
  %v407 = vld [vmem:[%s404 + $0x10] sm:$0xff]
  %v408 = vld [vmem:[%s404 + $0x18] sm:$0xff]
  %v409 = vld [vmem:[%s404 + $0x20] sm:$0xff]
  %v410 = vld [vmem:[%s404 + $0x28] sm:$0xff]
  %v411 = vld [vmem:[%s404 + $0x30] sm:$0xff]
  %v412 = vld [vmem:[%s404 + $0x38] sm:$0xff]
  %v413 = vld [vmem:[%s404 + $0x40] sm:$0xff]
  %v414 = vld [vmem:[%s404 + $0x48] sm:$0x1]
  %v415 = vld [vmem:[%s404 + $0x50] sm:$0x1]
  %v416 = vld [vmem:[%s404 + $0x58] sm:$0x1]
  %v418 = vsel %vm53, %v414, 0
  %v421 = vsel %vm53, %v415, 0
  %v424 = vsel %vm53, %v416, 0
  %426 = vmatpush.msra.mxu0 0.0
  %427 = vmatpush.msra.mxu0 0.0
  %428 = vmatpush.msra.mxu0 0.0
  %429 = vmatpush.msra.mxu0 0.0
  %430 = vmatpush.msra.mxu0 0.0
  %431 = vmatpush.msra.mxu0 0.0
  %432 = vmatpush.msra.mxu0 0.0
  %433 = vmatpush.msra.mxu0 0.0
  %434 = vmatpush.msra.mxu0 0.0
  %435 = vmatpush.msra.mxu0 0.0
  %436 = vmatpush.msra.mxu0 0.0
  %437 = vmatpush.msra.mxu0 0.0
  %438 = vmatpush.msra.mxu0 %v418
  %439 = vmatpush.msra.mxu0 %v411
  %440 = vmatpush.msra.mxu0 %v408
  %441 = vmatpush.msra.mxu0 %v405
  %442 = vmatmul.f32.gmra.mxu0 %v48
  %v443 = vpop.f32.mrf.mxu0
  %v444 = vadd.f32 %v39, %v443
  %445 = vmatmul.f32.gmra.mxu0 %v51
  %v446 = vpop.f32.mrf.mxu0
  %v447 = vadd.f32 %v44, %v446
  %448 = vdwg.mxu0
  %449 = vmatpush.msra.mxu0 0.0
  %450 = vmatpush.msra.mxu0 0.0
  %451 = vmatpush.msra.mxu0 0.0
  %452 = vmatpush.msra.mxu0 0.0
  %453 = vmatpush.msra.mxu0 0.0
  %454 = vmatpush.msra.mxu0 0.0
  %455 = vmatpush.msra.mxu0 0.0
  %456 = vmatpush.msra.mxu0 0.0
  %457 = vmatpush.msra.mxu0 0.0
  %458 = vmatpush.msra.mxu0 0.0
  %459 = vmatpush.msra.mxu0 0.0
  %460 = vmatpush.msra.mxu0 0.0
  %461 = vmatpush.msra.mxu0 %v421
  %462 = vmatpush.msra.mxu0 %v412
  %463 = vmatpush.msra.mxu0 %v409
  %464 = vmatpush.msra.mxu0 %v406
  %465 = vmatmul.f32.gmra.mxu0 %v48
  %v466 = vpop.f32.mrf.mxu0
  %v467 = vadd.f32 %v39, %v466
  %468 = vmatmul.f32.gmra.mxu0 %v51
  %v469 = vpop.f32.mrf.mxu0
  %v470 = vadd.f32 %v44, %v469
  %471 = vdwg.mxu0
  %472 = vmatpush.msra.mxu0 0.0
  %473 = vmatpush.msra.mxu0 0.0
  %474 = vmatpush.msra.mxu0 0.0
  %475 = vmatpush.msra.mxu0 0.0
  %476 = vmatpush.msra.mxu0 0.0
  %477 = vmatpush.msra.mxu0 0.0
  %478 = vmatpush.msra.mxu0 0.0
  %479 = vmatpush.msra.mxu0 0.0
  %480 = vmatpush.msra.mxu0 0.0
  %481 = vmatpush.msra.mxu0 0.0
  %482 = vmatpush.msra.mxu0 0.0
  %483 = vmatpush.msra.mxu0 0.0
  %484 = vmatpush.msra.mxu0 %v424
  %485 = vmatpush.msra.mxu0 %v413
  %486 = vmatpush.msra.mxu0 %v410
  %487 = vmatpush.msra.mxu0 %v407
  %488 = vmatmul.f32.gmra.mxu0 %v48
  %v489 = vpop.f32.mrf.mxu0
  %v490 = vadd.f32 %v39, %v489
  %491 = vmatmul.f32.gmra.mxu0 %v51
  %v492 = vpop.f32.mrf.mxu0
  %v493 = vadd.f32 %v44, %v492
  %494 = vdwg.mxu0
  %v495 = vmax.f32 %v444, 0.0
  %v496 = vmax.f32 %v467, 0.0
  %v497 = vmax.f32 %v490, 0.0
  %v498 = vmax.f32 %v447, 0.0
  %v499 = vmax.f32 %v470, 0.0
  %v500 = vmax.f32 %v493, 0.0
  %v501 = vmul.f32 %v495, %v143
  %v502 = vmul.f32 %v496, %v143
  %v503 = vmul.f32 %v497, %v143
  %v504 = vmul.f32 %v498, %v148
  %v505 = vmul.f32 %v499, %v148
  %v506 = vmul.f32 %v500, %v148
  %v507 = vadd.f32 %v501, %v161
  %v508 = vadd.f32 %v502, %v161
  %v509 = vadd.f32 %v503, %v161
  %v510 = vadd.f32 %v504, %v166
  %v511 = vadd.f32 %v505, %v166
  %v512 = vadd.f32 %v506, %v166
  %v513 = vmax.f32 %v398, %v507
  %v514 = vmax.f32 %v399, %v508
  %v515 = vmax.f32 %v400, %v509
  %v516 = vmax.f32 %v401, %v510
  %v517 = vmax.f32 %v402, %v511
  %v518 = vmax.f32 %v403, %v512
  %519 = vst [vmem:[%s5] sm:$0xff] %v513
  %520 = vst [vmem:[%s5 + $0x8] sm:$0xff] %v514
  %vm521 = vcmask 261120
  %522 = vst.msk [vmem:[%s5 + $0x10] sm:$0xff] %vm521, %v515
  %523 = vst [vmem:[%s5 + $0x18] sm:$0x3] %v516
  %524 = vst [vmem:[%s5 + $0x20] sm:$0x3] %v517
  %vm525 = vcmask 254976
  %526 = vst.msk [vmem:[%s5 + $0x28] sm:$0x3] %vm525, %v518
  // Predicated region
  $region22: #{resnet_forward.7} parent=0 // pred_check
    _
  $region23: #{resnet_forward.7} parent=0 // pred_check_branch
    %528 = sbr.rel (0) target = $region25
  $region24: #{resnet_forward.7} parent=0 // pred_region
    _
  $region25: #{resnet_forward.7} parent=0 // pred_fallthru
    _
  // Predicated region
  $region26: #{resnet_forward.7} parent=0 // pred_check
    _
  $region27: #{resnet_forward.7} parent=0 // pred_check_branch
    %530 = sbr.rel (0) target = $region29
  $region28: #{resnet_forward.7} parent=0 // pred_region
    _
  $region29: #{resnet_forward.7} parent=0 // pred_fallthru
    _

// kernel: resnet_forward.8
$region0: #{resnet_forward.8}
  #allocation0 [shape = 'u32[]', space=smem, size = 0x4, offset = 0x4, fixed_abs, tag = 'smem constant byte address 0x4 - core index']
  #allocation1 [shape = 'u32[72,128]{1,0:T(1,128)}', space=vmem, size = 0x9000, scoped, tag = 'internal scratch']
  %s0 = inlined_call_operand.vmem [shape: f32[1,90,288], index: 0, kind: input, shape index: {}]
  %s1 = inlined_call_operand.vmem [shape: f32[10,90], index: 1, kind: input, shape index: {}]
  %s2 = inlined_call_operand.vmem [shape: f32[10,1], index: 2, kind: input, shape index: {}]
  %s3 = inlined_call_operand.vmem [shape: f32[10,1], index: 3, kind: input, shape index: {}]
  %s4 = inlined_call_operand.vmem [shape: f32[10,1], index: 4, kind: input, shape index: {}]
  %s5 = inlined_call_operand.vmem [shape: f32[10,288], index: 5, kind: output, shape index: {}]
  %s6 = sld [smem:[#allocation0]]
  $region30: #{resnet_forward.8} parent=0
    _
  %s8 = ssub.s32 1, %s6
  %s9 = scalar_select 0, %s8, %s6
  // Predicated region
  $region2: #{resnet_forward.8} parent=0 // pred_check
    _
  $region3: #{resnet_forward.8} parent=0 // pred_check_branch
    %11 = sbr.rel (0) target = $region5
  $region4: #{resnet_forward.8} parent=0 // pred_region
    _
  $region5: #{resnet_forward.8} parent=0 // pred_fallthru
    _
  // Predicated region
  $region6: #{resnet_forward.8} parent=0 // pred_check
    _
  $region7: #{resnet_forward.8} parent=0 // pred_check_branch
    %13 = sbr.rel (0) target = $region9
  $region8: #{resnet_forward.8} parent=0 // pred_region
    _
  $region9: #{resnet_forward.8} parent=0 // pred_fallthru
    _
  // Predicated region
  $region10: #{resnet_forward.8} parent=0 // pred_check
    _
  $region11: #{resnet_forward.8} parent=0 // pred_check_branch
    %15 = sbr.rel (0) target = $region13
  $region12: #{resnet_forward.8} parent=0 // pred_region
    _
  $region13: #{resnet_forward.8} parent=0 // pred_fallthru
    _
  // Predicated region
  $region14: #{resnet_forward.8} parent=0 // pred_check
    _
  $region15: #{resnet_forward.8} parent=0 // pred_check_branch
    %17 = sbr.rel (0) target = $region17
  $region16: #{resnet_forward.8} parent=0 // pred_region
    _
  $region17: #{resnet_forward.8} parent=0 // pred_fallthru
    _
  // Predicated region
  $region18: #{resnet_forward.8} parent=0 // pred_check
    _
  $region19: #{resnet_forward.8} parent=0 // pred_check_branch
    %19 = sbr.rel (0) target = $region21
  $region20: #{resnet_forward.8} parent=0 // pred_region
    _
  $region21: #{resnet_forward.8} parent=0 // pred_fallthru
    _
  %v20 = vld [vmem:[%s1] sm:$0xff]
  %v21 = vld [vmem:[%s1 + $0x8] sm:$0x3]
  %v22 = vld [vmem:[%s0] sm:$0xff]
  %v23 = vld [vmem:[%s0 + $0x8] sm:$0xff]
  %v24 = vld [vmem:[%s0 + $0x10] sm:$0xff]
  %v25 = vld [vmem:[%s0 + $0x18] sm:$0xff]
  %v26 = vld [vmem:[%s0 + $0x20] sm:$0xff]
  %v27 = vld [vmem:[%s0 + $0x28] sm:$0xff]
  %v28 = vld [vmem:[%s0 + $0x30] sm:$0xff]
  %v29 = vld [vmem:[%s0 + $0x38] sm:$0xff]
  %v30 = vld [vmem:[%s0 + $0x40] sm:$0xff]
  %v31 = vld [vmem:[%s0 + $0x48] sm:$0xff]
  %v32 = vld [vmem:[%s0 + $0x50] sm:$0xff]
  %v33 = vld [vmem:[%s0 + $0x58] sm:$0xff]
  %v34 = vld [vmem:[%s0 + $0x60] sm:$0xff]
  %v35 = vld [vmem:[%s0 + $0x68] sm:$0xff]
  %v36 = vld [vmem:[%s0 + $0x70] sm:$0xff]
  %v37 = vld [vmem:[%s0 + $0x78] sm:$0xff]
  %v38 = vld [vmem:[%s0 + $0x80] sm:$0xff]
  %v39 = vld [vmem:[%s0 + $0x88] sm:$0xff]
  %v40 = vld [vmem:[%s0 + $0x90] sm:$0xff]
  %v41 = vld [vmem:[%s0 + $0x98] sm:$0xff]
  %v42 = vld [vmem:[%s0 + $0xa0] sm:$0xff]
  %v43 = vld [vmem:[%s0 + $0xa8] sm:$0xff]
  %v44 = vld [vmem:[%s0 + $0xb0] sm:$0xff]
  %v45 = vld [vmem:[%s0 + $0xb8] sm:$0xff]
  %v46 = vld [vmem:[%s0 + $0xc0] sm:$0xff]
  %v47 = vld [vmem:[%s0 + $0xc8] sm:$0xff]
  %v48 = vld [vmem:[%s0 + $0xd0] sm:$0xff]
  %v49 = vld [vmem:[%s0 + $0xd8] sm:$0xff]
  %v50 = vld [vmem:[%s0 + $0xe0] sm:$0xff]
  %v51 = vld [vmem:[%s0 + $0xe8] sm:$0xff]
  %v52 = vld [vmem:[%s0 + $0xf0] sm:$0xff]
  %v53 = vld [vmem:[%s0 + $0xf8] sm:$0xff]
  %v54 = vld [vmem:[%s0 + $0x100] sm:$0xff]
  %v55 = vld [vmem:[%s0 + $0x108] sm:$0x3]
  %v56 = vld [vmem:[%s0 + $0x110] sm:$0x3]
  %v57 = vld [vmem:[%s0 + $0x118] sm:$0x3]
  %v58 = vld [vmem:[%s2] sm:$0xff]
  %v59 = vld [vmem:[%s2 + $0x8] sm:$0x3]
  %61 = vset.pattern.permute.xlu0 0
  %62 = vperm.xlu0 %61, %v58
  %v63 = vpop.permute.xlu0 %62
  %66 = vset.pattern.permute.xlu0 0
  %67 = vperm.xlu0 %66, %v59
  %v68 = vpop.permute.xlu0 %67
  %vm70 = vcmask 736256
  %v72 = vsel %vm70, %v20, 0
  %v75 = vsel %vm70, %v21, 0
  %vm77 = vcmask 1041408
  %v79 = vsel %vm77, %v55, 0
  %v82 = vsel %vm77, %v56, 0
  %v85 = vsel %vm77, %v57, 0
  %87 = vmatpush.msra.mxu0 0.0
  %88 = vmatpush.msra.mxu0 0.0
  %89 = vmatpush.msra.mxu0 0.0
  %90 = vmatpush.msra.mxu0 0.0
  %91 = vmatpush.msra.mxu0 %v79
  %92 = vmatpush.msra.mxu0 %v52
  %93 = vmatpush.msra.mxu0 %v49
  %94 = vmatpush.msra.mxu0 %v46
  %95 = vmatpush.msra.mxu0 %v43
  %96 = vmatpush.msra.mxu0 %v40
  %97 = vmatpush.msra.mxu0 %v37
  %98 = vmatpush.msra.mxu0 %v34
  %99 = vmatpush.msra.mxu0 %v31
  %100 = vmatpush.msra.mxu0 %v28
  %101 = vmatpush.msra.mxu0 %v25
  %102 = vmatpush.msra.mxu0 %v22
  %103 = vmatmul.f32.gmra.mxu0 %v72
  %v104 = vpop.f32.mrf.mxu0
  %v105 = vadd.f32 %v63, %v104
  %106 = vmatmul.f32.gmra.mxu0 %v75
  %v107 = vpop.f32.mrf.mxu0
  %v108 = vadd.f32 %v68, %v107
  %109 = vdwg.mxu0
  %110 = vmatpush.msra.mxu0 0.0
  %111 = vmatpush.msra.mxu0 0.0
  %112 = vmatpush.msra.mxu0 0.0
  %113 = vmatpush.msra.mxu0 0.0
  %114 = vmatpush.msra.mxu0 %v82
  %115 = vmatpush.msra.mxu0 %v53
  %116 = vmatpush.msra.mxu0 %v50
  %117 = vmatpush.msra.mxu0 %v47
  %118 = vmatpush.msra.mxu0 %v44
  %119 = vmatpush.msra.mxu0 %v41
  %120 = vmatpush.msra.mxu0 %v38
  %121 = vmatpush.msra.mxu0 %v35
  %122 = vmatpush.msra.mxu0 %v32
  %123 = vmatpush.msra.mxu0 %v29
  %124 = vmatpush.msra.mxu0 %v26
  %125 = vmatpush.msra.mxu0 %v23
  %126 = vmatmul.f32.gmra.mxu0 %v72
  %v127 = vpop.f32.mrf.mxu0
  %v128 = vadd.f32 %v63, %v127
  %129 = vmatmul.f32.gmra.mxu0 %v75
  %v130 = vpop.f32.mrf.mxu0
  %v131 = vadd.f32 %v68, %v130
  %132 = vdwg.mxu0
  %133 = vmatpush.msra.mxu0 0.0
  %134 = vmatpush.msra.mxu0 0.0
  %135 = vmatpush.msra.mxu0 0.0
  %136 = vmatpush.msra.mxu0 0.0
  %137 = vmatpush.msra.mxu0 %v85
  %138 = vmatpush.msra.mxu0 %v54
  %139 = vmatpush.msra.mxu0 %v51
  %140 = vmatpush.msra.mxu0 %v48
  %141 = vmatpush.msra.mxu0 %v45
  %142 = vmatpush.msra.mxu0 %v42
  %143 = vmatpush.msra.mxu0 %v39
  %144 = vmatpush.msra.mxu0 %v36
  %145 = vmatpush.msra.mxu0 %v33
  %146 = vmatpush.msra.mxu0 %v30
  %147 = vmatpush.msra.mxu0 %v27
  %148 = vmatpush.msra.mxu0 %v24
  %149 = vmatmul.f32.gmra.mxu0 %v72
  %v150 = vpop.f32.mrf.mxu0
  %v151 = vadd.f32 %v63, %v150
  %152 = vmatmul.f32.gmra.mxu0 %v75
  %v153 = vpop.f32.mrf.mxu0
  %v154 = vadd.f32 %v68, %v153
  %155 = vdwg.mxu0
  %v156 = vmax.f32 %v105, 0.0
  %v157 = vmax.f32 %v128, 0.0
  %v158 = vmax.f32 %v151, 0.0
  %v159 = vmax.f32 %v108, 0.0
  %v160 = vmax.f32 %v131, 0.0
  %v161 = vmax.f32 %v154, 0.0
  %v162 = vld [vmem:[%s3] sm:$0xff]
  %v163 = vld [vmem:[%s3 + $0x8] sm:$0x3]
  %165 = vset.pattern.permute.xlu0 0
  %166 = vperm.xlu0 %165, %v162
  %v167 = vpop.permute.xlu0 %166
  %170 = vset.pattern.permute.xlu0 0
  %171 = vperm.xlu0 %170, %v163
  %v172 = vpop.permute.xlu0 %171
  %v174 = vmul.f32 %v156, %v167
  %v175 = vmul.f32 %v157, %v167
  %v176 = vmul.f32 %v158, %v167
  %v177 = vmul.f32 %v159, %v172
  %v178 = vmul.f32 %v160, %v172
  %v179 = vmul.f32 %v161, %v172
  %v180 = vld [vmem:[%s4] sm:$0xff]
  %v181 = vld [vmem:[%s4 + $0x8] sm:$0x3]
  %183 = vset.pattern.permute.xlu0 0
  %184 = vperm.xlu0 %183, %v180
  %v185 = vpop.permute.xlu0 %184
  %188 = vset.pattern.permute.xlu0 0
  %189 = vperm.xlu0 %188, %v181
  %v190 = vpop.permute.xlu0 %189
  %v192 = vadd.f32 %v174, %v185
  %v193 = vadd.f32 %v175, %v185
  %v194 = vadd.f32 %v176, %v185
  %v195 = vadd.f32 %v177, %v190
  %v196 = vadd.f32 %v178, %v190
  %v197 = vadd.f32 %v179, %v190
  %198 = vst [vmem:[%s5] sm:$0xff] %v192
  %199 = vst [vmem:[%s5 + $0x8] sm:$0xff] %v193
  %vm200 = vcmask 261120
  %201 = vst.msk [vmem:[%s5 + $0x10] sm:$0xff] %vm200, %v194
  %202 = vst [vmem:[%s5 + $0x18] sm:$0x3] %v195
  %203 = vst [vmem:[%s5 + $0x20] sm:$0x3] %v196
  %vm204 = vcmask 254976
  %205 = vst.msk [vmem:[%s5 + $0x28] sm:$0x3] %vm204, %v197
  // Predicated region
  $region22: #{resnet_forward.8} parent=0 // pred_check
    _
  $region23: #{resnet_forward.8} parent=0 // pred_check_branch
    %207 = sbr.rel (0) target = $region25
  $region24: #{resnet_forward.8} parent=0 // pred_region
    _
  $region25: #{resnet_forward.8} parent=0 // pred_fallthru
    _
  // Predicated region
  $region26: #{resnet_forward.8} parent=0 // pred_check
    _
  $region27: #{resnet_forward.8} parent=0 // pred_check_branch
    %209 = sbr.rel (0) target = $region29
  $region28: #{resnet_forward.8} parent=0 // pred_region
    _
  $region29: #{resnet_forward.8} parent=0 // pred_fallthru
    _

// kernel: resnet_forward.9
$region0: #{resnet_forward.9}
  #allocation0 [shape = 'u32[]', space=smem, size = 0x4, offset = 0x4, fixed_abs, tag = 'smem constant byte address 0x4 - core index']
  #allocation1 [shape = 'u32[72,128]{1,0:T(1,128)}', space=vmem, size = 0x9000, scoped, tag = 'internal scratch']
  %s0 = inlined_call_operand.vmem [shape: f32[1,90,288], index: 0, kind: input, shape index: {}]
  %s1 = inlined_call_operand.vmem [shape: f32[10,90], index: 1, kind: input, shape index: {}]
  %s2 = inlined_call_operand.vmem [shape: f32[10,1], index: 2, kind: input, shape index: {}]
  %s3 = inlined_call_operand.vmem [shape: f32[10,1], index: 3, kind: input, shape index: {}]
  %s4 = inlined_call_operand.vmem [shape: f32[10,1], index: 4, kind: input, shape index: {}]
  %s5 = inlined_call_operand.vmem [shape: f32[10,288], index: 5, kind: input, shape index: {}]
  %s6 = inlined_call_operand.vmem [shape: f32[10,288], index: 6, kind: output, shape index: {}]
  %s7 = sld [smem:[#allocation0]]
  $region34: #{resnet_forward.9} parent=0
    _
  %s9 = ssub.s32 1, %s7
  %s10 = scalar_select 0, %s9, %s7
  // Predicated region
  $region2: #{resnet_forward.9} parent=0 // pred_check
    _
  $region3: #{resnet_forward.9} parent=0 // pred_check_branch
    %12 = sbr.rel (0) target = $region5
  $region4: #{resnet_forward.9} parent=0 // pred_region
    _
  $region5: #{resnet_forward.9} parent=0 // pred_fallthru
    _
  // Predicated region
  $region6: #{resnet_forward.9} parent=0 // pred_check
    _
  $region7: #{resnet_forward.9} parent=0 // pred_check_branch
    %14 = sbr.rel (0) target = $region9
  $region8: #{resnet_forward.9} parent=0 // pred_region
    _
  $region9: #{resnet_forward.9} parent=0 // pred_fallthru
    _
  // Predicated region
  $region10: #{resnet_forward.9} parent=0 // pred_check
    _
  $region11: #{resnet_forward.9} parent=0 // pred_check_branch
    %16 = sbr.rel (0) target = $region13
  $region12: #{resnet_forward.9} parent=0 // pred_region
    _
  $region13: #{resnet_forward.9} parent=0 // pred_fallthru
    _
  // Predicated region
  $region14: #{resnet_forward.9} parent=0 // pred_check
    _
  $region15: #{resnet_forward.9} parent=0 // pred_check_branch
    %18 = sbr.rel (0) target = $region17
  $region16: #{resnet_forward.9} parent=0 // pred_region
    _
  $region17: #{resnet_forward.9} parent=0 // pred_fallthru
    _
  // Predicated region
  $region18: #{resnet_forward.9} parent=0 // pred_check
    _
  $region19: #{resnet_forward.9} parent=0 // pred_check_branch
    %20 = sbr.rel (0) target = $region21
  $region20: #{resnet_forward.9} parent=0 // pred_region
    _
  $region21: #{resnet_forward.9} parent=0 // pred_fallthru
    _
  // Predicated region
  $region22: #{resnet_forward.9} parent=0 // pred_check
    _
  $region23: #{resnet_forward.9} parent=0 // pred_check_branch
    %22 = sbr.rel (0) target = $region25
  $region24: #{resnet_forward.9} parent=0 // pred_region
    _
  $region25: #{resnet_forward.9} parent=0 // pred_fallthru
    _
  %v23 = vld [vmem:[%s1] sm:$0xff]
  %v24 = vld [vmem:[%s1 + $0x8] sm:$0x3]
  %v25 = vld [vmem:[%s0] sm:$0xff]
  %v26 = vld [vmem:[%s0 + $0x8] sm:$0xff]
  %v27 = vld [vmem:[%s0 + $0x10] sm:$0xff]
  %v28 = vld [vmem:[%s0 + $0x18] sm:$0xff]
  %v29 = vld [vmem:[%s0 + $0x20] sm:$0xff]
  %v30 = vld [vmem:[%s0 + $0x28] sm:$0xff]
  %v31 = vld [vmem:[%s0 + $0x30] sm:$0xff]
  %v32 = vld [vmem:[%s0 + $0x38] sm:$0xff]
  %v33 = vld [vmem:[%s0 + $0x40] sm:$0xff]
  %v34 = vld [vmem:[%s0 + $0x48] sm:$0xff]
  %v35 = vld [vmem:[%s0 + $0x50] sm:$0xff]
  %v36 = vld [vmem:[%s0 + $0x58] sm:$0xff]
  %v37 = vld [vmem:[%s0 + $0x60] sm:$0xff]
  %v38 = vld [vmem:[%s0 + $0x68] sm:$0xff]
  %v39 = vld [vmem:[%s0 + $0x70] sm:$0xff]
  %v40 = vld [vmem:[%s0 + $0x78] sm:$0xff]
  %v41 = vld [vmem:[%s0 + $0x80] sm:$0xff]
  %v42 = vld [vmem:[%s0 + $0x88] sm:$0xff]
  %v43 = vld [vmem:[%s0 + $0x90] sm:$0xff]
  %v44 = vld [vmem:[%s0 + $0x98] sm:$0xff]
  %v45 = vld [vmem:[%s0 + $0xa0] sm:$0xff]
  %v46 = vld [vmem:[%s0 + $0xa8] sm:$0xff]
  %v47 = vld [vmem:[%s0 + $0xb0] sm:$0xff]
  %v48 = vld [vmem:[%s0 + $0xb8] sm:$0xff]
  %v49 = vld [vmem:[%s0 + $0xc0] sm:$0xff]
  %v50 = vld [vmem:[%s0 + $0xc8] sm:$0xff]
  %v51 = vld [vmem:[%s0 + $0xd0] sm:$0xff]
  %v52 = vld [vmem:[%s0 + $0xd8] sm:$0xff]
  %v53 = vld [vmem:[%s0 + $0xe0] sm:$0xff]
  %v54 = vld [vmem:[%s0 + $0xe8] sm:$0xff]
  %v55 = vld [vmem:[%s0 + $0xf0] sm:$0xff]
  %v56 = vld [vmem:[%s0 + $0xf8] sm:$0xff]
  %v57 = vld [vmem:[%s0 + $0x100] sm:$0xff]
  %v58 = vld [vmem:[%s0 + $0x108] sm:$0x3]
  %v59 = vld [vmem:[%s0 + $0x110] sm:$0x3]
  %v60 = vld [vmem:[%s0 + $0x118] sm:$0x3]
  %v61 = vld [vmem:[%s2] sm:$0xff]
  %v62 = vld [vmem:[%s2 + $0x8] sm:$0x3]
  %64 = vset.pattern.permute.xlu0 0
  %65 = vperm.xlu0 %64, %v61
  %v66 = vpop.permute.xlu0 %65
  %69 = vset.pattern.permute.xlu0 0
  %70 = vperm.xlu0 %69, %v62
  %v71 = vpop.permute.xlu0 %70
  %vm73 = vcmask 736256
  %v75 = vsel %vm73, %v23, 0
  %v78 = vsel %vm73, %v24, 0
  %vm80 = vcmask 1041408
  %v82 = vsel %vm80, %v58, 0
  %v85 = vsel %vm80, %v59, 0
  %v88 = vsel %vm80, %v60, 0
  %90 = vmatpush.msra.mxu0 0.0
  %91 = vmatpush.msra.mxu0 0.0
  %92 = vmatpush.msra.mxu0 0.0
  %93 = vmatpush.msra.mxu0 0.0
  %94 = vmatpush.msra.mxu0 %v82
  %95 = vmatpush.msra.mxu0 %v55
  %96 = vmatpush.msra.mxu0 %v52
  %97 = vmatpush.msra.mxu0 %v49
  %98 = vmatpush.msra.mxu0 %v46
  %99 = vmatpush.msra.mxu0 %v43
  %100 = vmatpush.msra.mxu0 %v40
  %101 = vmatpush.msra.mxu0 %v37
  %102 = vmatpush.msra.mxu0 %v34
  %103 = vmatpush.msra.mxu0 %v31
  %104 = vmatpush.msra.mxu0 %v28
  %105 = vmatpush.msra.mxu0 %v25
  %106 = vmatmul.f32.gmra.mxu0 %v75
  %v107 = vpop.f32.mrf.mxu0
  %v108 = vadd.f32 %v66, %v107
  %109 = vmatmul.f32.gmra.mxu0 %v78
  %v110 = vpop.f32.mrf.mxu0
  %v111 = vadd.f32 %v71, %v110
  %112 = vdwg.mxu0
  %113 = vmatpush.msra.mxu0 0.0
  %114 = vmatpush.msra.mxu0 0.0
  %115 = vmatpush.msra.mxu0 0.0
  %116 = vmatpush.msra.mxu0 0.0
  %117 = vmatpush.msra.mxu0 %v85
  %118 = vmatpush.msra.mxu0 %v56
  %119 = vmatpush.msra.mxu0 %v53
  %120 = vmatpush.msra.mxu0 %v50
  %121 = vmatpush.msra.mxu0 %v47
  %122 = vmatpush.msra.mxu0 %v44
  %123 = vmatpush.msra.mxu0 %v41
  %124 = vmatpush.msra.mxu0 %v38
  %125 = vmatpush.msra.mxu0 %v35
  %126 = vmatpush.msra.mxu0 %v32
  %127 = vmatpush.msra.mxu0 %v29
  %128 = vmatpush.msra.mxu0 %v26
  %129 = vmatmul.f32.gmra.mxu0 %v75
  %v130 = vpop.f32.mrf.mxu0
  %v131 = vadd.f32 %v66, %v130
  %132 = vmatmul.f32.gmra.mxu0 %v78
  %v133 = vpop.f32.mrf.mxu0
  %v134 = vadd.f32 %v71, %v133
  %135 = vdwg.mxu0
  %136 = vmatpush.msra.mxu0 0.0
  %137 = vmatpush.msra.mxu0 0.0
  %138 = vmatpush.msra.mxu0 0.0
  %139 = vmatpush.msra.mxu0 0.0
  %140 = vmatpush.msra.mxu0 %v88
  %141 = vmatpush.msra.mxu0 %v57
  %142 = vmatpush.msra.mxu0 %v54
  %143 = vmatpush.msra.mxu0 %v51
  %144 = vmatpush.msra.mxu0 %v48
  %145 = vmatpush.msra.mxu0 %v45
  %146 = vmatpush.msra.mxu0 %v42
  %147 = vmatpush.msra.mxu0 %v39
  %148 = vmatpush.msra.mxu0 %v36
  %149 = vmatpush.msra.mxu0 %v33
  %150 = vmatpush.msra.mxu0 %v30
  %151 = vmatpush.msra.mxu0 %v27
  %152 = vmatmul.f32.gmra.mxu0 %v75
  %v153 = vpop.f32.mrf.mxu0
  %v154 = vadd.f32 %v66, %v153
  %155 = vmatmul.f32.gmra.mxu0 %v78
  %v156 = vpop.f32.mrf.mxu0
  %v157 = vadd.f32 %v71, %v156
  %158 = vdwg.mxu0
  %v159 = vmax.f32 %v108, 0.0
  %v160 = vmax.f32 %v131, 0.0
  %v161 = vmax.f32 %v154, 0.0
  %v162 = vmax.f32 %v111, 0.0
  %v163 = vmax.f32 %v134, 0.0
  %v164 = vmax.f32 %v157, 0.0
  %v165 = vld [vmem:[%s3] sm:$0xff]
  %v166 = vld [vmem:[%s3 + $0x8] sm:$0x3]
  %168 = vset.pattern.permute.xlu0 0
  %169 = vperm.xlu0 %168, %v165
  %v170 = vpop.permute.xlu0 %169
  %173 = vset.pattern.permute.xlu0 0
  %174 = vperm.xlu0 %173, %v166
  %v175 = vpop.permute.xlu0 %174
  %v177 = vmul.f32 %v159, %v170
  %v178 = vmul.f32 %v160, %v170
  %v179 = vmul.f32 %v161, %v170
  %v180 = vmul.f32 %v162, %v175
  %v181 = vmul.f32 %v163, %v175
  %v182 = vmul.f32 %v164, %v175
  %v183 = vld [vmem:[%s4] sm:$0xff]
  %v184 = vld [vmem:[%s4 + $0x8] sm:$0x3]
  %186 = vset.pattern.permute.xlu0 0
  %187 = vperm.xlu0 %186, %v183
  %v188 = vpop.permute.xlu0 %187
  %191 = vset.pattern.permute.xlu0 0
  %192 = vperm.xlu0 %191, %v184
  %v193 = vpop.permute.xlu0 %192
  %v195 = vadd.f32 %v177, %v188
  %v196 = vadd.f32 %v178, %v188
  %v197 = vadd.f32 %v179, %v188
  %v198 = vadd.f32 %v180, %v193
  %v199 = vadd.f32 %v181, %v193
  %v200 = vadd.f32 %v182, %v193
  %v201 = vld [vmem:[%s5] sm:$0xff]
  %v202 = vld [vmem:[%s5 + $0x8] sm:$0xff]
  %v203 = vld [vmem:[%s5 + $0x10] sm:$0xff]
  %v204 = vld [vmem:[%s5 + $0x18] sm:$0x3]
  %v205 = vld [vmem:[%s5 + $0x20] sm:$0x3]
  %v206 = vld [vmem:[%s5 + $0x28] sm:$0x3]
  %v207 = vadd.f32 %v195, %v201
  %v208 = vadd.f32 %v196, %v202
  %v209 = vadd.f32 %v197, %v203
  %v210 = vadd.f32 %v198, %v204
  %v211 = vadd.f32 %v199, %v205
  %v212 = vadd.f32 %v200, %v206
  %213 = vst [vmem:[%s6] sm:$0xff] %v207
  %214 = vst [vmem:[%s6 + $0x8] sm:$0xff] %v208
  %vm215 = vcmask 261120
  %216 = vst.msk [vmem:[%s6 + $0x10] sm:$0xff] %vm215, %v209
  %217 = vst [vmem:[%s6 + $0x18] sm:$0x3] %v210
  %218 = vst [vmem:[%s6 + $0x20] sm:$0x3] %v211
  %vm219 = vcmask 254976
  %220 = vst.msk [vmem:[%s6 + $0x28] sm:$0x3] %vm219, %v212
  // Predicated region
  $region26: #{resnet_forward.9} parent=0 // pred_check
    _
  $region27: #{resnet_forward.9} parent=0 // pred_check_branch
    %222 = sbr.rel (0) target = $region29
  $region28: #{resnet_forward.9} parent=0 // pred_region
    _
  $region29: #{resnet_forward.9} parent=0 // pred_fallthru
    _
  // Predicated region
  $region30: #{resnet_forward.9} parent=0 // pred_check
    _
  $region31: #{resnet_forward.9} parent=0 // pred_check_branch
    %224 = sbr.rel (0) target = $region33
  $region32: #{resnet_forward.9} parent=0 // pred_region
    _
  $region33: #{resnet_forward.9} parent=0 // pred_fallthru
    _

// kernel: resnet_forward.10
$region0: #{resnet_forward.10}
  #allocation0 [shape = 'u32[]', space=smem, size = 0x4, offset = 0x4, fixed_abs, tag = 'smem constant byte address 0x4 - core index']
  #allocation1 [shape = 'u32[72,128]{1,0:T(1,128)}', space=vmem, size = 0x9000, scoped, tag = 'internal scratch']
  %s0 = inlined_call_operand.vmem [shape: f32[4,250,32], index: 0, kind: input, shape index: {}]
  %s1 = inlined_call_operand.vmem [shape: f32[20,250], index: 1, kind: input, shape index: {}]
  %s2 = inlined_call_operand.vmem [shape: f32[20,1], index: 2, kind: input, shape index: {}]
  %s3 = inlined_call_operand.vmem [shape: f32[20,1], index: 3, kind: input, shape index: {}]
  %s4 = inlined_call_operand.vmem [shape: f32[20,1], index: 4, kind: input, shape index: {}]
  %s5 = inlined_call_operand.vmem [shape: f32[20,32], index: 5, kind: output, shape index: {}]
  %s6 = sld [smem:[#allocation0]]
  $region30: #{resnet_forward.10} parent=0
    _
  %s8 = ssub.s32 1, %s6
  %s9 = scalar_select 0, %s8, %s6
  // Predicated region
  $region2: #{resnet_forward.10} parent=0 // pred_check
    _
  $region3: #{resnet_forward.10} parent=0 // pred_check_branch
    %11 = sbr.rel (0) target = $region5
  $region4: #{resnet_forward.10} parent=0 // pred_region
    _
  $region5: #{resnet_forward.10} parent=0 // pred_fallthru
    _
  // Predicated region
  $region6: #{resnet_forward.10} parent=0 // pred_check
    _
  $region7: #{resnet_forward.10} parent=0 // pred_check_branch
    %13 = sbr.rel (0) target = $region9
  $region8: #{resnet_forward.10} parent=0 // pred_region
    _
  $region9: #{resnet_forward.10} parent=0 // pred_fallthru
    _
  // Predicated region
  $region10: #{resnet_forward.10} parent=0 // pred_check
    _
  $region11: #{resnet_forward.10} parent=0 // pred_check_branch
    %15 = sbr.rel (0) target = $region13
  $region12: #{resnet_forward.10} parent=0 // pred_region
    _
  $region13: #{resnet_forward.10} parent=0 // pred_fallthru
    _
  // Predicated region
  $region14: #{resnet_forward.10} parent=0 // pred_check
    _
  $region15: #{resnet_forward.10} parent=0 // pred_check_branch
    %17 = sbr.rel (0) target = $region17
  $region16: #{resnet_forward.10} parent=0 // pred_region
    _
  $region17: #{resnet_forward.10} parent=0 // pred_fallthru
    _
  // Predicated region
  $region18: #{resnet_forward.10} parent=0 // pred_check
    _
  $region19: #{resnet_forward.10} parent=0 // pred_check_branch
    %19 = sbr.rel (0) target = $region21
  $region20: #{resnet_forward.10} parent=0 // pred_region
    _
  $region21: #{resnet_forward.10} parent=0 // pred_fallthru
    _
  %v20 = vld [vmem:[%s1] sm:$0xff]
  %v21 = vld [vmem:[%s1 + $0x8] sm:$0xff]
  %v22 = vld [vmem:[%s1 + $0x10] sm:$0xff]
  %v23 = vld [vmem:[%s1 + $0x18] sm:$0xff]
  %v24 = vld [vmem:[%s1 + $0x20] sm:$0xf]
  %v25 = vld [vmem:[%s1 + $0x28] sm:$0xf]
  %v26 = vld [vmem:[%s0] sm:$0xff]
  %v27 = vld [vmem:[%s0 + $0x8] sm:$0xff]
  %v28 = vld [vmem:[%s0 + $0x10] sm:$0xff]
  %v29 = vld [vmem:[%s0 + $0x18] sm:$0xff]
  %v30 = vld [vmem:[%s0 + $0x20] sm:$0xff]
  %v31 = vld [vmem:[%s0 + $0x28] sm:$0xff]
  %v32 = vld [vmem:[%s0 + $0x30] sm:$0xff]
  %v33 = vld [vmem:[%s0 + $0x38] sm:$0xff]
  %v34 = vld [vmem:[%s0 + $0x40] sm:$0xff]
  %v35 = vld [vmem:[%s0 + $0x48] sm:$0xff]
  %v36 = vld [vmem:[%s0 + $0x50] sm:$0xff]
  %v37 = vld [vmem:[%s0 + $0x58] sm:$0xff]
  %v38 = vld [vmem:[%s0 + $0x60] sm:$0xff]
  %v39 = vld [vmem:[%s0 + $0x68] sm:$0xff]
  %v40 = vld [vmem:[%s0 + $0x70] sm:$0xff]
  %v41 = vld [vmem:[%s0 + $0x78] sm:$0xff]
  %v42 = vld [vmem:[%s0 + $0x80] sm:$0xff]
  %v43 = vld [vmem:[%s0 + $0x88] sm:$0xff]
  %v44 = vld [vmem:[%s0 + $0x90] sm:$0xff]
  %v45 = vld [vmem:[%s0 + $0x98] sm:$0xff]
  %v46 = vld [vmem:[%s0 + $0xa0] sm:$0xff]
  %v47 = vld [vmem:[%s0 + $0xa8] sm:$0xff]
  %v48 = vld [vmem:[%s0 + $0xb0] sm:$0xff]
  %v49 = vld [vmem:[%s0 + $0xb8] sm:$0xff]
  %v50 = vld [vmem:[%s0 + $0xc0] sm:$0xff]
  %v51 = vld [vmem:[%s0 + $0xc8] sm:$0xff]
  %v52 = vld [vmem:[%s0 + $0xd0] sm:$0xff]
  %v53 = vld [vmem:[%s0 + $0xd8] sm:$0xff]
  %v54 = vld [vmem:[%s0 + $0xe0] sm:$0xff]
  %v55 = vld [vmem:[%s0 + $0xe8] sm:$0xff]
  %v56 = vld [vmem:[%s0 + $0xf0] sm:$0xff]
  %v57 = vld [vmem:[%s0 + $0xf8] sm:$0x3]
  %v58 = vld [vmem:[%s2] sm:$0xff]
  %v59 = vld [vmem:[%s2 + $0x8] sm:$0xff]
  %v60 = vld [vmem:[%s2 + $0x10] sm:$0xf]
  %62 = vset.pattern.permute.xlu0 0
  %63 = vperm.xlu0 %62, %v58
  %v64 = vpop.permute.xlu0 %63
  %67 = vset.pattern.permute.xlu0 0
  %68 = vperm.xlu0 %67, %v59
  %v69 = vpop.permute.xlu0 %68
  %72 = vset.pattern.permute.xlu0 0
  %73 = vperm.xlu0 %72, %v60
  %v74 = vpop.permute.xlu0 %73
  %vm76 = vcmask 998400
  %v78 = vsel %vm76, %v21, 0
  %v81 = vsel %vm76, %v23, 0
  %v84 = vsel %vm76, %v25, 0
  %vm86 = vcmask 1041408
  %v88 = vsel %vm86, %v57, 0
  %90 = vmatpush.msra.mxu0 %v41
  %91 = vmatpush.msra.mxu0 %v40
  %92 = vmatpush.msra.mxu0 %v39
  %93 = vmatpush.msra.mxu0 %v38
  %94 = vmatpush.msra.mxu0 %v37
  %95 = vmatpush.msra.mxu0 %v36
  %96 = vmatpush.msra.mxu0 %v35
  %97 = vmatpush.msra.mxu0 %v34
  %98 = vmatpush.msra.mxu0 %v33
  %99 = vmatpush.msra.mxu0 %v32
  %100 = vmatpush.msra.mxu0 %v31
  %101 = vmatpush.msra.mxu0 %v30
  %102 = vmatpush.msra.mxu0 %v29
  %103 = vmatpush.msra.mxu0 %v28
  %104 = vmatpush.msra.mxu0 %v27
  %105 = vmatpush.msra.mxu0 %v26
  %106 = vmatmul.f32.gmra.mxu0 %v20
  %v107 = vpop.f32.mrf.mxu0
  %v108 = vadd.f32 %v64, %v107
  %109 = vmatmul.f32.gmra.mxu0 %v22
  %v110 = vpop.f32.mrf.mxu0
  %v111 = vadd.f32 %v69, %v110
  %112 = vmatmul.f32.gmra.mxu0 %v24
  %v113 = vpop.f32.mrf.mxu0
  %v114 = vadd.f32 %v74, %v113
  %115 = vdwg.mxu0
  %116 = vmatpush.msra.mxu0 %v88
  %117 = vmatpush.msra.mxu0 %v56
  %118 = vmatpush.msra.mxu0 %v55
  %119 = vmatpush.msra.mxu0 %v54
  %120 = vmatpush.msra.mxu0 %v53
  %121 = vmatpush.msra.mxu0 %v52
  %122 = vmatpush.msra.mxu0 %v51
  %123 = vmatpush.msra.mxu0 %v50
  %124 = vmatpush.msra.mxu0 %v49
  %125 = vmatpush.msra.mxu0 %v48
  %126 = vmatpush.msra.mxu0 %v47
  %127 = vmatpush.msra.mxu0 %v46
  %128 = vmatpush.msra.mxu0 %v45
  %129 = vmatpush.msra.mxu0 %v44
  %130 = vmatpush.msra.mxu0 %v43
  %131 = vmatpush.msra.mxu0 %v42
  %132 = vmatmul.f32.gmra.mxu0 %v78
  %v133 = vpop.f32.mrf.mxu0
  %v134 = vadd.f32 %v108, %v133
  %135 = vmatmul.f32.gmra.mxu0 %v81
  %v136 = vpop.f32.mrf.mxu0
  %v137 = vadd.f32 %v111, %v136
  %138 = vmatmul.f32.gmra.mxu0 %v84
  %v139 = vpop.f32.mrf.mxu0
  %v140 = vadd.f32 %v114, %v139
  %141 = vdwg.mxu0
  %v142 = vmax.f32 %v134, 0.0
  %v143 = vmax.f32 %v137, 0.0
  %v144 = vmax.f32 %v140, 0.0
  %v145 = vld [vmem:[%s3] sm:$0xff]
  %v146 = vld [vmem:[%s3 + $0x8] sm:$0xff]
  %v147 = vld [vmem:[%s3 + $0x10] sm:$0xf]
  %149 = vset.pattern.permute.xlu0 0
  %150 = vperm.xlu0 %149, %v145
  %v151 = vpop.permute.xlu0 %150
  %154 = vset.pattern.permute.xlu0 0
  %155 = vperm.xlu0 %154, %v146
  %v156 = vpop.permute.xlu0 %155
  %159 = vset.pattern.permute.xlu0 0
  %160 = vperm.xlu0 %159, %v147
  %v161 = vpop.permute.xlu0 %160
  %v163 = vmul.f32 %v142, %v151
  %v164 = vmul.f32 %v143, %v156
  %v165 = vmul.f32 %v144, %v161
  %v166 = vld [vmem:[%s4] sm:$0xff]
  %v167 = vld [vmem:[%s4 + $0x8] sm:$0xff]
  %v168 = vld [vmem:[%s4 + $0x10] sm:$0xf]
  %170 = vset.pattern.permute.xlu0 0
  %171 = vperm.xlu0 %170, %v166
  %v172 = vpop.permute.xlu0 %171
  %175 = vset.pattern.permute.xlu0 0
  %176 = vperm.xlu0 %175, %v167
  %v177 = vpop.permute.xlu0 %176
  %180 = vset.pattern.permute.xlu0 0
  %181 = vperm.xlu0 %180, %v168
  %v182 = vpop.permute.xlu0 %181
  %v184 = vadd.f32 %v163, %v172
  %v185 = vadd.f32 %v164, %v177
  %v186 = vadd.f32 %v165, %v182
  %s187 = scalar_lea.vmem %s0, 256
  %v188 = vld [vmem:[%s187] sm:$0xff]
  %v189 = vld [vmem:[%s187 + $0x8] sm:$0xff]
  %v190 = vld [vmem:[%s187 + $0x10] sm:$0xff]
  %v191 = vld [vmem:[%s187 + $0x18] sm:$0xff]
  %v192 = vld [vmem:[%s187 + $0x20] sm:$0xff]
  %v193 = vld [vmem:[%s187 + $0x28] sm:$0xff]
  %v194 = vld [vmem:[%s187 + $0x30] sm:$0xff]
  %v195 = vld [vmem:[%s187 + $0x38] sm:$0xff]
  %v196 = vld [vmem:[%s187 + $0x40] sm:$0xff]
  %v197 = vld [vmem:[%s187 + $0x48] sm:$0xff]
  %v198 = vld [vmem:[%s187 + $0x50] sm:$0xff]
  %v199 = vld [vmem:[%s187 + $0x58] sm:$0xff]
  %v200 = vld [vmem:[%s187 + $0x60] sm:$0xff]
  %v201 = vld [vmem:[%s187 + $0x68] sm:$0xff]
  %v202 = vld [vmem:[%s187 + $0x70] sm:$0xff]
  %v203 = vld [vmem:[%s187 + $0x78] sm:$0xff]
  %v204 = vld [vmem:[%s187 + $0x80] sm:$0xff]
  %v205 = vld [vmem:[%s187 + $0x88] sm:$0xff]
  %v206 = vld [vmem:[%s187 + $0x90] sm:$0xff]
  %v207 = vld [vmem:[%s187 + $0x98] sm:$0xff]
  %v208 = vld [vmem:[%s187 + $0xa0] sm:$0xff]
  %v209 = vld [vmem:[%s187 + $0xa8] sm:$0xff]
  %v210 = vld [vmem:[%s187 + $0xb0] sm:$0xff]
  %v211 = vld [vmem:[%s187 + $0xb8] sm:$0xff]
  %v212 = vld [vmem:[%s187 + $0xc0] sm:$0xff]
  %v213 = vld [vmem:[%s187 + $0xc8] sm:$0xff]
  %v214 = vld [vmem:[%s187 + $0xd0] sm:$0xff]
  %v215 = vld [vmem:[%s187 + $0xd8] sm:$0xff]
  %v216 = vld [vmem:[%s187 + $0xe0] sm:$0xff]
  %v217 = vld [vmem:[%s187 + $0xe8] sm:$0xff]
  %v218 = vld [vmem:[%s187 + $0xf0] sm:$0xff]
  %v219 = vld [vmem:[%s187 + $0xf8] sm:$0x3]
  %v221 = vsel %vm86, %v219, 0
  %223 = vmatpush.msra.mxu0 %v203
  %224 = vmatpush.msra.mxu0 %v202
  %225 = vmatpush.msra.mxu0 %v201
  %226 = vmatpush.msra.mxu0 %v200
  %227 = vmatpush.msra.mxu0 %v199
  %228 = vmatpush.msra.mxu0 %v198
  %229 = vmatpush.msra.mxu0 %v197
  %230 = vmatpush.msra.mxu0 %v196
  %231 = vmatpush.msra.mxu0 %v195
  %232 = vmatpush.msra.mxu0 %v194
  %233 = vmatpush.msra.mxu0 %v193
  %234 = vmatpush.msra.mxu0 %v192
  %235 = vmatpush.msra.mxu0 %v191
  %236 = vmatpush.msra.mxu0 %v190
  %237 = vmatpush.msra.mxu0 %v189
  %238 = vmatpush.msra.mxu0 %v188
  %239 = vmatmul.f32.gmra.mxu0 %v20
  %v240 = vpop.f32.mrf.mxu0
  %v241 = vadd.f32 %v64, %v240
  %242 = vmatmul.f32.gmra.mxu0 %v22
  %v243 = vpop.f32.mrf.mxu0
  %v244 = vadd.f32 %v69, %v243
  %245 = vmatmul.f32.gmra.mxu0 %v24
  %v246 = vpop.f32.mrf.mxu0
  %v247 = vadd.f32 %v74, %v246
  %248 = vdwg.mxu0
  %249 = vmatpush.msra.mxu0 %v221
  %250 = vmatpush.msra.mxu0 %v218
  %251 = vmatpush.msra.mxu0 %v217
  %252 = vmatpush.msra.mxu0 %v216
  %253 = vmatpush.msra.mxu0 %v215
  %254 = vmatpush.msra.mxu0 %v214
  %255 = vmatpush.msra.mxu0 %v213
  %256 = vmatpush.msra.mxu0 %v212
  %257 = vmatpush.msra.mxu0 %v211
  %258 = vmatpush.msra.mxu0 %v210
  %259 = vmatpush.msra.mxu0 %v209
  %260 = vmatpush.msra.mxu0 %v208
  %261 = vmatpush.msra.mxu0 %v207
  %262 = vmatpush.msra.mxu0 %v206
  %263 = vmatpush.msra.mxu0 %v205
  %264 = vmatpush.msra.mxu0 %v204
  %265 = vmatmul.f32.gmra.mxu0 %v78
  %v266 = vpop.f32.mrf.mxu0
  %v267 = vadd.f32 %v241, %v266
  %268 = vmatmul.f32.gmra.mxu0 %v81
  %v269 = vpop.f32.mrf.mxu0
  %v270 = vadd.f32 %v244, %v269
  %271 = vmatmul.f32.gmra.mxu0 %v84
  %v272 = vpop.f32.mrf.mxu0
  %v273 = vadd.f32 %v247, %v272
  %274 = vdwg.mxu0
  %v275 = vmax.f32 %v267, 0.0
  %v276 = vmax.f32 %v270, 0.0
  %v277 = vmax.f32 %v273, 0.0
  %v278 = vmul.f32 %v275, %v151
  %v279 = vmul.f32 %v276, %v156
  %v280 = vmul.f32 %v277, %v161
  %v281 = vadd.f32 %v278, %v172
  %v282 = vadd.f32 %v279, %v177
  %v283 = vadd.f32 %v280, %v182
  %v284 = vmax.f32 %v184, %v281
  %v285 = vmax.f32 %v185, %v282
  %v286 = vmax.f32 %v186, %v283
  %s287 = scalar_lea.vmem %s0, 512
  %v288 = vld [vmem:[%s287] sm:$0xff]
  %v289 = vld [vmem:[%s287 + $0x8] sm:$0xff]
  %v290 = vld [vmem:[%s287 + $0x10] sm:$0xff]
  %v291 = vld [vmem:[%s287 + $0x18] sm:$0xff]
  %v292 = vld [vmem:[%s287 + $0x20] sm:$0xff]
  %v293 = vld [vmem:[%s287 + $0x28] sm:$0xff]
  %v294 = vld [vmem:[%s287 + $0x30] sm:$0xff]
  %v295 = vld [vmem:[%s287 + $0x38] sm:$0xff]
  %v296 = vld [vmem:[%s287 + $0x40] sm:$0xff]
  %v297 = vld [vmem:[%s287 + $0x48] sm:$0xff]
  %v298 = vld [vmem:[%s287 + $0x50] sm:$0xff]
  %v299 = vld [vmem:[%s287 + $0x58] sm:$0xff]
  %v300 = vld [vmem:[%s287 + $0x60] sm:$0xff]
  %v301 = vld [vmem:[%s287 + $0x68] sm:$0xff]
  %v302 = vld [vmem:[%s287 + $0x70] sm:$0xff]
  %v303 = vld [vmem:[%s287 + $0x78] sm:$0xff]
  %v304 = vld [vmem:[%s287 + $0x80] sm:$0xff]
  %v305 = vld [vmem:[%s287 + $0x88] sm:$0xff]
  %v306 = vld [vmem:[%s287 + $0x90] sm:$0xff]
  %v307 = vld [vmem:[%s287 + $0x98] sm:$0xff]
  %v308 = vld [vmem:[%s287 + $0xa0] sm:$0xff]
  %v309 = vld [vmem:[%s287 + $0xa8] sm:$0xff]
  %v310 = vld [vmem:[%s287 + $0xb0] sm:$0xff]
  %v311 = vld [vmem:[%s287 + $0xb8] sm:$0xff]
  %v312 = vld [vmem:[%s287 + $0xc0] sm:$0xff]
  %v313 = vld [vmem:[%s287 + $0xc8] sm:$0xff]
  %v314 = vld [vmem:[%s287 + $0xd0] sm:$0xff]
  %v315 = vld [vmem:[%s287 + $0xd8] sm:$0xff]
  %v316 = vld [vmem:[%s287 + $0xe0] sm:$0xff]
  %v317 = vld [vmem:[%s287 + $0xe8] sm:$0xff]
  %v318 = vld [vmem:[%s287 + $0xf0] sm:$0xff]
  %v319 = vld [vmem:[%s287 + $0xf8] sm:$0x3]
  %v321 = vsel %vm86, %v319, 0
  %323 = vmatpush.msra.mxu0 %v303
  %324 = vmatpush.msra.mxu0 %v302
  %325 = vmatpush.msra.mxu0 %v301
  %326 = vmatpush.msra.mxu0 %v300
  %327 = vmatpush.msra.mxu0 %v299
  %328 = vmatpush.msra.mxu0 %v298
  %329 = vmatpush.msra.mxu0 %v297
  %330 = vmatpush.msra.mxu0 %v296
  %331 = vmatpush.msra.mxu0 %v295
  %332 = vmatpush.msra.mxu0 %v294
  %333 = vmatpush.msra.mxu0 %v293
  %334 = vmatpush.msra.mxu0 %v292
  %335 = vmatpush.msra.mxu0 %v291
  %336 = vmatpush.msra.mxu0 %v290
  %337 = vmatpush.msra.mxu0 %v289
  %338 = vmatpush.msra.mxu0 %v288
  %339 = vmatmul.f32.gmra.mxu0 %v20
  %v340 = vpop.f32.mrf.mxu0
  %v341 = vadd.f32 %v64, %v340
  %342 = vmatmul.f32.gmra.mxu0 %v22
  %v343 = vpop.f32.mrf.mxu0
  %v344 = vadd.f32 %v69, %v343
  %345 = vmatmul.f32.gmra.mxu0 %v24
  %v346 = vpop.f32.mrf.mxu0
  %v347 = vadd.f32 %v74, %v346
  %348 = vdwg.mxu0
  %349 = vmatpush.msra.mxu0 %v321
  %350 = vmatpush.msra.mxu0 %v318
  %351 = vmatpush.msra.mxu0 %v317
  %352 = vmatpush.msra.mxu0 %v316
  %353 = vmatpush.msra.mxu0 %v315
  %354 = vmatpush.msra.mxu0 %v314
  %355 = vmatpush.msra.mxu0 %v313
  %356 = vmatpush.msra.mxu0 %v312
  %357 = vmatpush.msra.mxu0 %v311
  %358 = vmatpush.msra.mxu0 %v310
  %359 = vmatpush.msra.mxu0 %v309
  %360 = vmatpush.msra.mxu0 %v308
  %361 = vmatpush.msra.mxu0 %v307
  %362 = vmatpush.msra.mxu0 %v306
  %363 = vmatpush.msra.mxu0 %v305
  %364 = vmatpush.msra.mxu0 %v304
  %365 = vmatmul.f32.gmra.mxu0 %v78
  %v366 = vpop.f32.mrf.mxu0
  %v367 = vadd.f32 %v341, %v366
  %368 = vmatmul.f32.gmra.mxu0 %v81
  %v369 = vpop.f32.mrf.mxu0
  %v370 = vadd.f32 %v344, %v369
  %371 = vmatmul.f32.gmra.mxu0 %v84
  %v372 = vpop.f32.mrf.mxu0
  %v373 = vadd.f32 %v347, %v372
  %374 = vdwg.mxu0
  %v375 = vmax.f32 %v367, 0.0
  %v376 = vmax.f32 %v370, 0.0
  %v377 = vmax.f32 %v373, 0.0
  %v378 = vmul.f32 %v375, %v151
  %v379 = vmul.f32 %v376, %v156
  %v380 = vmul.f32 %v377, %v161
  %v381 = vadd.f32 %v378, %v172
  %v382 = vadd.f32 %v379, %v177
  %v383 = vadd.f32 %v380, %v182
  %v384 = vmax.f32 %v284, %v381
  %v385 = vmax.f32 %v285, %v382
  %v386 = vmax.f32 %v286, %v383
  %s387 = scalar_lea.vmem %s0, 768
  %v388 = vld [vmem:[%s387] sm:$0xff]
  %v389 = vld [vmem:[%s387 + $0x8] sm:$0xff]
  %v390 = vld [vmem:[%s387 + $0x10] sm:$0xff]
  %v391 = vld [vmem:[%s387 + $0x18] sm:$0xff]
  %v392 = vld [vmem:[%s387 + $0x20] sm:$0xff]
  %v393 = vld [vmem:[%s387 + $0x28] sm:$0xff]
  %v394 = vld [vmem:[%s387 + $0x30] sm:$0xff]
  %v395 = vld [vmem:[%s387 + $0x38] sm:$0xff]
  %v396 = vld [vmem:[%s387 + $0x40] sm:$0xff]
  %v397 = vld [vmem:[%s387 + $0x48] sm:$0xff]
  %v398 = vld [vmem:[%s387 + $0x50] sm:$0xff]
  %v399 = vld [vmem:[%s387 + $0x58] sm:$0xff]
  %v400 = vld [vmem:[%s387 + $0x60] sm:$0xff]
  %v401 = vld [vmem:[%s387 + $0x68] sm:$0xff]
  %v402 = vld [vmem:[%s387 + $0x70] sm:$0xff]
  %v403 = vld [vmem:[%s387 + $0x78] sm:$0xff]
  %v404 = vld [vmem:[%s387 + $0x80] sm:$0xff]
  %v405 = vld [vmem:[%s387 + $0x88] sm:$0xff]
  %v406 = vld [vmem:[%s387 + $0x90] sm:$0xff]
  %v407 = vld [vmem:[%s387 + $0x98] sm:$0xff]
  %v408 = vld [vmem:[%s387 + $0xa0] sm:$0xff]
  %v409 = vld [vmem:[%s387 + $0xa8] sm:$0xff]
  %v410 = vld [vmem:[%s387 + $0xb0] sm:$0xff]
  %v411 = vld [vmem:[%s387 + $0xb8] sm:$0xff]
  %v412 = vld [vmem:[%s387 + $0xc0] sm:$0xff]
  %v413 = vld [vmem:[%s387 + $0xc8] sm:$0xff]
  %v414 = vld [vmem:[%s387 + $0xd0] sm:$0xff]
  %v415 = vld [vmem:[%s387 + $0xd8] sm:$0xff]
  %v416 = vld [vmem:[%s387 + $0xe0] sm:$0xff]
  %v417 = vld [vmem:[%s387 + $0xe8] sm:$0xff]
  %v418 = vld [vmem:[%s387 + $0xf0] sm:$0xff]
  %v419 = vld [vmem:[%s387 + $0xf8] sm:$0x3]
  %v421 = vsel %vm86, %v419, 0
  %423 = vmatpush.msra.mxu0 %v403
  %424 = vmatpush.msra.mxu0 %v402
  %425 = vmatpush.msra.mxu0 %v401
  %426 = vmatpush.msra.mxu0 %v400
  %427 = vmatpush.msra.mxu0 %v399
  %428 = vmatpush.msra.mxu0 %v398
  %429 = vmatpush.msra.mxu0 %v397
  %430 = vmatpush.msra.mxu0 %v396
  %431 = vmatpush.msra.mxu0 %v395
  %432 = vmatpush.msra.mxu0 %v394
  %433 = vmatpush.msra.mxu0 %v393
  %434 = vmatpush.msra.mxu0 %v392
  %435 = vmatpush.msra.mxu0 %v391
  %436 = vmatpush.msra.mxu0 %v390
  %437 = vmatpush.msra.mxu0 %v389
  %438 = vmatpush.msra.mxu0 %v388
  %439 = vmatmul.f32.gmra.mxu0 %v20
  %v440 = vpop.f32.mrf.mxu0
  %v441 = vadd.f32 %v64, %v440
  %442 = vmatmul.f32.gmra.mxu0 %v22
  %v443 = vpop.f32.mrf.mxu0
  %v444 = vadd.f32 %v69, %v443
  %445 = vmatmul.f32.gmra.mxu0 %v24
  %v446 = vpop.f32.mrf.mxu0
  %v447 = vadd.f32 %v74, %v446
  %448 = vdwg.mxu0
  %449 = vmatpush.msra.mxu0 %v421
  %450 = vmatpush.msra.mxu0 %v418
  %451 = vmatpush.msra.mxu0 %v417
  %452 = vmatpush.msra.mxu0 %v416
  %453 = vmatpush.msra.mxu0 %v415
  %454 = vmatpush.msra.mxu0 %v414
  %455 = vmatpush.msra.mxu0 %v413
  %456 = vmatpush.msra.mxu0 %v412
  %457 = vmatpush.msra.mxu0 %v411
  %458 = vmatpush.msra.mxu0 %v410
  %459 = vmatpush.msra.mxu0 %v409
  %460 = vmatpush.msra.mxu0 %v408
  %461 = vmatpush.msra.mxu0 %v407
  %462 = vmatpush.msra.mxu0 %v406
  %463 = vmatpush.msra.mxu0 %v405
  %464 = vmatpush.msra.mxu0 %v404
  %465 = vmatmul.f32.gmra.mxu0 %v78
  %v466 = vpop.f32.mrf.mxu0
  %v467 = vadd.f32 %v441, %v466
  %468 = vmatmul.f32.gmra.mxu0 %v81
  %v469 = vpop.f32.mrf.mxu0
  %v470 = vadd.f32 %v444, %v469
  %471 = vmatmul.f32.gmra.mxu0 %v84
  %v472 = vpop.f32.mrf.mxu0
  %v473 = vadd.f32 %v447, %v472
  %474 = vdwg.mxu0
  %v475 = vmax.f32 %v467, 0.0
  %v476 = vmax.f32 %v470, 0.0
  %v477 = vmax.f32 %v473, 0.0
  %v478 = vmul.f32 %v475, %v151
  %v479 = vmul.f32 %v476, %v156
  %v480 = vmul.f32 %v477, %v161
  %v481 = vadd.f32 %v478, %v172
  %v482 = vadd.f32 %v479, %v177
  %v483 = vadd.f32 %v480, %v182
  %v484 = vmax.f32 %v384, %v481
  %v485 = vmax.f32 %v385, %v482
  %v486 = vmax.f32 %v386, %v483
  %vm487 = vcmask 261120
  %488 = vst.msk [vmem:[%s5] sm:$0xff] %vm487, %v484
  %489 = vst.msk [vmem:[%s5 + $0x8] sm:$0xff] %vm487, %v485
  %vm490 = vcmask 257024
  %491 = vst.msk [vmem:[%s5 + $0x10] sm:$0xf] %vm490, %v486
  // Predicated region
  $region22: #{resnet_forward.10} parent=0 // pred_check
    _
  $region23: #{resnet_forward.10} parent=0 // pred_check_branch
    %493 = sbr.rel (0) target = $region25
  $region24: #{resnet_forward.10} parent=0 // pred_region
    _
  $region25: #{resnet_forward.10} parent=0 // pred_fallthru
    _
  // Predicated region
  $region26: #{resnet_forward.10} parent=0 // pred_check
    _
  $region27: #{resnet_forward.10} parent=0 // pred_check_branch
    %495 = sbr.rel (0) target = $region29
  $region28: #{resnet_forward.10} parent=0 // pred_region
    _
  $region29: #{resnet_forward.10} parent=0 // pred_fallthru
    _

// kernel: resnet_forward.11
$region0: #{resnet_forward.11}
  #allocation0 [shape = 'u32[]', space=smem, size = 0x4, offset = 0x4, fixed_abs, tag = 'smem constant byte address 0x4 - core index']
  #allocation1 [shape = 'u32[72,128]{1,0:T(1,128)}', space=vmem, size = 0x9000, scoped, tag = 'internal scratch']
  %s0 = inlined_call_operand.vmem [shape: f32[1,180,32], index: 0, kind: input, shape index: {}]
  %s1 = inlined_call_operand.vmem [shape: f32[20,180], index: 1, kind: input, shape index: {}]
  %s2 = inlined_call_operand.vmem [shape: f32[20,1], index: 2, kind: input, shape index: {}]
  %s3 = inlined_call_operand.vmem [shape: f32[20,1], index: 3, kind: input, shape index: {}]
  %s4 = inlined_call_operand.vmem [shape: f32[20,1], index: 4, kind: input, shape index: {}]
  %s5 = inlined_call_operand.vmem [shape: f32[20,32], index: 5, kind: output, shape index: {}]
  %s6 = sld [smem:[#allocation0]]
  $region30: #{resnet_forward.11} parent=0
    _
  %s8 = ssub.s32 1, %s6
  %s9 = scalar_select 0, %s8, %s6
  // Predicated region
  $region2: #{resnet_forward.11} parent=0 // pred_check
    _
  $region3: #{resnet_forward.11} parent=0 // pred_check_branch
    %11 = sbr.rel (0) target = $region5
  $region4: #{resnet_forward.11} parent=0 // pred_region
    _
  $region5: #{resnet_forward.11} parent=0 // pred_fallthru
    _
  // Predicated region
  $region6: #{resnet_forward.11} parent=0 // pred_check
    _
  $region7: #{resnet_forward.11} parent=0 // pred_check_branch
    %13 = sbr.rel (0) target = $region9
  $region8: #{resnet_forward.11} parent=0 // pred_region
    _
  $region9: #{resnet_forward.11} parent=0 // pred_fallthru
    _
  // Predicated region
  $region10: #{resnet_forward.11} parent=0 // pred_check
    _
  $region11: #{resnet_forward.11} parent=0 // pred_check_branch
    %15 = sbr.rel (0) target = $region13
  $region12: #{resnet_forward.11} parent=0 // pred_region
    _
  $region13: #{resnet_forward.11} parent=0 // pred_fallthru
    _
  // Predicated region
  $region14: #{resnet_forward.11} parent=0 // pred_check
    _
  $region15: #{resnet_forward.11} parent=0 // pred_check_branch
    %17 = sbr.rel (0) target = $region17
  $region16: #{resnet_forward.11} parent=0 // pred_region
    _
  $region17: #{resnet_forward.11} parent=0 // pred_fallthru
    _
  // Predicated region
  $region18: #{resnet_forward.11} parent=0 // pred_check
    _
  $region19: #{resnet_forward.11} parent=0 // pred_check_branch
    %19 = sbr.rel (0) target = $region21
  $region20: #{resnet_forward.11} parent=0 // pred_region
    _
  $region21: #{resnet_forward.11} parent=0 // pred_fallthru
    _
  %v20 = vld [vmem:[%s1] sm:$0xff]
  %v21 = vld [vmem:[%s1 + $0x8] sm:$0xff]
  %v22 = vld [vmem:[%s1 + $0x10] sm:$0xff]
  %v23 = vld [vmem:[%s1 + $0x18] sm:$0xff]
  %v24 = vld [vmem:[%s1 + $0x20] sm:$0xf]
  %v25 = vld [vmem:[%s1 + $0x28] sm:$0xf]
  %v26 = vld [vmem:[%s0] sm:$0xff]
  %v27 = vld [vmem:[%s0 + $0x8] sm:$0xff]
  %v28 = vld [vmem:[%s0 + $0x10] sm:$0xff]
  %v29 = vld [vmem:[%s0 + $0x18] sm:$0xff]
  %v30 = vld [vmem:[%s0 + $0x20] sm:$0xff]
  %v31 = vld [vmem:[%s0 + $0x28] sm:$0xff]
  %v32 = vld [vmem:[%s0 + $0x30] sm:$0xff]
  %v33 = vld [vmem:[%s0 + $0x38] sm:$0xff]
  %v34 = vld [vmem:[%s0 + $0x40] sm:$0xff]
  %v35 = vld [vmem:[%s0 + $0x48] sm:$0xff]
  %v36 = vld [vmem:[%s0 + $0x50] sm:$0xff]
  %v37 = vld [vmem:[%s0 + $0x58] sm:$0xff]
  %v38 = vld [vmem:[%s0 + $0x60] sm:$0xff]
  %v39 = vld [vmem:[%s0 + $0x68] sm:$0xff]
  %v40 = vld [vmem:[%s0 + $0x70] sm:$0xff]
  %v41 = vld [vmem:[%s0 + $0x78] sm:$0xff]
  %v42 = vld [vmem:[%s0 + $0x80] sm:$0xff]
  %v43 = vld [vmem:[%s0 + $0x88] sm:$0xff]
  %v44 = vld [vmem:[%s0 + $0x90] sm:$0xff]
  %v45 = vld [vmem:[%s0 + $0x98] sm:$0xff]
  %v46 = vld [vmem:[%s0 + $0xa0] sm:$0xff]
  %v47 = vld [vmem:[%s0 + $0xa8] sm:$0xff]
  %v48 = vld [vmem:[%s0 + $0xb0] sm:$0xf]
  %v49 = vld [vmem:[%s2] sm:$0xff]
  %v50 = vld [vmem:[%s2 + $0x8] sm:$0xff]
  %v51 = vld [vmem:[%s2 + $0x10] sm:$0xf]
  %53 = vset.pattern.permute.xlu0 0
  %54 = vperm.xlu0 %53, %v49
  %v55 = vpop.permute.xlu0 %54
  %58 = vset.pattern.permute.xlu0 0
  %59 = vperm.xlu0 %58, %v50
  %v60 = vpop.permute.xlu0 %59
  %63 = vset.pattern.permute.xlu0 0
  %64 = vperm.xlu0 %63, %v51
  %v65 = vpop.permute.xlu0 %64
  %vm67 = vcmask 424960
  %v69 = vsel %vm67, %v21, 0
  %v72 = vsel %vm67, %v23, 0
  %v75 = vsel %vm67, %v25, 0
  %vm77 = vcmask 1043456
  %v79 = vsel %vm77, %v48, 0
  %81 = vmatpush.msra.mxu0 %v41
  %82 = vmatpush.msra.mxu0 %v40
  %83 = vmatpush.msra.mxu0 %v39
  %84 = vmatpush.msra.mxu0 %v38
  %85 = vmatpush.msra.mxu0 %v37
  %86 = vmatpush.msra.mxu0 %v36
  %87 = vmatpush.msra.mxu0 %v35
  %88 = vmatpush.msra.mxu0 %v34
  %89 = vmatpush.msra.mxu0 %v33
  %90 = vmatpush.msra.mxu0 %v32
  %91 = vmatpush.msra.mxu0 %v31
  %92 = vmatpush.msra.mxu0 %v30
  %93 = vmatpush.msra.mxu0 %v29
  %94 = vmatpush.msra.mxu0 %v28
  %95 = vmatpush.msra.mxu0 %v27
  %96 = vmatpush.msra.mxu0 %v26
  %97 = vmatmul.f32.gmra.mxu0 %v20
  %v98 = vpop.f32.mrf.mxu0
  %v99 = vadd.f32 %v55, %v98
  %100 = vmatmul.f32.gmra.mxu0 %v22
  %v101 = vpop.f32.mrf.mxu0
  %v102 = vadd.f32 %v60, %v101
  %103 = vmatmul.f32.gmra.mxu0 %v24
  %v104 = vpop.f32.mrf.mxu0
  %v105 = vadd.f32 %v65, %v104
  %106 = vdwg.mxu0
  %107 = vmatpush.msra.mxu0 0.0
  %108 = vmatpush.msra.mxu0 0.0
  %109 = vmatpush.msra.mxu0 0.0
  %110 = vmatpush.msra.mxu0 0.0
  %111 = vmatpush.msra.mxu0 0.0
  %112 = vmatpush.msra.mxu0 0.0
  %113 = vmatpush.msra.mxu0 0.0
  %114 = vmatpush.msra.mxu0 0.0
  %115 = vmatpush.msra.mxu0 0.0
  %116 = vmatpush.msra.mxu0 %v79
  %117 = vmatpush.msra.mxu0 %v47
  %118 = vmatpush.msra.mxu0 %v46
  %119 = vmatpush.msra.mxu0 %v45
  %120 = vmatpush.msra.mxu0 %v44
  %121 = vmatpush.msra.mxu0 %v43
  %122 = vmatpush.msra.mxu0 %v42
  %123 = vmatmul.f32.gmra.mxu0 %v69
  %v124 = vpop.f32.mrf.mxu0
  %v125 = vadd.f32 %v99, %v124
  %126 = vmatmul.f32.gmra.mxu0 %v72
  %v127 = vpop.f32.mrf.mxu0
  %v128 = vadd.f32 %v102, %v127
  %129 = vmatmul.f32.gmra.mxu0 %v75
  %v130 = vpop.f32.mrf.mxu0
  %v131 = vadd.f32 %v105, %v130
  %132 = vdwg.mxu0
  %v133 = vmax.f32 %v125, 0.0
  %v134 = vmax.f32 %v128, 0.0
  %v135 = vmax.f32 %v131, 0.0
  %v136 = vld [vmem:[%s3] sm:$0xff]
  %v137 = vld [vmem:[%s3 + $0x8] sm:$0xff]
  %v138 = vld [vmem:[%s3 + $0x10] sm:$0xf]
  %140 = vset.pattern.permute.xlu0 0
  %141 = vperm.xlu0 %140, %v136
  %v142 = vpop.permute.xlu0 %141
  %145 = vset.pattern.permute.xlu0 0
  %146 = vperm.xlu0 %145, %v137
  %v147 = vpop.permute.xlu0 %146
  %150 = vset.pattern.permute.xlu0 0
  %151 = vperm.xlu0 %150, %v138
  %v152 = vpop.permute.xlu0 %151
  %v154 = vmul.f32 %v133, %v142
  %v155 = vmul.f32 %v134, %v147
  %v156 = vmul.f32 %v135, %v152
  %v157 = vld [vmem:[%s4] sm:$0xff]
  %v158 = vld [vmem:[%s4 + $0x8] sm:$0xff]
  %v159 = vld [vmem:[%s4 + $0x10] sm:$0xf]
  %161 = vset.pattern.permute.xlu0 0
  %162 = vperm.xlu0 %161, %v157
  %v163 = vpop.permute.xlu0 %162
  %166 = vset.pattern.permute.xlu0 0
  %167 = vperm.xlu0 %166, %v158
  %v168 = vpop.permute.xlu0 %167
  %171 = vset.pattern.permute.xlu0 0
  %172 = vperm.xlu0 %171, %v159
  %v173 = vpop.permute.xlu0 %172
  %v175 = vadd.f32 %v154, %v163
  %v176 = vadd.f32 %v155, %v168
  %v177 = vadd.f32 %v156, %v173
  %vm178 = vcmask 261120
  %179 = vst.msk [vmem:[%s5] sm:$0xff] %vm178, %v175
  %180 = vst.msk [vmem:[%s5 + $0x8] sm:$0xff] %vm178, %v176
  %vm181 = vcmask 257024
  %182 = vst.msk [vmem:[%s5 + $0x10] sm:$0xf] %vm181, %v177
  // Predicated region
  $region22: #{resnet_forward.11} parent=0 // pred_check
    _
  $region23: #{resnet_forward.11} parent=0 // pred_check_branch
    %184 = sbr.rel (0) target = $region25
  $region24: #{resnet_forward.11} parent=0 // pred_region
    _
  $region25: #{resnet_forward.11} parent=0 // pred_fallthru
    _
  // Predicated region
  $region26: #{resnet_forward.11} parent=0 // pred_check
    _
  $region27: #{resnet_forward.11} parent=0 // pred_check_branch
    %186 = sbr.rel (0) target = $region29
  $region28: #{resnet_forward.11} parent=0 // pred_region
    _
  $region29: #{resnet_forward.11} parent=0 // pred_fallthru
    _

// kernel: resnet_forward.12
$region0: #{resnet_forward.12}
  #allocation0 [shape = 'u32[]', space=smem, size = 0x4, offset = 0x4, fixed_abs, tag = 'smem constant byte address 0x4 - core index']
  #allocation1 [shape = 'u32[72,128]{1,0:T(1,128)}', space=vmem, size = 0x9000, scoped, tag = 'internal scratch']
  %s0 = inlined_call_operand.vmem [shape: f32[1,180,32], index: 0, kind: input, shape index: {}]
  %s1 = inlined_call_operand.vmem [shape: f32[20,180], index: 1, kind: input, shape index: {}]
  %s2 = inlined_call_operand.vmem [shape: f32[20,1], index: 2, kind: input, shape index: {}]
  %s3 = inlined_call_operand.vmem [shape: f32[20,1], index: 3, kind: input, shape index: {}]
  %s4 = inlined_call_operand.vmem [shape: f32[20,1], index: 4, kind: input, shape index: {}]
  %s5 = inlined_call_operand.vmem [shape: f32[20,32], index: 5, kind: input, shape index: {}]
  %s6 = inlined_call_operand.vmem [shape: f32[20,32], index: 6, kind: output, shape index: {}]
  %s7 = sld [smem:[#allocation0]]
  $region34: #{resnet_forward.12} parent=0
    _
  %s9 = ssub.s32 1, %s7
  %s10 = scalar_select 0, %s9, %s7
  // Predicated region
  $region2: #{resnet_forward.12} parent=0 // pred_check
    _
  $region3: #{resnet_forward.12} parent=0 // pred_check_branch
    %12 = sbr.rel (0) target = $region5
  $region4: #{resnet_forward.12} parent=0 // pred_region
    _
  $region5: #{resnet_forward.12} parent=0 // pred_fallthru
    _
  // Predicated region
  $region6: #{resnet_forward.12} parent=0 // pred_check
    _
  $region7: #{resnet_forward.12} parent=0 // pred_check_branch
    %14 = sbr.rel (0) target = $region9
  $region8: #{resnet_forward.12} parent=0 // pred_region
    _
  $region9: #{resnet_forward.12} parent=0 // pred_fallthru
    _
  // Predicated region
  $region10: #{resnet_forward.12} parent=0 // pred_check
    _
  $region11: #{resnet_forward.12} parent=0 // pred_check_branch
    %16 = sbr.rel (0) target = $region13
  $region12: #{resnet_forward.12} parent=0 // pred_region
    _
  $region13: #{resnet_forward.12} parent=0 // pred_fallthru
    _
  // Predicated region
  $region14: #{resnet_forward.12} parent=0 // pred_check
    _
  $region15: #{resnet_forward.12} parent=0 // pred_check_branch
    %18 = sbr.rel (0) target = $region17
  $region16: #{resnet_forward.12} parent=0 // pred_region
    _
  $region17: #{resnet_forward.12} parent=0 // pred_fallthru
    _
  // Predicated region
  $region18: #{resnet_forward.12} parent=0 // pred_check
    _
  $region19: #{resnet_forward.12} parent=0 // pred_check_branch
    %20 = sbr.rel (0) target = $region21
  $region20: #{resnet_forward.12} parent=0 // pred_region
    _
  $region21: #{resnet_forward.12} parent=0 // pred_fallthru
    _
  // Predicated region
  $region22: #{resnet_forward.12} parent=0 // pred_check
    _
  $region23: #{resnet_forward.12} parent=0 // pred_check_branch
    %22 = sbr.rel (0) target = $region25
  $region24: #{resnet_forward.12} parent=0 // pred_region
    _
  $region25: #{resnet_forward.12} parent=0 // pred_fallthru
    _
  %v23 = vld [vmem:[%s1] sm:$0xff]
  %v24 = vld [vmem:[%s1 + $0x8] sm:$0xff]
  %v25 = vld [vmem:[%s1 + $0x10] sm:$0xff]
  %v26 = vld [vmem:[%s1 + $0x18] sm:$0xff]
  %v27 = vld [vmem:[%s1 + $0x20] sm:$0xf]
  %v28 = vld [vmem:[%s1 + $0x28] sm:$0xf]
  %v29 = vld [vmem:[%s0] sm:$0xff]
  %v30 = vld [vmem:[%s0 + $0x8] sm:$0xff]
  %v31 = vld [vmem:[%s0 + $0x10] sm:$0xff]
  %v32 = vld [vmem:[%s0 + $0x18] sm:$0xff]
  %v33 = vld [vmem:[%s0 + $0x20] sm:$0xff]
  %v34 = vld [vmem:[%s0 + $0x28] sm:$0xff]
  %v35 = vld [vmem:[%s0 + $0x30] sm:$0xff]
  %v36 = vld [vmem:[%s0 + $0x38] sm:$0xff]
  %v37 = vld [vmem:[%s0 + $0x40] sm:$0xff]
  %v38 = vld [vmem:[%s0 + $0x48] sm:$0xff]
  %v39 = vld [vmem:[%s0 + $0x50] sm:$0xff]
  %v40 = vld [vmem:[%s0 + $0x58] sm:$0xff]
  %v41 = vld [vmem:[%s0 + $0x60] sm:$0xff]
  %v42 = vld [vmem:[%s0 + $0x68] sm:$0xff]
  %v43 = vld [vmem:[%s0 + $0x70] sm:$0xff]
  %v44 = vld [vmem:[%s0 + $0x78] sm:$0xff]
  %v45 = vld [vmem:[%s0 + $0x80] sm:$0xff]
  %v46 = vld [vmem:[%s0 + $0x88] sm:$0xff]
  %v47 = vld [vmem:[%s0 + $0x90] sm:$0xff]
  %v48 = vld [vmem:[%s0 + $0x98] sm:$0xff]
  %v49 = vld [vmem:[%s0 + $0xa0] sm:$0xff]
  %v50 = vld [vmem:[%s0 + $0xa8] sm:$0xff]
  %v51 = vld [vmem:[%s0 + $0xb0] sm:$0xf]
  %v52 = vld [vmem:[%s2] sm:$0xff]
  %v53 = vld [vmem:[%s2 + $0x8] sm:$0xff]
  %v54 = vld [vmem:[%s2 + $0x10] sm:$0xf]
  %56 = vset.pattern.permute.xlu0 0
  %57 = vperm.xlu0 %56, %v52
  %v58 = vpop.permute.xlu0 %57
  %61 = vset.pattern.permute.xlu0 0
  %62 = vperm.xlu0 %61, %v53
  %v63 = vpop.permute.xlu0 %62
  %66 = vset.pattern.permute.xlu0 0
  %67 = vperm.xlu0 %66, %v54
  %v68 = vpop.permute.xlu0 %67
  %vm70 = vcmask 424960
  %v72 = vsel %vm70, %v24, 0
  %v75 = vsel %vm70, %v26, 0
  %v78 = vsel %vm70, %v28, 0
  %vm80 = vcmask 1043456
  %v82 = vsel %vm80, %v51, 0
  %84 = vmatpush.msra.mxu0 %v44
  %85 = vmatpush.msra.mxu0 %v43
  %86 = vmatpush.msra.mxu0 %v42
  %87 = vmatpush.msra.mxu0 %v41
  %88 = vmatpush.msra.mxu0 %v40
  %89 = vmatpush.msra.mxu0 %v39
  %90 = vmatpush.msra.mxu0 %v38
  %91 = vmatpush.msra.mxu0 %v37
  %92 = vmatpush.msra.mxu0 %v36
  %93 = vmatpush.msra.mxu0 %v35
  %94 = vmatpush.msra.mxu0 %v34
  %95 = vmatpush.msra.mxu0 %v33
  %96 = vmatpush.msra.mxu0 %v32
  %97 = vmatpush.msra.mxu0 %v31
  %98 = vmatpush.msra.mxu0 %v30
  %99 = vmatpush.msra.mxu0 %v29
  %100 = vmatmul.f32.gmra.mxu0 %v23
  %v101 = vpop.f32.mrf.mxu0
  %v102 = vadd.f32 %v58, %v101
  %103 = vmatmul.f32.gmra.mxu0 %v25
  %v104 = vpop.f32.mrf.mxu0
  %v105 = vadd.f32 %v63, %v104
  %106 = vmatmul.f32.gmra.mxu0 %v27
  %v107 = vpop.f32.mrf.mxu0
  %v108 = vadd.f32 %v68, %v107
  %109 = vdwg.mxu0
  %110 = vmatpush.msra.mxu0 0.0
  %111 = vmatpush.msra.mxu0 0.0
  %112 = vmatpush.msra.mxu0 0.0
  %113 = vmatpush.msra.mxu0 0.0
  %114 = vmatpush.msra.mxu0 0.0
  %115 = vmatpush.msra.mxu0 0.0
  %116 = vmatpush.msra.mxu0 0.0
  %117 = vmatpush.msra.mxu0 0.0
  %118 = vmatpush.msra.mxu0 0.0
  %119 = vmatpush.msra.mxu0 %v82
  %120 = vmatpush.msra.mxu0 %v50
  %121 = vmatpush.msra.mxu0 %v49
  %122 = vmatpush.msra.mxu0 %v48
  %123 = vmatpush.msra.mxu0 %v47
  %124 = vmatpush.msra.mxu0 %v46
  %125 = vmatpush.msra.mxu0 %v45
  %126 = vmatmul.f32.gmra.mxu0 %v72
  %v127 = vpop.f32.mrf.mxu0
  %v128 = vadd.f32 %v102, %v127
  %129 = vmatmul.f32.gmra.mxu0 %v75
  %v130 = vpop.f32.mrf.mxu0
  %v131 = vadd.f32 %v105, %v130
  %132 = vmatmul.f32.gmra.mxu0 %v78
  %v133 = vpop.f32.mrf.mxu0
  %v134 = vadd.f32 %v108, %v133
  %135 = vdwg.mxu0
  %v136 = vmax.f32 %v128, 0.0
  %v137 = vmax.f32 %v131, 0.0
  %v138 = vmax.f32 %v134, 0.0
  %v139 = vld [vmem:[%s3] sm:$0xff]
  %v140 = vld [vmem:[%s3 + $0x8] sm:$0xff]
  %v141 = vld [vmem:[%s3 + $0x10] sm:$0xf]
  %143 = vset.pattern.permute.xlu0 0
  %144 = vperm.xlu0 %143, %v139
  %v145 = vpop.permute.xlu0 %144
  %148 = vset.pattern.permute.xlu0 0
  %149 = vperm.xlu0 %148, %v140
  %v150 = vpop.permute.xlu0 %149
  %153 = vset.pattern.permute.xlu0 0
  %154 = vperm.xlu0 %153, %v141
  %v155 = vpop.permute.xlu0 %154
  %v157 = vmul.f32 %v136, %v145
  %v158 = vmul.f32 %v137, %v150
  %v159 = vmul.f32 %v138, %v155
  %v160 = vld [vmem:[%s4] sm:$0xff]
  %v161 = vld [vmem:[%s4 + $0x8] sm:$0xff]
  %v162 = vld [vmem:[%s4 + $0x10] sm:$0xf]
  %164 = vset.pattern.permute.xlu0 0
  %165 = vperm.xlu0 %164, %v160
  %v166 = vpop.permute.xlu0 %165
  %169 = vset.pattern.permute.xlu0 0
  %170 = vperm.xlu0 %169, %v161
  %v171 = vpop.permute.xlu0 %170
  %174 = vset.pattern.permute.xlu0 0
  %175 = vperm.xlu0 %174, %v162
  %v176 = vpop.permute.xlu0 %175
  %v178 = vadd.f32 %v157, %v166
  %v179 = vadd.f32 %v158, %v171
  %v180 = vadd.f32 %v159, %v176
  %v181 = vld [vmem:[%s5] sm:$0xff]
  %v182 = vld [vmem:[%s5 + $0x8] sm:$0xff]
  %v183 = vld [vmem:[%s5 + $0x10] sm:$0xf]
  %v184 = vadd.f32 %v178, %v181
  %v185 = vadd.f32 %v179, %v182
  %v186 = vadd.f32 %v180, %v183
  %vm187 = vcmask 261120
  %188 = vst.msk [vmem:[%s6] sm:$0xff] %vm187, %v184
  %189 = vst.msk [vmem:[%s6 + $0x8] sm:$0xff] %vm187, %v185
  %vm190 = vcmask 257024
  %191 = vst.msk [vmem:[%s6 + $0x10] sm:$0xf] %vm190, %v186
  // Predicated region
  $region26: #{resnet_forward.12} parent=0 // pred_check
    _
  $region27: #{resnet_forward.12} parent=0 // pred_check_branch
    %193 = sbr.rel (0) target = $region29
  $region28: #{resnet_forward.12} parent=0 // pred_region
    _
  $region29: #{resnet_forward.12} parent=0 // pred_fallthru
    _
  // Predicated region
  $region30: #{resnet_forward.12} parent=0 // pred_check
    _
  $region31: #{resnet_forward.12} parent=0 // pred_check_branch
    %195 = sbr.rel (0) target = $region33
  $region32: #{resnet_forward.12} parent=0 // pred_region
    _
  $region33: #{resnet_forward.12} parent=0 // pred_fallthru
    _

// kernel: resnet_forward.13
$region0: #{resnet_forward.13}
  #allocation0 [shape = 'u32[]', space=smem, size = 0x4, offset = 0x4, fixed_abs, tag = 'smem constant byte address 0x4 - core index']
  #allocation1 [shape = 'u32[72,128]{1,0:T(1,128)}', space=vmem, size = 0x9000, scoped, tag = 'internal scratch']
  %s0 = inlined_call_operand.vmem [shape: f32[2,320], index: 0, kind: input, shape index: {}]
  %s1 = inlined_call_operand.vmem [shape: f32[320,50], index: 1, kind: input, shape index: {}]
  %s2 = inlined_call_operand.vmem [shape: f32[1,50], index: 2, kind: input, shape index: {}]
  %s3 = inlined_call_operand.vmem [shape: f32[50,10], index: 3, kind: input, shape index: {}]
  %s4 = inlined_call_operand.vmem [shape: f32[1,10], index: 4, kind: input, shape index: {}]
  %s5 = inlined_call_operand.hbm [shape: f32[2,10], index: 5, kind: output, shape index: {}]
  %s6 = sld [smem:[#allocation0]]
  $region30: #{resnet_forward.13} parent=0
    _
  %s8 = ssub.s32 1, %s6
  %s9 = scalar_select 0, %s8, %s6
  $region1: #{resnet_forward.13} parent=0
    #allocation2 [shape = 'u8[1024]{0}', space=vmem, size = 0x400, scoped, tag = 'output window, operand 0, single buffered']
    #allocation3 [shape = 's32[1]{0}', space=sflag, size = 0x4, scoped, tag = 'scoped memory for resnet_forward.13']
    %10 = vsyncpa [#allocation3], 0
    // Predicated region
    $region2: #{resnet_forward.13} parent=1 // pred_check
      _
    $region3: #{resnet_forward.13} parent=1 // pred_check_branch
      %12 = sbr.rel (0) target = $region5
    $region4: #{resnet_forward.13} parent=1 // pred_region
      _
    $region5: #{resnet_forward.13} parent=1 // pred_fallthru
      _
    // Predicated region
    $region6: #{resnet_forward.13} parent=1 // pred_check
      _
    $region7: #{resnet_forward.13} parent=1 // pred_check_branch
      %14 = sbr.rel (0) target = $region9
    $region8: #{resnet_forward.13} parent=1 // pred_region
      _
    $region9: #{resnet_forward.13} parent=1 // pred_fallthru
      _
    // Predicated region
    $region10: #{resnet_forward.13} parent=1 // pred_check
      _
    $region11: #{resnet_forward.13} parent=1 // pred_check_branch
      %16 = sbr.rel (0) target = $region13
    $region12: #{resnet_forward.13} parent=1 // pred_region
      _
    $region13: #{resnet_forward.13} parent=1 // pred_fallthru
      _
    // Predicated region
    $region14: #{resnet_forward.13} parent=1 // pred_check
      _
    $region15: #{resnet_forward.13} parent=1 // pred_check_branch
      %18 = sbr.rel (0) target = $region17
    $region16: #{resnet_forward.13} parent=1 // pred_region
      _
    $region17: #{resnet_forward.13} parent=1 // pred_fallthru
      _
    // Predicated region
    $region18: #{resnet_forward.13} parent=1 // pred_check
      _
    $region19: #{resnet_forward.13} parent=1 // pred_check_branch
      %20 = sbr.rel (0) target = $region21
    $region20: #{resnet_forward.13} parent=1 // pred_region
      _
    $region21: #{resnet_forward.13} parent=1 // pred_fallthru
      _
    %v21 = vld [vmem:[%s0] sm:$0x3f]
    %v22 = vld [vmem:[%s1] sm:$0xff]
    %v23 = vld [vmem:[%s1 + $0x8] sm:$0xff]
    %v24 = vld [vmem:[%s1 + $0x10] sm:$0xff]
    %v25 = vld [vmem:[%s1 + $0x18] sm:$0xff]
    %v26 = vld [vmem:[%s1 + $0x20] sm:$0xff]
    %v27 = vld [vmem:[%s1 + $0x28] sm:$0xff]
    %v28 = vld [vmem:[%s1 + $0x30] sm:$0xff]
    %v29 = vld [vmem:[%s1 + $0x38] sm:$0xff]
    %v30 = vld [vmem:[%s1 + $0x40] sm:$0xff]
    %v31 = vld [vmem:[%s1 + $0x48] sm:$0xff]
    %v32 = vld [vmem:[%s1 + $0x50] sm:$0xff]
    %v33 = vld [vmem:[%s1 + $0x58] sm:$0xff]
    %v34 = vld [vmem:[%s1 + $0x60] sm:$0xff]
    %v35 = vld [vmem:[%s1 + $0x68] sm:$0xff]
    %v36 = vld [vmem:[%s1 + $0x70] sm:$0xff]
    %v37 = vld [vmem:[%s1 + $0x78] sm:$0xff]
    %v38 = vld [vmem:[%s1 + $0x80] sm:$0xff]
    %v39 = vld [vmem:[%s1 + $0x88] sm:$0xff]
    %v40 = vld [vmem:[%s1 + $0x90] sm:$0xff]
    %v41 = vld [vmem:[%s1 + $0x98] sm:$0xff]
    %v42 = vld [vmem:[%s1 + $0xa0] sm:$0xff]
    %v43 = vld [vmem:[%s1 + $0xa8] sm:$0xff]
    %v44 = vld [vmem:[%s1 + $0xb0] sm:$0xff]
    %v45 = vld [vmem:[%s1 + $0xb8] sm:$0xff]
    %v46 = vld [vmem:[%s1 + $0xc0] sm:$0xff]
    %v47 = vld [vmem:[%s1 + $0xc8] sm:$0xff]
    %v48 = vld [vmem:[%s1 + $0xd0] sm:$0xff]
    %v49 = vld [vmem:[%s1 + $0xd8] sm:$0xff]
    %v50 = vld [vmem:[%s1 + $0xe0] sm:$0xff]
    %v51 = vld [vmem:[%s1 + $0xe8] sm:$0xff]
    %v52 = vld [vmem:[%s1 + $0xf0] sm:$0xff]
    %v53 = vld [vmem:[%s1 + $0xf8] sm:$0xff]
    %v54 = vld [vmem:[%s1 + $0x100] sm:$0xff]
    %v55 = vld [vmem:[%s1 + $0x108] sm:$0xff]
    %v56 = vld [vmem:[%s1 + $0x110] sm:$0xff]
    %v57 = vld [vmem:[%s1 + $0x118] sm:$0xff]
    %v58 = vld [vmem:[%s1 + $0x120] sm:$0xff]
    %v59 = vld [vmem:[%s1 + $0x128] sm:$0xff]
    %v60 = vld [vmem:[%s1 + $0x130] sm:$0xff]
    %v61 = vld [vmem:[%s1 + $0x138] sm:$0xff]
    %v62 = vld [vmem:[%s2] sm:$0x1]
    %v64 = vperm.slane %v62, 0
    %67 = vst [vmem:[#allocation1] ss:$4 sm:$0xff] %v21
    %v68 = vld.sshfl [vmem:[#allocation1] sm:$0xff pattern:$0x73625140]
    %v69 = vld.sshfl [vmem:[#allocation1 + $0x8] sm:$0xff pattern:$0x73625140]
    %v70 = vld.sshfl [vmem:[#allocation1 + $0x10] sm:$0xff pattern:$0x73625140]
    %vm73 = vcmask 523264
    %v74 = vsel %vm73, %v70, 0
    %76 = vmatpush.msra.mxu0 %v37
    %77 = vmatpush.msra.mxu0 %v36
    %78 = vmatpush.msra.mxu0 %v35
    %79 = vmatpush.msra.mxu0 %v34
    %80 = vmatpush.msra.mxu0 %v33
    %81 = vmatpush.msra.mxu0 %v32
    %82 = vmatpush.msra.mxu0 %v31
    %83 = vmatpush.msra.mxu0 %v30
    %84 = vmatpush.msra.mxu0 %v29
    %85 = vmatpush.msra.mxu0 %v28
    %86 = vmatpush.msra.mxu0 %v27
    %87 = vmatpush.msra.mxu0 %v26
    %88 = vmatpush.msra.mxu0 %v25
    %89 = vmatpush.msra.mxu0 %v24
    %90 = vmatpush.msra.mxu0 %v23
    %91 = vmatpush.msra.mxu0 %v22
    %92 = vmatmul.f32.gmra.mxu0 %v68
    %v93 = vpop.f32.mrf.mxu0
    %v94 = vadd.f32 %v64, %v93
    %95 = vdwg.mxu0
    %96 = vmatpush.msra.mxu0 %v53
    %97 = vmatpush.msra.mxu0 %v52
    %98 = vmatpush.msra.mxu0 %v51
    %99 = vmatpush.msra.mxu0 %v50
    %100 = vmatpush.msra.mxu0 %v49
    %101 = vmatpush.msra.mxu0 %v48
    %102 = vmatpush.msra.mxu0 %v47
    %103 = vmatpush.msra.mxu0 %v46
    %104 = vmatpush.msra.mxu0 %v45
    %105 = vmatpush.msra.mxu0 %v44
    %106 = vmatpush.msra.mxu0 %v43
    %107 = vmatpush.msra.mxu0 %v42
    %108 = vmatpush.msra.mxu0 %v41
    %109 = vmatpush.msra.mxu0 %v40
    %110 = vmatpush.msra.mxu0 %v39
    %111 = vmatpush.msra.mxu0 %v38
    %112 = vmatmul.f32.gmra.mxu0 %v69
    %v113 = vpop.f32.mrf.mxu0
    %v114 = vadd.f32 %v94, %v113
    %115 = vdwg.mxu0
    %116 = vmatpush.msra.mxu0 0.0
    %117 = vmatpush.msra.mxu0 0.0
    %118 = vmatpush.msra.mxu0 0.0
    %119 = vmatpush.msra.mxu0 0.0
    %120 = vmatpush.msra.mxu0 0.0
    %121 = vmatpush.msra.mxu0 0.0
    %122 = vmatpush.msra.mxu0 0.0
    %123 = vmatpush.msra.mxu0 0.0
    %124 = vmatpush.msra.mxu0 %v61
    %125 = vmatpush.msra.mxu0 %v60
    %126 = vmatpush.msra.mxu0 %v59
    %127 = vmatpush.msra.mxu0 %v58
    %128 = vmatpush.msra.mxu0 %v57
    %129 = vmatpush.msra.mxu0 %v56
    %130 = vmatpush.msra.mxu0 %v55
    %131 = vmatpush.msra.mxu0 %v54
    %132 = vmatmul.f32.gmra.mxu0 %v74
    %v133 = vpop.f32.mrf.mxu0
    %v134 = vadd.f32 %v114, %v133
    %135 = vdwg.mxu0
    %v136 = vmax.f32 %v134, 0.0
    %v137 = vld [vmem:[%s3] sm:$0xff]
    %v138 = vld [vmem:[%s3 + $0x8] sm:$0xff]
    %v139 = vld [vmem:[%s3 + $0x10] sm:$0xff]
    %v140 = vld [vmem:[%s3 + $0x18] sm:$0xff]
    %v141 = vld [vmem:[%s3 + $0x20] sm:$0xff]
    %v142 = vld [vmem:[%s3 + $0x28] sm:$0xff]
    %v143 = vld [vmem:[%s3 + $0x30] sm:$0x3]
    %v144 = vld [vmem:[%s4] sm:$0x1]
    %v146 = vperm.slane %v144, 0
    %vm148 = vcmask 408576
    %v150 = vsel %vm148, %v136, 0
    %vm152 = vcmask 1041408
    %v154 = vsel %vm152, %v143, 0
    %156 = vmatpush.msra.mxu0 0.0
    %157 = vmatpush.msra.mxu0 0.0
    %158 = vmatpush.msra.mxu0 0.0
    %159 = vmatpush.msra.mxu0 0.0
    %160 = vmatpush.msra.mxu0 0.0
    %161 = vmatpush.msra.mxu0 0.0
    %162 = vmatpush.msra.mxu0 0.0
    %163 = vmatpush.msra.mxu0 0.0
    %164 = vmatpush.msra.mxu0 0.0
    %165 = vmatpush.msra.mxu0 %v154
    %166 = vmatpush.msra.mxu0 %v142
    %167 = vmatpush.msra.mxu0 %v141
    %168 = vmatpush.msra.mxu0 %v140
    %169 = vmatpush.msra.mxu0 %v139
    %170 = vmatpush.msra.mxu0 %v138
    %171 = vmatpush.msra.mxu0 %v137
    %172 = vmatmul.f32.gmra.mxu0 %v150
    %v173 = vpop.f32.mrf.mxu0
    %v174 = vadd.f32 %v146, %v173
    %175 = vdwg.mxu0
    %vm176 = vcmask 74752
    %v177 = vsel %vm176, %v174, -inf
    %178 = vmax.xlane.f32.xlu0 %v177
    %v179 = vpop.xlane.xlu0 %178
    %v180 = vsub.f32 %v174, %v179
    %v181 = vmul.f32 %v180, 1.442695
    %v182 = vpow.pop %v181
    %v183 = vsel %vm176, %v182, 0.0
    %184 = vadd.xlane.f32.xlu0 %v183
    %v185 = vpop.xlane.xlu0 %184
    %v186 = vlog2.pop %v185
    %v187 = vmul.f32 %v186, 0.6931472
    %v188 = vadd.f32 %v179, %v187
    %v189 = vsub.f32 %v174, %v188
    %190 = vst.msk [vmem:[#allocation2] sm:$0x3] %vm176, %v189
    // Predicated region
    $region22: #{resnet_forward.13} parent=1 // pred_check
      _
    $region23: #{resnet_forward.13} parent=1 // pred_check_branch
      %192 = sbr.rel (0) target = $region25
    $region24: #{resnet_forward.13} parent=1 // pred_region
      %194 = vsyncadd [#allocation3], 0
      %s196 = sshll.u32 [#allocation2], 4
      %s197 = int_to_ptr.vmem [resolvable:$true] %s196
      %s198 = sshll.u32 %s5, 4
      %s199 = int_to_ptr.hbm [resolvable:$true] %s198
      %201 = dma.vmem_to_hbm [thread:$0]  %s197, 32, %s199, [#allocation3]
    $region25: #{resnet_forward.13} parent=1 // pred_fallthru
      _
    // Predicated region
    $region26: #{resnet_forward.13} parent=1 // pred_check
      _
    $region27: #{resnet_forward.13} parent=1 // pred_check_branch
      %203 = sbr.rel (0) target = $region29
    $region28: #{resnet_forward.13} parent=1 // pred_region
      %205 = dma.done [#allocation3], 32
    $region29: #{resnet_forward.13} parent=1 // pred_fallthru
      _
    %206 = vsyncpa [#allocation3], 1

</llo_original>
